<compile_context>
chip_gen: v7x
topology: tpu7x:2x2x1
jax: 0.10.0
libtpu: 0.0.40
codegen_flags: <defaults>
</compile_context>

<pallas_src>
import functools

import jax
import jax.numpy as jnp
from jax import lax
from jax.experimental import pallas as pl
from jax.experimental.pallas import tpu as pltpu


def _round_up(x, m):
    return (x + m - 1) // m * m


def _down_kernel(x_ref, w1_ref, s1_ref, b1_ref, w2_ref, s2_ref, b2_ref,
                 o_ref, pad_ref, *, Hp, Wp, Cin_p, Cout_p):
    """One batch element per grid step.

    x_ref:  (1, 4, Hp, Wp, Cin_p)  -- 2x2 pool window on the leading "4" axis
    w*_ref: (9, Cin_or_Cout_p, Cout_p) bf16, one (K, N) weight matrix per tap
    s*/b*:  (1, Cout_p) f32 folded BN scale / bias
    o_ref:  (1, Hp, Wp, Cout_p) f32
    pad_ref: (Hp+2, Wp+2, Cbuf) bf16 shared zero-padded activation buffer
    """
    f32 = jnp.float32
    cdt = pad_ref.dtype                      # bf16 compute/storage dtype
    Cbuf = pad_ref.shape[-1]

    # ---- zero only the 1-px halo border (interior is overwritten below) ----
    pad_ref[0:1, :, :] = jnp.zeros((1, Wp + 2, Cbuf), cdt)
    pad_ref[Hp + 1:Hp + 2, :, :] = jnp.zeros((1, Wp + 2, Cbuf), cdt)
    pad_ref[1:Hp + 1, 0:1, :] = jnp.zeros((Hp, 1, Cbuf), cdt)
    pad_ref[1:Hp + 1, Wp + 1:Wp + 2, :] = jnp.zeros((Hp, 1, Cbuf), cdt)

    # ---- MaxPool2d(2): 3 aligned element-wise maxima over the window axis ----
    pooled = jnp.maximum(jnp.maximum(x_ref[0, 0], x_ref[0, 1]),
                         jnp.maximum(x_ref[0, 2], x_ref[0, 3]))  # (Hp, Wp, Cin_p)
    # Fused pool -> padded-buffer write (no separate pooled temporary pass).
    pad_ref[1:Hp + 1, 1:Wp + 1, :Cin_p] = pooled.astype(cdt)

    def conv3x3_bn_relu(w_ref, s_ref, b_ref, cin):
        acc = jnp.zeros((Hp * Wp, Cout_p), f32)
        # 3x3 conv = sum over 9 taps of (Hp*Wp, cin) x (cin, Cout_p) MXU matmuls
        # (bf16 operands, f32 accumulation).
        for dy in range(3):
            for dx in range(3):
                patch = pad_ref[dy:dy + Hp, dx:dx + Wp, :cin]
                patch = patch.reshape(Hp * Wp, cin)
                acc = acc + jnp.dot(patch, w_ref[dy * 3 + dx],
                                    preferred_element_type=f32)
        # folded BatchNorm (eval mode) + conv bias, then ReLU (f32)
        y = acc * s_ref[...] + b_ref[...]
        y = jnp.maximum(y, 0.0)
        return y.reshape(Hp, Wp, Cout_p)

    y1 = conv3x3_bn_relu(w1_ref, s1_ref, b1_ref, Cin_p)
    # Reuse the same padded buffer for the second conv's input.
    pad_ref[1:Hp + 1, 1:Wp + 1, :Cout_p] = y1.astype(cdt)
    y2 = conv3x3_bn_relu(w2_ref, s2_ref, b2_ref, Cout_p)

    o_ref[0] = y2.astype(o_ref.dtype)        # lane-dense (Cout_p = k*128) store


def down_pallas(x_nchw, params):
    """Down.forward.  x_nchw: (N, Cin, H, W) -> (N, Cout, H/2, W/2)."""
    N, Cin, H, W = x_nchw.shape
    assert H % 2 == 0 and W % 2 == 0, "MaxPool2d(2) path assumes even H, W"
    Cout = params["w1"].shape[-1]
    Hp, Wp = H // 2, W // 2
    Cin_p = _round_up(Cin, 128)
    Cout_p = _round_up(Cout, 128)
    Cbuf = max(Cin_p, Cout_p)

    # NCHW -> NHWC, pad channels to lane width, bf16 for HBM traffic + MXU.
    x = jnp.transpose(x_nchw, (0, 2, 3, 1)).astype(jnp.bfloat16)
    x = jnp.pad(x, ((0, 0), (0, 0), (0, 0), (0, Cin_p - Cin)))
    # Put the 2x2 pool window on a leading axis (pure layout plumbing) so the
    # kernel never needs strided sublane loads.
    x = x.reshape(N, Hp, 2, Wp, 2, Cin_p).transpose(0, 2, 4, 1, 3, 5)
    x = x.reshape(N, 4, Hp, Wp, Cin_p)

    def pad_w(w, cin_p, cout_p):
        cin, cout = w.shape[2], w.shape[3]          # HWIO
        w = jnp.pad(w, ((0, 0), (0, 0), (0, cin_p - cin), (0, cout_p - cout)))
        return w.reshape(9, cin_p, cout_p).astype(jnp.bfloat16)

    def pad_v(v, cout_p):
        v = v.astype(jnp.float32)
        return jnp.pad(v, (0, cout_p - v.shape[0])).reshape(1, cout_p)

    w1 = pad_w(params["w1"], Cin_p, Cout_p)
    w2 = pad_w(params["w2"], Cout_p, Cout_p)
    s1, b1 = pad_v(params["s1"], Cout_p), pad_v(params["b1"], Cout_p)
    s2, b2 = pad_v(params["s2"], Cout_p), pad_v(params["b2"], Cout_p)

    kernel = functools.partial(_down_kernel, Hp=Hp, Wp=Wp,
                               Cin_p=Cin_p, Cout_p=Cout_p)

    # Explicit scoped-VMEM budget (double-buffered in/out + weights + scratch),
    # capped below v7x's 64 MiB physical VMEM.
    bytes_est = (2 * 4 * Hp * Wp * Cin_p * 2          # input block (bf16) x2
                 + 2 * Hp * Wp * Cout_p * 4           # output block (f32) x2
                 + 2 * (w1.size + w2.size) * 2        # weights (bf16)
                 + (Hp + 2) * (Wp + 2) * Cbuf * 2     # shared pad scratch
                 + 4 * Hp * Wp * Cout_p * 4)          # accumulator headroom
    vmem_limit = int(min(56 * 2**20, max(16 * 2**20, 3 * bytes_est)))

    out_nhwc = pl.pallas_call(
        kernel,
        out_shape=jax.ShapeDtypeStruct((N, Hp, Wp, Cout_p), jnp.float32),
        grid_spec=pltpu.PrefetchScalarGridSpec(
            num_scalar_prefetch=0,
            grid=(N,),
            in_specs=[
                pl.BlockSpec((1, 4, Hp, Wp, Cin_p), lambda n: (n, 0, 0, 0, 0)),
                pl.BlockSpec((9, Cin_p, Cout_p), lambda n: (0, 0, 0)),
                pl.BlockSpec((1, Cout_p), lambda n: (0, 0)),
                pl.BlockSpec((1, Cout_p), lambda n: (0, 0)),
                pl.BlockSpec((9, Cout_p, Cout_p), lambda n: (0, 0, 0)),
                pl.BlockSpec((1, Cout_p), lambda n: (0, 0)),
                pl.BlockSpec((1, Cout_p), lambda n: (0, 0)),
            ],
            out_specs=pl.BlockSpec((1, Hp, Wp, Cout_p),
                                   lambda n: (n, 0, 0, 0)),
            scratch_shapes=[
                pltpu.VMEM((Hp + 2, Wp + 2, Cbuf), jnp.bfloat16),  # shared pad
            ],
        ),
        compiler_params=pltpu.CompilerParams(
            dimension_semantics=("parallel",),
            vmem_limit_bytes=vmem_limit),
    )(x, w1, s1, b1, w2, s2, b2)

    out_nhwc = out_nhwc[:, :, :, :Cout]               # strip channel padding
    return jnp.transpose(out_nhwc, (0, 3, 1, 2))      # NHWC -> NCHW


def init_params(key, in_channels, out_channels):
    """Deterministic synthetic parameters for Conv2d + BatchNorm2d (x2)."""
    ks = jax.random.split(key, 12)
    eps = 1e-5

    def one_block(kw, kb, kg, kbeta, km, kv, cin, cout):
        w = 0.1 * jax.random.normal(kw, (3, 3, cin, cout), jnp.float32)   # HWIO
        conv_b = 0.05 * jax.random.normal(kb, (cout,), jnp.float32)
        gamma = 1.0 + 0.1 * jax.random.normal(kg, (cout,), jnp.float32)
        beta = 0.05 * jax.random.normal(kbeta, (cout,), jnp.float32)
        rmean = 0.02 * jax.random.normal(km, (cout,), jnp.float32)
        rvar = 1.0 + 0.1 * jnp.abs(jax.random.normal(kv, (cout,), jnp.float32))
        scale = gamma / jnp.sqrt(rvar + eps)
        bias = (conv_b - rmean) * scale + beta
        return w, scale, bias

    w1, s1, b1 = one_block(*ks[0:6], in_channels, out_channels)
    w2, s2, b2 = one_block(*ks[6:12], out_channels, out_channels)
    return {"w1": w1, "s1": s1, "b1": b1, "w2": w2, "s2": s2, "b2": b2}


def _conv_bn_relu_ref(inp, w, s, b, dtype):
    out = lax.conv_general_dilated(
        inp.astype(dtype), w.astype(dtype), (1, 1), "SAME",
        dimension_numbers=("NHWC", "HWIO", "NHWC"),
        preferred_element_type=jnp.float32)
    return jnp.maximum(out * s + b, 0.0)


def down_reference(x_nchw, params, dtype=jnp.float32):
    """Pure-JAX reference (eval-mode BN folding).

    dtype selects the conv-operand precision: float32 gives the exact module
    semantics; bfloat16 mirrors the kernel's MXU-operand precision (f32 accum).
    """
    x = jnp.transpose(x_nchw, (0, 2, 3, 1)).astype(dtype)
    N, H, W, C = x.shape
    p = jnp.max(x.reshape(N, H // 2, 2, W // 2, 2, C), axis=(2, 4))
    y = _conv_bn_relu_ref(p, params["w1"], params["s1"], params["b1"], dtype)
    y = _conv_bn_relu_ref(y, params["w2"], params["s2"], params["b2"], dtype)
    return jnp.transpose(y, (0, 3, 1, 2))


if __name__ == "__main__":
    key = jax.random.PRNGKey(0)
    k_x, k_p = jax.random.split(key)

    N, Cin, Cout, H, W = 2, 4, 8, 16, 16
    x = jax.random.normal(k_x, (N, Cin, H, W), jnp.float32)
    params = init_params(k_p, Cin, Cout)

    out = down_pallas(x, params)
    out = jax.block_until_ready(out)
    assert out.shape == (N, Cout, H // 2, W // 2), out.shape

    # Tight check against a precision-matched reference (bf16 conv operands,
    # f32 accumulation -- exactly what the kernel's MXU path does).
    ref_bf16 = down_reference(x, params, dtype=jnp.bfloat16)
    assert jnp.allclose(out, ref_bf16, atol=1e-3, rtol=1e-3), (
        float(jnp.max(jnp.abs(out - ref_bf16))))

    # Loose sanity check against the exact f32 module semantics
    # (difference is only the bf16 rounding of the MXU operands).
    ref_f32 = down_reference(x, params, dtype=jnp.float32)
    assert jnp.allclose(out, ref_f32, atol=7e-2, rtol=5e-2), (
        float(jnp.max(jnp.abs(out - ref_f32))))

    print("KERNEL_OK")
</pallas_src>

<mosaic_0001>
module attributes {stable_mosaic.version = 11 : i64} {
  func.func @_down_kernel(%arg0: i32, %arg1: memref<1x4x8x8x128xbf16, #tpu.memory_space<vmem>>, %arg2: memref<9x128x128xbf16, #tpu.memory_space<vmem>>, %arg3: memref<1x128xf32, #tpu.memory_space<vmem>>, %arg4: memref<1x128xf32, #tpu.memory_space<vmem>>, %arg5: memref<9x128x128xbf16, #tpu.memory_space<vmem>>, %arg6: memref<1x128xf32, #tpu.memory_space<vmem>>, %arg7: memref<1x128xf32, #tpu.memory_space<vmem>>, %arg8: memref<1x8x8x128xf32, #tpu.memory_space<vmem>>, %arg9: memref<10x10x128xbf16, #tpu.memory_space<vmem>>) attributes {dimension_semantics = [#tpu.dimension_semantics<parallel>], iteration_bounds = array<i64: 2>, scalar_prefetch = 0 : i64, scratch_operands = 1 : i64, tpu.core_type = #tpu.core_type<tc>, window_params = [{transform_indices = @transform_0, window_bounds = array<i64: 1, 4, 8, 8, 128>}, {pipeline_mode = #tpu.pipeline_mode<synchronous>, transform_indices = @transform_1, window_bounds = array<i64: 9, 128, 128>}, {pipeline_mode = #tpu.pipeline_mode<synchronous>, transform_indices = @transform_2, window_bounds = array<i64: 1, 128>}, {pipeline_mode = #tpu.pipeline_mode<synchronous>, transform_indices = @transform_3, window_bounds = array<i64: 1, 128>}, {pipeline_mode = #tpu.pipeline_mode<synchronous>, transform_indices = @transform_4, window_bounds = array<i64: 9, 128, 128>}, {pipeline_mode = #tpu.pipeline_mode<synchronous>, transform_indices = @transform_5, window_bounds = array<i64: 1, 128>}, {pipeline_mode = #tpu.pipeline_mode<synchronous>, transform_indices = @transform_6, window_bounds = array<i64: 1, 128>}, {transform_indices = @transform_7, window_bounds = array<i64: 1, 8, 8, 128>}]} {
    %cst = arith.constant 0.000000e+00 : bf16
    %0 = vector.broadcast %cst : bf16 to vector<1x10x128xbf16>
    %c0 = arith.constant 0 : index
    %c0_0 = arith.constant 0 : index
    %c0_1 = arith.constant 0 : index
    %1 = vector.load %arg9[%c0, %c0_0, %c0_1] : memref<10x10x128xbf16, #tpu.memory_space<vmem>>, vector<1x10x128xbf16>
    tpu.vector_store %arg9[%c0, %c0_0, %c0_1], %0 {strides = array<i32>} : memref<10x10x128xbf16, #tpu.memory_space<vmem>>, vector<1x10x128xbf16>,
    %cst_2 = arith.constant 0.000000e+00 : bf16
    %2 = vector.broadcast %cst_2 : bf16 to vector<1x10x128xbf16>
    %c9 = arith.constant 9 : index
    %c0_3 = arith.constant 0 : index
    %c0_4 = arith.constant 0 : index
    %3 = vector.load %arg9[%c9, %c0_3, %c0_4] : memref<10x10x128xbf16, #tpu.memory_space<vmem>>, vector<1x10x128xbf16>
    tpu.vector_store %arg9[%c9, %c0_3, %c0_4], %2 {strides = array<i32>} : memref<10x10x128xbf16, #tpu.memory_space<vmem>>, vector<1x10x128xbf16>,
    %cst_5 = arith.constant 0.000000e+00 : bf16
    %4 = vector.broadcast %cst_5 : bf16 to vector<8x1x128xbf16>
    %c1 = arith.constant 1 : index
    %c0_6 = arith.constant 0 : index
    %c0_7 = arith.constant 0 : index
    %5 = vector.load %arg9[%c1, %c0_6, %c0_7] : memref<10x10x128xbf16, #tpu.memory_space<vmem>>, vector<8x1x128xbf16>
    tpu.vector_store %arg9[%c1, %c0_6, %c0_7], %4 {strides = array<i32>} : memref<10x10x128xbf16, #tpu.memory_space<vmem>>, vector<8x1x128xbf16>,
    %cst_8 = arith.constant 0.000000e+00 : bf16
    %6 = vector.broadcast %cst_8 : bf16 to vector<8x1x128xbf16>
    %c1_9 = arith.constant 1 : index
    %c9_10 = arith.constant 9 : index
    %c0_11 = arith.constant 0 : index
    %7 = vector.load %arg9[%c1_9, %c9_10, %c0_11] : memref<10x10x128xbf16, #tpu.memory_space<vmem>>, vector<8x1x128xbf16>
    tpu.vector_store %arg9[%c1_9, %c9_10, %c0_11], %6 {strides = array<i32>} : memref<10x10x128xbf16, #tpu.memory_space<vmem>>, vector<8x1x128xbf16>,
    %c0_12 = arith.constant 0 : index
    %c0_13 = arith.constant 0 : index
    %c0_14 = arith.constant 0 : index
    %c0_15 = arith.constant 0 : index
    %c0_16 = arith.constant 0 : index
    %8 = vector.load %arg1[%c0_12, %c0_13, %c0_14, %c0_15, %c0_16] : memref<1x4x8x8x128xbf16, #tpu.memory_space<vmem>>, vector<1x1x8x8x128xbf16>
    %9 = vector.shape_cast %8 : vector<1x1x8x8x128xbf16> to vector<8x8x128xbf16>
    %c0_17 = arith.constant 0 : index
    %c1_18 = arith.constant 1 : index
    %c0_19 = arith.constant 0 : index
    %c0_20 = arith.constant 0 : index
    %c0_21 = arith.constant 0 : index
    %10 = vector.load %arg1[%c0_17, %c1_18, %c0_19, %c0_20, %c0_21] : memref<1x4x8x8x128xbf16, #tpu.memory_space<vmem>>, vector<1x1x8x8x128xbf16>
    %11 = vector.shape_cast %10 : vector<1x1x8x8x128xbf16> to vector<8x8x128xbf16>
    %12 = arith.maximumf %9, %11 : vector<8x8x128xbf16>
    %c0_22 = arith.constant 0 : index
    %c2 = arith.constant 2 : index
    %c0_23 = arith.constant 0 : index
    %c0_24 = arith.constant 0 : index
    %c0_25 = arith.constant 0 : index
    %13 = vector.load %arg1[%c0_22, %c2, %c0_23, %c0_24, %c0_25] : memref<1x4x8x8x128xbf16, #tpu.memory_space<vmem>>, vector<1x1x8x8x128xbf16>
    %14 = vector.shape_cast %13 : vector<1x1x8x8x128xbf16> to vector<8x8x128xbf16>
    %c0_26 = arith.constant 0 : index
    %c3 = arith.constant 3 : index
    %c0_27 = arith.constant 0 : index
    %c0_28 = arith.constant 0 : index
    %c0_29 = arith.constant 0 : index
    %15 = vector.load %arg1[%c0_26, %c3, %c0_27, %c0_28, %c0_29] : memref<1x4x8x8x128xbf16, #tpu.memory_space<vmem>>, vector<1x1x8x8x128xbf16>
    %16 = vector.shape_cast %15 : vector<1x1x8x8x128xbf16> to vector<8x8x128xbf16>
    %17 = arith.maximumf %14, %16 : vector<8x8x128xbf16>
    %18 = arith.maximumf %12, %17 : vector<8x8x128xbf16>
    %c1_30 = arith.constant 1 : index
    %c1_31 = arith.constant 1 : index
    %c0_32 = arith.constant 0 : index
    %19 = vector.load %arg9[%c1_30, %c1_31, %c0_32] : memref<10x10x128xbf16, #tpu.memory_space<vmem>>, vector<8x8x128xbf16>
    tpu.vector_store %arg9[%c1_30, %c1_31, %c0_32], %18 {strides = array<i32>} : memref<10x10x128xbf16, #tpu.memory_space<vmem>>, vector<8x8x128xbf16>,
    %cst_33 = arith.constant 0.000000e+00 : f32
    %20 = vector.broadcast %cst_33 : f32 to vector<64x128xf32>
    %c0_34 = arith.constant 0 : index
    %c0_35 = arith.constant 0 : index
    %c0_36 = arith.constant 0 : index
    %21 = vector.load %arg9[%c0_34, %c0_35, %c0_36] : memref<10x10x128xbf16, #tpu.memory_space<vmem>>, vector<8x8x128xbf16>
    %22 = vector.shape_cast %21 : vector<8x8x128xbf16> to vector<64x128xbf16>
    %c0_37 = arith.constant 0 : index
    %c0_38 = arith.constant 0 : index
    %c0_39 = arith.constant 0 : index
    %23 = vector.load %arg2[%c0_37, %c0_38, %c0_39] : memref<9x128x128xbf16, #tpu.memory_space<vmem>>, vector<1x128x128xbf16>
    %24 = vector.shape_cast %23 : vector<1x128x128xbf16> to vector<128x128xbf16>
    %cst_40 = arith.constant dense<0.000000e+00> : vector<64x128xf32>
    %25 = tpu.matmul %22, %24, %cst_40 {dimension_numbers = #tpu.dot_dimension_numbers<[1], [0], [0], [1], [0, 0, 1, 1], [], []>} : vector<64x128xbf16>, vector<128x128xbf16>, vector<64x128xf32> -> vector<64x128xf32>
    %26 = arith.addf %20, %25 : vector<64x128xf32>
    %c0_41 = arith.constant 0 : index
    %c1_42 = arith.constant 1 : index
    %c0_43 = arith.constant 0 : index
    %27 = vector.load %arg9[%c0_41, %c1_42, %c0_43] : memref<10x10x128xbf16, #tpu.memory_space<vmem>>, vector<8x8x128xbf16>
    %28 = vector.shape_cast %27 : vector<8x8x128xbf16> to vector<64x128xbf16>
    %c1_44 = arith.constant 1 : index
    %c0_45 = arith.constant 0 : index
    %c0_46 = arith.constant 0 : index
    %29 = vector.load %arg2[%c1_44, %c0_45, %c0_46] : memref<9x128x128xbf16, #tpu.memory_space<vmem>>, vector<1x128x128xbf16>
    %30 = vector.shape_cast %29 : vector<1x128x128xbf16> to vector<128x128xbf16>
    %cst_47 = arith.constant dense<0.000000e+00> : vector<64x128xf32>
    %31 = tpu.matmul %28, %30, %cst_47 {dimension_numbers = #tpu.dot_dimension_numbers<[1], [0], [0], [1], [0, 0, 1, 1], [], []>} : vector<64x128xbf16>, vector<128x128xbf16>, vector<64x128xf32> -> vector<64x128xf32>
    %32 = arith.addf %26, %31 : vector<64x128xf32>
    %c0_48 = arith.constant 0 : index
    %c2_49 = arith.constant 2 : index
    %c0_50 = arith.constant 0 : index
    %33 = vector.load %arg9[%c0_48, %c2_49, %c0_50] : memref<10x10x128xbf16, #tpu.memory_space<vmem>>, vector<8x8x128xbf16>
    %34 = vector.shape_cast %33 : vector<8x8x128xbf16> to vector<64x128xbf16>
    %c2_51 = arith.constant 2 : index
    %c0_52 = arith.constant 0 : index
    %c0_53 = arith.constant 0 : index
    %35 = vector.load %arg2[%c2_51, %c0_52, %c0_53] : memref<9x128x128xbf16, #tpu.memory_space<vmem>>, vector<1x128x128xbf16>
    %36 = vector.shape_cast %35 : vector<1x128x128xbf16> to vector<128x128xbf16>
    %cst_54 = arith.constant dense<0.000000e+00> : vector<64x128xf32>
    %37 = tpu.matmul %34, %36, %cst_54 {dimension_numbers = #tpu.dot_dimension_numbers<[1], [0], [0], [1], [0, 0, 1, 1], [], []>} : vector<64x128xbf16>, vector<128x128xbf16>, vector<64x128xf32> -> vector<64x128xf32>
    %38 = arith.addf %32, %37 : vector<64x128xf32>
    %c1_55 = arith.constant 1 : index
    %c0_56 = arith.constant 0 : index
    %c0_57 = arith.constant 0 : index
    %39 = vector.load %arg9[%c1_55, %c0_56, %c0_57] : memref<10x10x128xbf16, #tpu.memory_space<vmem>>, vector<8x8x128xbf16>
    %40 = vector.shape_cast %39 : vector<8x8x128xbf16> to vector<64x128xbf16>
    %c3_58 = arith.constant 3 : index
    %c0_59 = arith.constant 0 : index
    %c0_60 = arith.constant 0 : index
    %41 = vector.load %arg2[%c3_58, %c0_59, %c0_60] : memref<9x128x128xbf16, #tpu.memory_space<vmem>>, vector<1x128x128xbf16>
    %42 = vector.shape_cast %41 : vector<1x128x128xbf16> to vector<128x128xbf16>
    %cst_61 = arith.constant dense<0.000000e+00> : vector<64x128xf32>
    %43 = tpu.matmul %40, %42, %cst_61 {dimension_numbers = #tpu.dot_dimension_numbers<[1], [0], [0], [1], [0, 0, 1, 1], [], []>} : vector<64x128xbf16>, vector<128x128xbf16>, vector<64x128xf32> -> vector<64x128xf32>
    %44 = arith.addf %38, %43 : vector<64x128xf32>
    %c1_62 = arith.constant 1 : index
    %c1_63 = arith.constant 1 : index
    %c0_64 = arith.constant 0 : index
    %45 = vector.load %arg9[%c1_62, %c1_63, %c0_64] : memref<10x10x128xbf16, #tpu.memory_space<vmem>>, vector<8x8x128xbf16>
    %46 = vector.shape_cast %45 : vector<8x8x128xbf16> to vector<64x128xbf16>
    %c4 = arith.constant 4 : index
    %c0_65 = arith.constant 0 : index
    %c0_66 = arith.constant 0 : index
    %47 = vector.load %arg2[%c4, %c0_65, %c0_66] : memref<9x128x128xbf16, #tpu.memory_space<vmem>>, vector<1x128x128xbf16>
    %48 = vector.shape_cast %47 : vector<1x128x128xbf16> to vector<128x128xbf16>
    %cst_67 = arith.constant dense<0.000000e+00> : vector<64x128xf32>
    %49 = tpu.matmul %46, %48, %cst_67 {dimension_numbers = #tpu.dot_dimension_numbers<[1], [0], [0], [1], [0, 0, 1, 1], [], []>} : vector<64x128xbf16>, vector<128x128xbf16>, vector<64x128xf32> -> vector<64x128xf32>
    %50 = arith.addf %44, %49 : vector<64x128xf32>
    %c1_68 = arith.constant 1 : index
    %c2_69 = arith.constant 2 : index
    %c0_70 = arith.constant 0 : index
    %51 = vector.load %arg9[%c1_68, %c2_69, %c0_70] : memref<10x10x128xbf16, #tpu.memory_space<vmem>>, vector<8x8x128xbf16>
    %52 = vector.shape_cast %51 : vector<8x8x128xbf16> to vector<64x128xbf16>
    %c5 = arith.constant 5 : index
    %c0_71 = arith.constant 0 : index
    %c0_72 = arith.constant 0 : index
    %53 = vector.load %arg2[%c5, %c0_71, %c0_72] : memref<9x128x128xbf16, #tpu.memory_space<vmem>>, vector<1x128x128xbf16>
    %54 = vector.shape_cast %53 : vector<1x128x128xbf16> to vector<128x128xbf16>
    %cst_73 = arith.constant dense<0.000000e+00> : vector<64x128xf32>
    %55 = tpu.matmul %52, %54, %cst_73 {dimension_numbers = #tpu.dot_dimension_numbers<[1], [0], [0], [1], [0, 0, 1, 1], [], []>} : vector<64x128xbf16>, vector<128x128xbf16>, vector<64x128xf32> -> vector<64x128xf32>
    %56 = arith.addf %50, %55 : vector<64x128xf32>
    %c2_74 = arith.constant 2 : index
    %c0_75 = arith.constant 0 : index
    %c0_76 = arith.constant 0 : index
    %57 = vector.load %arg9[%c2_74, %c0_75, %c0_76] : memref<10x10x128xbf16, #tpu.memory_space<vmem>>, vector<8x8x128xbf16>
    %58 = vector.shape_cast %57 : vector<8x8x128xbf16> to vector<64x128xbf16>
    %c6 = arith.constant 6 : index
    %c0_77 = arith.constant 0 : index
    %c0_78 = arith.constant 0 : index
    %59 = vector.load %arg2[%c6, %c0_77, %c0_78] : memref<9x128x128xbf16, #tpu.memory_space<vmem>>, vector<1x128x128xbf16>
    %60 = vector.shape_cast %59 : vector<1x128x128xbf16> to vector<128x128xbf16>
    %cst_79 = arith.constant dense<0.000000e+00> : vector<64x128xf32>
    %61 = tpu.matmul %58, %60, %cst_79 {dimension_numbers = #tpu.dot_dimension_numbers<[1], [0], [0], [1], [0, 0, 1, 1], [], []>} : vector<64x128xbf16>, vector<128x128xbf16>, vector<64x128xf32> -> vector<64x128xf32>
    %62 = arith.addf %56, %61 : vector<64x128xf32>
    %c2_80 = arith.constant 2 : index
    %c1_81 = arith.constant 1 : index
    %c0_82 = arith.constant 0 : index
    %63 = vector.load %arg9[%c2_80, %c1_81, %c0_82] : memref<10x10x128xbf16, #tpu.memory_space<vmem>>, vector<8x8x128xbf16>
    %64 = vector.shape_cast %63 : vector<8x8x128xbf16> to vector<64x128xbf16>
    %c7 = arith.constant 7 : index
    %c0_83 = arith.constant 0 : index
    %c0_84 = arith.constant 0 : index
    %65 = vector.load %arg2[%c7, %c0_83, %c0_84] : memref<9x128x128xbf16, #tpu.memory_space<vmem>>, vector<1x128x128xbf16>
    %66 = vector.shape_cast %65 : vector<1x128x128xbf16> to vector<128x128xbf16>
    %cst_85 = arith.constant dense<0.000000e+00> : vector<64x128xf32>
    %67 = tpu.matmul %64, %66, %cst_85 {dimension_numbers = #tpu.dot_dimension_numbers<[1], [0], [0], [1], [0, 0, 1, 1], [], []>} : vector<64x128xbf16>, vector<128x128xbf16>, vector<64x128xf32> -> vector<64x128xf32>
    %68 = arith.addf %62, %67 : vector<64x128xf32>
    %c2_86 = arith.constant 2 : index
    %c2_87 = arith.constant 2 : index
    %c0_88 = arith.constant 0 : index
    %69 = vector.load %arg9[%c2_86, %c2_87, %c0_88] : memref<10x10x128xbf16, #tpu.memory_space<vmem>>, vector<8x8x128xbf16>
    %70 = vector.shape_cast %69 : vector<8x8x128xbf16> to vector<64x128xbf16>
    %c8 = arith.constant 8 : index
    %c0_89 = arith.constant 0 : index
    %c0_90 = arith.constant 0 : index
    %71 = vector.load %arg2[%c8, %c0_89, %c0_90] : memref<9x128x128xbf16, #tpu.memory_space<vmem>>, vector<1x128x128xbf16>
    %72 = vector.shape_cast %71 : vector<1x128x128xbf16> to vector<128x128xbf16>
    %cst_91 = arith.constant dense<0.000000e+00> : vector<64x128xf32>
    %73 = tpu.matmul %70, %72, %cst_91 {dimension_numbers = #tpu.dot_dimension_numbers<[1], [0], [0], [1], [0, 0, 1, 1], [], []>} : vector<64x128xbf16>, vector<128x128xbf16>, vector<64x128xf32> -> vector<64x128xf32>
    %74 = arith.addf %68, %73 : vector<64x128xf32>
    %c0_92 = arith.constant 0 : index
    %c0_93 = arith.constant 0 : index
    %75 = vector.load %arg3[%c0_92, %c0_93] : memref<1x128xf32, #tpu.memory_space<vmem>>, vector<1x128xf32>
    %76 = vector.broadcast %75 : vector<1x128xf32> to vector<64x128xf32>
    %77 = arith.mulf %74, %76 : vector<64x128xf32>
    %c0_94 = arith.constant 0 : index
    %c0_95 = arith.constant 0 : index
    %78 = vector.load %arg4[%c0_94, %c0_95] : memref<1x128xf32, #tpu.memory_space<vmem>>, vector<1x128xf32>
    %79 = vector.broadcast %78 : vector<1x128xf32> to vector<64x128xf32>
    %80 = arith.addf %77, %79 : vector<64x128xf32>
    %cst_96 = arith.constant 0.000000e+00 : f32
    %81 = vector.broadcast %cst_96 : f32 to vector<64x128xf32>
    %82 = arith.maximumf %80, %81 : vector<64x128xf32>
    %83 = vector.shape_cast %82 : vector<64x128xf32> to vector<8x8x128xf32>
    %84 = arith.truncf %83 : vector<8x8x128xf32> to vector<8x8x128xbf16>
    %c1_97 = arith.constant 1 : index
    %c1_98 = arith.constant 1 : index
    %c0_99 = arith.constant 0 : index
    %85 = vector.load %arg9[%c1_97, %c1_98, %c0_99] : memref<10x10x128xbf16, #tpu.memory_space<vmem>>, vector<8x8x128xbf16>
    tpu.vector_store %arg9[%c1_97, %c1_98, %c0_99], %84 {strides = array<i32>} : memref<10x10x128xbf16, #tpu.memory_space<vmem>>, vector<8x8x128xbf16>,
    %cst_100 = arith.constant 0.000000e+00 : f32
    %86 = vector.broadcast %cst_100 : f32 to vector<64x128xf32>
    %c0_101 = arith.constant 0 : index
    %c0_102 = arith.constant 0 : index
    %c0_103 = arith.constant 0 : index
    %87 = vector.load %arg9[%c0_101, %c0_102, %c0_103] : memref<10x10x128xbf16, #tpu.memory_space<vmem>>, vector<8x8x128xbf16>
    %88 = vector.shape_cast %87 : vector<8x8x128xbf16> to vector<64x128xbf16>
    %c0_104 = arith.constant 0 : index
    %c0_105 = arith.constant 0 : index
    %c0_106 = arith.constant 0 : index
    %89 = vector.load %arg5[%c0_104, %c0_105, %c0_106] : memref<9x128x128xbf16, #tpu.memory_space<vmem>>, vector<1x128x128xbf16>
    %90 = vector.shape_cast %89 : vector<1x128x128xbf16> to vector<128x128xbf16>
    %cst_107 = arith.constant dense<0.000000e+00> : vector<64x128xf32>
    %91 = tpu.matmul %88, %90, %cst_107 {dimension_numbers = #tpu.dot_dimension_numbers<[1], [0], [0], [1], [0, 0, 1, 1], [], []>} : vector<64x128xbf16>, vector<128x128xbf16>, vector<64x128xf32> -> vector<64x128xf32>
    %92 = arith.addf %86, %91 : vector<64x128xf32>
    %c0_108 = arith.constant 0 : index
    %c1_109 = arith.constant 1 : index
    %c0_110 = arith.constant 0 : index
    %93 = vector.load %arg9[%c0_108, %c1_109, %c0_110] : memref<10x10x128xbf16, #tpu.memory_space<vmem>>, vector<8x8x128xbf16>
    %94 = vector.shape_cast %93 : vector<8x8x128xbf16> to vector<64x128xbf16>
    %c1_111 = arith.constant 1 : index
    %c0_112 = arith.constant 0 : index
    %c0_113 = arith.constant 0 : index
    %95 = vector.load %arg5[%c1_111, %c0_112, %c0_113] : memref<9x128x128xbf16, #tpu.memory_space<vmem>>, vector<1x128x128xbf16>
    %96 = vector.shape_cast %95 : vector<1x128x128xbf16> to vector<128x128xbf16>
    %cst_114 = arith.constant dense<0.000000e+00> : vector<64x128xf32>
    %97 = tpu.matmul %94, %96, %cst_114 {dimension_numbers = #tpu.dot_dimension_numbers<[1], [0], [0], [1], [0, 0, 1, 1], [], []>} : vector<64x128xbf16>, vector<128x128xbf16>, vector<64x128xf32> -> vector<64x128xf32>
    %98 = arith.addf %92, %97 : vector<64x128xf32>
    %c0_115 = arith.constant 0 : index
    %c2_116 = arith.constant 2 : index
    %c0_117 = arith.constant 0 : index
    %99 = vector.load %arg9[%c0_115, %c2_116, %c0_117] : memref<10x10x128xbf16, #tpu.memory_space<vmem>>, vector<8x8x128xbf16>
    %100 = vector.shape_cast %99 : vector<8x8x128xbf16> to vector<64x128xbf16>
    %c2_118 = arith.constant 2 : index
    %c0_119 = arith.constant 0 : index
    %c0_120 = arith.constant 0 : index
    %101 = vector.load %arg5[%c2_118, %c0_119, %c0_120] : memref<9x128x128xbf16, #tpu.memory_space<vmem>>, vector<1x128x128xbf16>
    %102 = vector.shape_cast %101 : vector<1x128x128xbf16> to vector<128x128xbf16>
    %cst_121 = arith.constant dense<0.000000e+00> : vector<64x128xf32>
    %103 = tpu.matmul %100, %102, %cst_121 {dimension_numbers = #tpu.dot_dimension_numbers<[1], [0], [0], [1], [0, 0, 1, 1], [], []>} : vector<64x128xbf16>, vector<128x128xbf16>, vector<64x128xf32> -> vector<64x128xf32>
    %104 = arith.addf %98, %103 : vector<64x128xf32>
    %c1_122 = arith.constant 1 : index
    %c0_123 = arith.constant 0 : index
    %c0_124 = arith.constant 0 : index
    %105 = vector.load %arg9[%c1_122, %c0_123, %c0_124] : memref<10x10x128xbf16, #tpu.memory_space<vmem>>, vector<8x8x128xbf16>
    %106 = vector.shape_cast %105 : vector<8x8x128xbf16> to vector<64x128xbf16>
    %c3_125 = arith.constant 3 : index
    %c0_126 = arith.constant 0 : index
    %c0_127 = arith.constant 0 : index
    %107 = vector.load %arg5[%c3_125, %c0_126, %c0_127] : memref<9x128x128xbf16, #tpu.memory_space<vmem>>, vector<1x128x128xbf16>
    %108 = vector.shape_cast %107 : vector<1x128x128xbf16> to vector<128x128xbf16>
    %cst_128 = arith.constant dense<0.000000e+00> : vector<64x128xf32>
    %109 = tpu.matmul %106, %108, %cst_128 {dimension_numbers = #tpu.dot_dimension_numbers<[1], [0], [0], [1], [0, 0, 1, 1], [], []>} : vector<64x128xbf16>, vector<128x128xbf16>, vector<64x128xf32> -> vector<64x128xf32>
    %110 = arith.addf %104, %109 : vector<64x128xf32>
    %c1_129 = arith.constant 1 : index
    %c1_130 = arith.constant 1 : index
    %c0_131 = arith.constant 0 : index
    %111 = vector.load %arg9[%c1_129, %c1_130, %c0_131] : memref<10x10x128xbf16, #tpu.memory_space<vmem>>, vector<8x8x128xbf16>
    %112 = vector.shape_cast %111 : vector<8x8x128xbf16> to vector<64x128xbf16>
    %c4_132 = arith.constant 4 : index
    %c0_133 = arith.constant 0 : index
    %c0_134 = arith.constant 0 : index
    %113 = vector.load %arg5[%c4_132, %c0_133, %c0_134] : memref<9x128x128xbf16, #tpu.memory_space<vmem>>, vector<1x128x128xbf16>
    %114 = vector.shape_cast %113 : vector<1x128x128xbf16> to vector<128x128xbf16>
    %cst_135 = arith.constant dense<0.000000e+00> : vector<64x128xf32>
    %115 = tpu.matmul %112, %114, %cst_135 {dimension_numbers = #tpu.dot_dimension_numbers<[1], [0], [0], [1], [0, 0, 1, 1], [], []>} : vector<64x128xbf16>, vector<128x128xbf16>, vector<64x128xf32> -> vector<64x128xf32>
    %116 = arith.addf %110, %115 : vector<64x128xf32>
    %c1_136 = arith.constant 1 : index
    %c2_137 = arith.constant 2 : index
    %c0_138 = arith.constant 0 : index
    %117 = vector.load %arg9[%c1_136, %c2_137, %c0_138] : memref<10x10x128xbf16, #tpu.memory_space<vmem>>, vector<8x8x128xbf16>
    %118 = vector.shape_cast %117 : vector<8x8x128xbf16> to vector<64x128xbf16>
    %c5_139 = arith.constant 5 : index
    %c0_140 = arith.constant 0 : index
    %c0_141 = arith.constant 0 : index
    %119 = vector.load %arg5[%c5_139, %c0_140, %c0_141] : memref<9x128x128xbf16, #tpu.memory_space<vmem>>, vector<1x128x128xbf16>
    %120 = vector.shape_cast %119 : vector<1x128x128xbf16> to vector<128x128xbf16>
    %cst_142 = arith.constant dense<0.000000e+00> : vector<64x128xf32>
    %121 = tpu.matmul %118, %120, %cst_142 {dimension_numbers = #tpu.dot_dimension_numbers<[1], [0], [0], [1], [0, 0, 1, 1], [], []>} : vector<64x128xbf16>, vector<128x128xbf16>, vector<64x128xf32> -> vector<64x128xf32>
    %122 = arith.addf %116, %121 : vector<64x128xf32>
    %c2_143 = arith.constant 2 : index
    %c0_144 = arith.constant 0 : index
    %c0_145 = arith.constant 0 : index
    %123 = vector.load %arg9[%c2_143, %c0_144, %c0_145] : memref<10x10x128xbf16, #tpu.memory_space<vmem>>, vector<8x8x128xbf16>
    %124 = vector.shape_cast %123 : vector<8x8x128xbf16> to vector<64x128xbf16>
    %c6_146 = arith.constant 6 : index
    %c0_147 = arith.constant 0 : index
    %c0_148 = arith.constant 0 : index
    %125 = vector.load %arg5[%c6_146, %c0_147, %c0_148] : memref<9x128x128xbf16, #tpu.memory_space<vmem>>, vector<1x128x128xbf16>
    %126 = vector.shape_cast %125 : vector<1x128x128xbf16> to vector<128x128xbf16>
    %cst_149 = arith.constant dense<0.000000e+00> : vector<64x128xf32>
    %127 = tpu.matmul %124, %126, %cst_149 {dimension_numbers = #tpu.dot_dimension_numbers<[1], [0], [0], [1], [0, 0, 1, 1], [], []>} : vector<64x128xbf16>, vector<128x128xbf16>, vector<64x128xf32> -> vector<64x128xf32>
    %128 = arith.addf %122, %127 : vector<64x128xf32>
    %c2_150 = arith.constant 2 : index
    %c1_151 = arith.constant 1 : index
    %c0_152 = arith.constant 0 : index
    %129 = vector.load %arg9[%c2_150, %c1_151, %c0_152] : memref<10x10x128xbf16, #tpu.memory_space<vmem>>, vector<8x8x128xbf16>
    %130 = vector.shape_cast %129 : vector<8x8x128xbf16> to vector<64x128xbf16>
    %c7_153 = arith.constant 7 : index
    %c0_154 = arith.constant 0 : index
    %c0_155 = arith.constant 0 : index
    %131 = vector.load %arg5[%c7_153, %c0_154, %c0_155] : memref<9x128x128xbf16, #tpu.memory_space<vmem>>, vector<1x128x128xbf16>
    %132 = vector.shape_cast %131 : vector<1x128x128xbf16> to vector<128x128xbf16>
    %cst_156 = arith.constant dense<0.000000e+00> : vector<64x128xf32>
    %133 = tpu.matmul %130, %132, %cst_156 {dimension_numbers = #tpu.dot_dimension_numbers<[1], [0], [0], [1], [0, 0, 1, 1], [], []>} : vector<64x128xbf16>, vector<128x128xbf16>, vector<64x128xf32> -> vector<64x128xf32>
    %134 = arith.addf %128, %133 : vector<64x128xf32>
    %c2_157 = arith.constant 2 : index
    %c2_158 = arith.constant 2 : index
    %c0_159 = arith.constant 0 : index
    %135 = vector.load %arg9[%c2_157, %c2_158, %c0_159] : memref<10x10x128xbf16, #tpu.memory_space<vmem>>, vector<8x8x128xbf16>
    %136 = vector.shape_cast %135 : vector<8x8x128xbf16> to vector<64x128xbf16>
    %c8_160 = arith.constant 8 : index
    %c0_161 = arith.constant 0 : index
    %c0_162 = arith.constant 0 : index
    %137 = vector.load %arg5[%c8_160, %c0_161, %c0_162] : memref<9x128x128xbf16, #tpu.memory_space<vmem>>, vector<1x128x128xbf16>
    %138 = vector.shape_cast %137 : vector<1x128x128xbf16> to vector<128x128xbf16>
    %cst_163 = arith.constant dense<0.000000e+00> : vector<64x128xf32>
    %139 = tpu.matmul %136, %138, %cst_163 {dimension_numbers = #tpu.dot_dimension_numbers<[1], [0], [0], [1], [0, 0, 1, 1], [], []>} : vector<64x128xbf16>, vector<128x128xbf16>, vector<64x128xf32> -> vector<64x128xf32>
    %140 = arith.addf %134, %139 : vector<64x128xf32>
    %c0_164 = arith.constant 0 : index
    %c0_165 = arith.constant 0 : index
    %141 = vector.load %arg6[%c0_164, %c0_165] : memref<1x128xf32, #tpu.memory_space<vmem>>, vector<1x128xf32>
    %142 = vector.broadcast %141 : vector<1x128xf32> to vector<64x128xf32>
    %143 = arith.mulf %140, %142 : vector<64x128xf32>
    %c0_166 = arith.constant 0 : index
    %c0_167 = arith.constant 0 : index
    %144 = vector.load %arg7[%c0_166, %c0_167] : memref<1x128xf32, #tpu.memory_space<vmem>>, vector<1x128xf32>
    %145 = vector.broadcast %144 : vector<1x128xf32> to vector<64x128xf32>
    %146 = arith.addf %143, %145 : vector<64x128xf32>
    %cst_168 = arith.constant 0.000000e+00 : f32
    %147 = vector.broadcast %cst_168 : f32 to vector<64x128xf32>
    %148 = arith.maximumf %146, %147 : vector<64x128xf32>
    %149 = vector.shape_cast %148 : vector<64x128xf32> to vector<8x8x128xf32>
    %c0_169 = arith.constant 0 : index
    %c0_170 = arith.constant 0 : index
    %c0_171 = arith.constant 0 : index
    %c0_172 = arith.constant 0 : index
    %150 = vector.load %arg8[%c0_169, %c0_170, %c0_171, %c0_172] : memref<1x8x8x128xf32, #tpu.memory_space<vmem>>, vector<1x8x8x128xf32>
    %151 = vector.shape_cast %150 : vector<1x8x8x128xf32> to vector<8x8x128xf32>
    %152 = vector.shape_cast %149 : vector<8x8x128xf32> to vector<1x8x8x128xf32>
    tpu.vector_store %arg8[%c0_169, %c0_170, %c0_171, %c0_172], %152 {strides = array<i32>} : memref<1x8x8x128xf32, #tpu.memory_space<vmem>>, vector<1x8x8x128xf32>,
    return
  }
  func.func @transform_0(%arg0: i32) -> (i32, i32, i32, i32, i32) {
    %c0_i32 = arith.constant 0 : i32
    %c0_i32_0 = arith.constant 0 : i32
    %c0_i32_1 = arith.constant 0 : i32
    %c0_i32_2 = arith.constant 0 : i32
    %c0_i32_3 = arith.constant 0 : i32
    return %arg0, %c0_i32, %c0_i32_0, %c0_i32_1, %c0_i32_2 : i32, i32, i32, i32, i32
  }
  func.func @transform_1(%arg0: i32) -> (i32, i32, i32) {
    %c0_i32 = arith.constant 0 : i32
    %c0_i32_0 = arith.constant 0 : i32
    %c0_i32_1 = arith.constant 0 : i32
    %c0_i32_2 = arith.constant 0 : i32
    return %c0_i32, %c0_i32_0, %c0_i32_1 : i32, i32, i32
  }
  func.func @transform_2(%arg0: i32) -> (i32, i32) {
    %c0_i32 = arith.constant 0 : i32
    %c0_i32_0 = arith.constant 0 : i32
    %c0_i32_1 = arith.constant 0 : i32
    return %c0_i32, %c0_i32_0 : i32, i32
  }
  func.func @transform_3(%arg0: i32) -> (i32, i32) {
    %c0_i32 = arith.constant 0 : i32
    %c0_i32_0 = arith.constant 0 : i32
    %c0_i32_1 = arith.constant 0 : i32
    return %c0_i32, %c0_i32_0 : i32, i32
  }
  func.func @transform_4(%arg0: i32) -> (i32, i32, i32) {
    %c0_i32 = arith.constant 0 : i32
    %c0_i32_0 = arith.constant 0 : i32
    %c0_i32_1 = arith.constant 0 : i32
    %c0_i32_2 = arith.constant 0 : i32
    return %c0_i32, %c0_i32_0, %c0_i32_1 : i32, i32, i32
  }
  func.func @transform_5(%arg0: i32) -> (i32, i32) {
    %c0_i32 = arith.constant 0 : i32
    %c0_i32_0 = arith.constant 0 : i32
    %c0_i32_1 = arith.constant 0 : i32
    return %c0_i32, %c0_i32_0 : i32, i32
  }
  func.func @transform_6(%arg0: i32) -> (i32, i32) {
    %c0_i32 = arith.constant 0 : i32
    %c0_i32_0 = arith.constant 0 : i32
    %c0_i32_1 = arith.constant 0 : i32
    return %c0_i32, %c0_i32_0 : i32, i32
  }
  func.func @transform_7(%arg0: i32) -> (i32, i32, i32, i32) {
    %c0_i32 = arith.constant 0 : i32
    %c0_i32_0 = arith.constant 0 : i32
    %c0_i32_1 = arith.constant 0 : i32
    %c0_i32_2 = arith.constant 0 : i32
    return %arg0, %c0_i32, %c0_i32_0, %c0_i32_1 : i32, i32, i32, i32
  }
}

</mosaic_0001>

<llo_original>
// kernel: tpu_custom_call.1
$region0: #{tpu_custom_call.1}
  #allocation0 [shape = 'u32[]', space=smem, size = 0x4, offset = 0x4, fixed_abs, tag = 'smem constant byte address 0x4 - core index']
  #allocation1 [shape = 'u32[144,128]{1,0:T(1,128)}', space=vmem, size = 0x12000, scoped, tag = 'internal scratch']
  #allocation2 [shape = 'bf16[10,10,128]{2,1,0:T(8,128)(2,1)}', space=vmem, size = 0xa000, scoped, tag = 'scratch operand']
  %s0 = inlined_call_operand.hbm [shape: bf16[2,4,8,8,128], index: 0, kind: input, shape index: {}]
  %s1 = inlined_call_operand.hbm [shape: bf16[9,128,128], index: 1, kind: input, shape index: {}]
  %s2 = inlined_call_operand.vmem [shape: f32[1,128], index: 2, kind: input, shape index: {}]
  %s3 = inlined_call_operand.vmem [shape: f32[1,128], index: 3, kind: input, shape index: {}]
  %s4 = inlined_call_operand.hbm [shape: bf16[9,128,128], index: 4, kind: input, shape index: {}]
  %s5 = inlined_call_operand.vmem [shape: f32[1,128], index: 5, kind: input, shape index: {}]
  %s6 = inlined_call_operand.vmem [shape: f32[1,128], index: 6, kind: input, shape index: {}]
  %s7 = inlined_call_operand.hbm [shape: f32[2,8,8,128], index: 7, kind: output, shape index: {}]
  %s8 = sld [smem:[#allocation0]]
  $region73: #{tpu_custom_call.1} parent=0
    _
  %s10 = ssub.s32 1, %s8
  %s11 = scalar_select 0, %s10, %s8
  $region1: #{tpu_custom_call.1} parent=0
    #allocation3 [shape = 'u8[131072]{0}', space=vmem, size = 0x20000, scoped, tag = 'input window, operand 0']
    #allocation4 [shape = 's32[2]{0}', space=sflag, size = 0x8, scoped, tag = 'scoped memory for tpu_custom_call.1']
    #allocation5 [shape = 's32[2]{0}', space=sflag, size = 0x8, scoped, tag = 'scoped memory for tpu_custom_call.1']
    #allocation6 [shape = 'u8[294912]{0}', space=vmem, size = 0x48000, scoped, tag = 'input window, operand 1, single buffered']
    #allocation7 [shape = 's32[1]{0}', space=sflag, size = 0x4, scoped, tag = 'scoped memory for tpu_custom_call.1']
    #allocation8 [shape = 'u8[294912]{0}', space=vmem, size = 0x48000, scoped, tag = 'input window, operand 4, single buffered']
    #allocation9 [shape = 'u8[65536]{0}', space=vmem, size = 0x10000, scoped, tag = 'output window, operand 0']
    %12 = vsyncpa [#allocation4], 0
    %s13 = scalar_lea.sflag [#allocation4], 1
    %14 = vsyncpa %s13, 0
    %15 = vsyncpa [#allocation7], 0
    %16 = vsyncpa [#allocation5], 0
    %s17 = scalar_lea.sflag [#allocation5], 1
    %18 = vsyncpa %s17, 0
    loop: start=0, step=1, limit=4
    $region2: #{tpu_custom_call.1} parent=1 // loop_pre_header
      _
    $region3: #{tpu_custom_call.1} parent=1 // loop_header
      %s20 = sphi 0, %s24
      %p21 = scmp.ge.s32.totalorder %s20, 4
      %s30 = sphi 0, %s32
      %s33 = sphi 0, %s30
      %s34 = sphi 0, %s33
      %s50 = sphi 0, %s34
      %s54 = sphi 0, %s54
      %s56 = sphi 0, %s54
      %s57 = sphi 0, %s56
      %s71 = sphi 0, %s57
      %s75 = sphi 0, %s75
      %s77 = sphi 0, %s75
      %s78 = sphi 0, %s77
      %s92 = sphi 0, %s78
      %s96 = sphi 0, %s96
      %s98 = sphi 0, %s96
      %s99 = sphi 0, %s98
      %s113 = sphi 0, %s99
      %s117 = sphi 0, %s117
      %s119 = sphi 0, %s117
      %s120 = sphi 0, %s119
      %s134 = sphi 0, %s120
      %s138 = sphi 0, %s138
      %s140 = sphi 0, %s138
      %s141 = sphi 0, %s140
      %s155 = sphi 0, %s141
      %s159 = sphi 0, %s159
      %s161 = sphi 0, %s159
      %s162 = sphi 0, %s161
      %s176 = sphi 0, %s162
      %s182 = sphi 0, %s184
      %s185 = sphi 0, %s182
      %s186 = sphi 0, %s185
      %s202 = sphi 0, %s186
    $region4: #{tpu_custom_call.1} parent=1 // loop_header_branch
      %23 = sbr.rel (%p21) target = $region8
    $region5: #{tpu_custom_call.1} parent=1 // loop_body
      %s25 = ssub.s32 %s20, 1
      %s26 = ssub.s32 %s20, 2
      %s27 = sadd.s32 %s20, 1
      %s28 = ssub.s32 %s20, %s27
      %p29 = scmp.eq.s32.totalorder %s28, 0
      %s31 = sadd.s32 %s30, 1
      %s32 = scalar_select %p29, %s30, %s31
      %p35 = pneg %p29
      %p36 = scmp.eq.s32.totalorder %s20, 1
      %p37 = por %p35, %p36
      %p38 = scmp.ne.s32.totalorder %s30, %s33
      %p39 = scmp.eq.s32.totalorder %s20, 0
      %p40 = por %p38, %p39
      %p41 = scmp.ne.s32.totalorder %s30, %s33
      %p42 = scmp.eq.s32.totalorder %s25, 1
      %p43 = por %p41, %p42
      %p44 = scmp.ne.s32.totalorder %s33, %s34
      %p45 = scmp.eq.s32.totalorder %s25, 0
      %p46 = por %p44, %p45
      %p47 = scmp.ne.s32.totalorder %s33, %s34
      %p48 = scmp.eq.s32.totalorder %s26, 1
      %p49 = por %p47, %p48
      %p51 = scmp.ne.s32.totalorder %s34, %s50
      %p52 = scmp.eq.s32.totalorder %s26, 0
      %p53 = por %p51, %p52
      %s55 = sadd.s32 %s54, 1
      %p58 = scmp.eq.s32.totalorder %s20, 1
      %p59 = scmp.ne.s32.totalorder %s54, %s56
      %p60 = scmp.eq.s32.totalorder %s20, 0
      %p61 = por %p59, %p60
      %p62 = scmp.ne.s32.totalorder %s54, %s56
      %p63 = scmp.eq.s32.totalorder %s25, 1
      %p64 = por %p62, %p63
      %p65 = scmp.ne.s32.totalorder %s56, %s57
      %p66 = scmp.eq.s32.totalorder %s25, 0
      %p67 = por %p65, %p66
      %p68 = scmp.ne.s32.totalorder %s56, %s57
      %p69 = scmp.eq.s32.totalorder %s26, 1
      %p70 = por %p68, %p69
      %p72 = scmp.ne.s32.totalorder %s57, %s71
      %p73 = scmp.eq.s32.totalorder %s26, 0
      %p74 = por %p72, %p73
      %s76 = sadd.s32 %s75, 1
      %p79 = scmp.eq.s32.totalorder %s20, 1
      %p80 = scmp.ne.s32.totalorder %s75, %s77
      %p81 = scmp.eq.s32.totalorder %s20, 0
      %p82 = por %p80, %p81
      %p83 = scmp.ne.s32.totalorder %s75, %s77
      %p84 = scmp.eq.s32.totalorder %s25, 1
      %p85 = por %p83, %p84
      %p86 = scmp.ne.s32.totalorder %s77, %s78
      %p87 = scmp.eq.s32.totalorder %s25, 0
      %p88 = por %p86, %p87
      %p89 = scmp.ne.s32.totalorder %s77, %s78
      %p90 = scmp.eq.s32.totalorder %s26, 1
      %p91 = por %p89, %p90
      %p93 = scmp.ne.s32.totalorder %s78, %s92
      %p94 = scmp.eq.s32.totalorder %s26, 0
      %p95 = por %p93, %p94
      %s97 = sadd.s32 %s96, 1
      %p100 = scmp.eq.s32.totalorder %s20, 1
      %p101 = scmp.ne.s32.totalorder %s96, %s98
      %p102 = scmp.eq.s32.totalorder %s20, 0
      %p103 = por %p101, %p102
      %p104 = scmp.ne.s32.totalorder %s96, %s98
      %p105 = scmp.eq.s32.totalorder %s25, 1
      %p106 = por %p104, %p105
      %p107 = scmp.ne.s32.totalorder %s98, %s99
      %p108 = scmp.eq.s32.totalorder %s25, 0
      %p109 = por %p107, %p108
      %p110 = scmp.ne.s32.totalorder %s98, %s99
      %p111 = scmp.eq.s32.totalorder %s26, 1
      %p112 = por %p110, %p111
      %p114 = scmp.ne.s32.totalorder %s99, %s113
      %p115 = scmp.eq.s32.totalorder %s26, 0
      %p116 = por %p114, %p115
      %s118 = sadd.s32 %s117, 1
      %p121 = scmp.eq.s32.totalorder %s20, 1
      %p122 = scmp.ne.s32.totalorder %s117, %s119
      %p123 = scmp.eq.s32.totalorder %s20, 0
      %p124 = por %p122, %p123
      %p125 = scmp.ne.s32.totalorder %s117, %s119
      %p126 = scmp.eq.s32.totalorder %s25, 1
      %p127 = por %p125, %p126
      %p128 = scmp.ne.s32.totalorder %s119, %s120
      %p129 = scmp.eq.s32.totalorder %s25, 0
      %p130 = por %p128, %p129
      %p131 = scmp.ne.s32.totalorder %s119, %s120
      %p132 = scmp.eq.s32.totalorder %s26, 1
      %p133 = por %p131, %p132
      %p135 = scmp.ne.s32.totalorder %s120, %s134
      %p136 = scmp.eq.s32.totalorder %s26, 0
      %p137 = por %p135, %p136
      %s139 = sadd.s32 %s138, 1
      %p142 = scmp.eq.s32.totalorder %s20, 1
      %p143 = scmp.ne.s32.totalorder %s138, %s140
      %p144 = scmp.eq.s32.totalorder %s20, 0
      %p145 = por %p143, %p144
      %p146 = scmp.ne.s32.totalorder %s138, %s140
      %p147 = scmp.eq.s32.totalorder %s25, 1
      %p148 = por %p146, %p147
      %p149 = scmp.ne.s32.totalorder %s140, %s141
      %p150 = scmp.eq.s32.totalorder %s25, 0
      %p151 = por %p149, %p150
      %p152 = scmp.ne.s32.totalorder %s140, %s141
      %p153 = scmp.eq.s32.totalorder %s26, 1
      %p154 = por %p152, %p153
      %p156 = scmp.ne.s32.totalorder %s141, %s155
      %p157 = scmp.eq.s32.totalorder %s26, 0
      %p158 = por %p156, %p157
      %s160 = sadd.s32 %s159, 1
      %p163 = scmp.eq.s32.totalorder %s20, 1
      %p164 = scmp.ne.s32.totalorder %s159, %s161
      %p165 = scmp.eq.s32.totalorder %s20, 0
      %p166 = por %p164, %p165
      %p167 = scmp.ne.s32.totalorder %s159, %s161
      %p168 = scmp.eq.s32.totalorder %s25, 1
      %p169 = por %p167, %p168
      %p170 = scmp.ne.s32.totalorder %s161, %s162
      %p171 = scmp.eq.s32.totalorder %s25, 0
      %p172 = por %p170, %p171
      %p173 = scmp.ne.s32.totalorder %s161, %s162
      %p174 = scmp.eq.s32.totalorder %s26, 1
      %p175 = por %p173, %p174
      %p177 = scmp.ne.s32.totalorder %s162, %s176
      %p178 = scmp.eq.s32.totalorder %s26, 0
      %p179 = por %p177, %p178
      %s180 = ssub.s32 %s20, %s27
      %p181 = scmp.eq.s32.totalorder %s180, 0
      %s183 = sadd.s32 %s182, 1
      %s184 = scalar_select %p181, %s182, %s183
      %p187 = pneg %p181
      %p188 = scmp.eq.s32.totalorder %s20, 1
      %p189 = por %p187, %p188
      %p190 = scmp.ne.s32.totalorder %s182, %s185
      %p191 = scmp.eq.s32.totalorder %s20, 0
      %p192 = por %p190, %p191
      %p193 = scmp.ne.s32.totalorder %s182, %s185
      %p194 = scmp.eq.s32.totalorder %s25, 1
      %p195 = por %p193, %p194
      %p196 = scmp.ne.s32.totalorder %s185, %s186
      %p197 = scmp.eq.s32.totalorder %s25, 0
      %p198 = por %p196, %p197
      %p199 = scmp.ne.s32.totalorder %s185, %s186
      %p200 = scmp.eq.s32.totalorder %s26, 1
      %p201 = por %p199, %p200
      %p203 = scmp.ne.s32.totalorder %s186, %s202
      %p204 = scmp.eq.s32.totalorder %s26, 0
      %p205 = por %p203, %p204
      %p206 = scmp.le.s32.totalorder 1, %s20
      %p207 = scmp.lt.s32.totalorder %s20, 3
      %p208 = pnand %p206, %p207
      %p209 = pneg %p208
      // Predicated region
      $region9: #{tpu_custom_call.1} parent=5 // pred_check
        _
      $region10: #{tpu_custom_call.1} parent=5 // pred_check_branch
        %211 = sbr.rel (%p208) target = $region12
      $region11: #{tpu_custom_call.1} parent=5 // pred_region
        %s212 = ssub.s32 %s20, 1
        // Predicated region
        $region13: #{tpu_custom_call.1} parent=11 // pred_check
          %p213 = pneg %p67
        $region14: #{tpu_custom_call.1} parent=11 // pred_check_branch
          %215 = sbr.rel (%p213) target = $region16
        $region15: #{tpu_custom_call.1} parent=11 // pred_region
          %s217 = ssub.s32 9216, 9216
          %218 = vsyncadd [#allocation7], %s217
          %s219 = sshll.u32 [#allocation6], 4
          %s220 = int_to_ptr.vmem [resolvable:$true] %s219
          %225 = dma.hbm_to_vmem [thread:$0]  %s1, 9216, %s220, [#allocation7], 64, 64, 4
        $region16: #{tpu_custom_call.1} parent=11 // pred_fallthru
          _
        // Predicated region
        $region17: #{tpu_custom_call.1} parent=11 // pred_check
          %p226 = pneg %p88
        $region18: #{tpu_custom_call.1} parent=11 // pred_check_branch
          %228 = sbr.rel (%p226) target = $region20
        $region19: #{tpu_custom_call.1} parent=11 // pred_region
          _
        $region20: #{tpu_custom_call.1} parent=11 // pred_fallthru
          _
        // Predicated region
        $region21: #{tpu_custom_call.1} parent=11 // pred_check
          %p229 = pneg %p109
        $region22: #{tpu_custom_call.1} parent=11 // pred_check_branch
          %231 = sbr.rel (%p229) target = $region24
        $region23: #{tpu_custom_call.1} parent=11 // pred_region
          _
        $region24: #{tpu_custom_call.1} parent=11 // pred_fallthru
          _
        // Predicated region
        $region25: #{tpu_custom_call.1} parent=11 // pred_check
          %p232 = pneg %p130
        $region26: #{tpu_custom_call.1} parent=11 // pred_check_branch
          %234 = sbr.rel (%p232) target = $region28
        $region27: #{tpu_custom_call.1} parent=11 // pred_region
          %s236 = ssub.s32 9216, 9216
          %237 = vsyncadd [#allocation7], %s236
          %s238 = sshll.u32 [#allocation8], 4
          %s239 = int_to_ptr.vmem [resolvable:$true] %s238
          %244 = dma.hbm_to_vmem [thread:$0]  %s4, 9216, %s239, [#allocation7], 64, 64, 4
        $region28: #{tpu_custom_call.1} parent=11 // pred_fallthru
          _
        // Predicated region
        $region29: #{tpu_custom_call.1} parent=11 // pred_check
          %p245 = pneg %p151
        $region30: #{tpu_custom_call.1} parent=11 // pred_check_branch
          %247 = sbr.rel (%p245) target = $region32
        $region31: #{tpu_custom_call.1} parent=11 // pred_region
          _
        $region32: #{tpu_custom_call.1} parent=11 // pred_fallthru
          _
        // Predicated region
        $region33: #{tpu_custom_call.1} parent=11 // pred_check
          %p248 = pneg %p172
        $region34: #{tpu_custom_call.1} parent=11 // pred_check_branch
          %250 = sbr.rel (%p248) target = $region36
        $region35: #{tpu_custom_call.1} parent=11 // pred_region
          _
        $region36: #{tpu_custom_call.1} parent=11 // pred_fallthru
          _
      $region12: #{tpu_custom_call.1} parent=5 // pred_fallthru
        _
      %p251 = scmp.lt.s32.totalorder %s20, 2
      // Predicated region
      $region37: #{tpu_custom_call.1} parent=5 // pred_check
        %p252 = pneg %p251
      $region38: #{tpu_custom_call.1} parent=5 // pred_check_branch
        %254 = sbr.rel (%p252) target = $region40
      $region39: #{tpu_custom_call.1} parent=5 // pred_region
        // Predicated region
        $region41: #{tpu_custom_call.1} parent=39 // pred_check
          %p255 = pneg %p40
        $region42: #{tpu_custom_call.1} parent=39 // pred_check_branch
          %257 = sbr.rel (%p255) target = $region44
        $region43: #{tpu_custom_call.1} parent=39 // pred_region
          %s258 = sand.u32 %s30, 1
          %s259 = scalar_lea.sflag [#allocation4], %s258
          %s260 = sand.u32 %s30, 1
          %s261 = smul.addr %s260, 128
          %s262 = scalar_lea.vmem [#allocation3], %s261
          %s264 = ssub.s32 2048, 2048
          %265 = vsyncadd %s259, %s264
          %s266 = smul.addr %s20, 32
          %s267 = smul.addr %s266, 64
          %s268 = scalar_lea.hbm %s0, %s267
          %s269 = sshll.u32 %s262, 4
          %s270 = int_to_ptr.vmem [resolvable:$true] %s269
          %275 = dma.hbm_to_vmem [thread:$0]  %s268, 2048, %s270, %s259, 64, 64, 4
        $region44: #{tpu_custom_call.1} parent=39 // pred_fallthru
          _
      $region40: #{tpu_custom_call.1} parent=5 // pred_fallthru
        _
      %p276 = scmp.le.s32.totalorder 1, %s20
      %p277 = scmp.lt.s32.totalorder %s20, 3
      %p278 = pnand %p276, %p277
      %p279 = pneg %p278
      // Predicated region
      $region45: #{tpu_custom_call.1} parent=5 // pred_check
        _
      $region46: #{tpu_custom_call.1} parent=5 // pred_check_branch
        %281 = sbr.rel (%p278) target = $region48
      $region47: #{tpu_custom_call.1} parent=5 // pred_region
        %s282 = ssub.s32 %s20, 1
        %s283 = sand.u32 %s33, 1
        %s284 = scalar_lea.sflag [#allocation4], %s283
        %s285 = sand.u32 %s33, 1
        %s286 = smul.addr %s285, 128
        %s287 = scalar_lea.vmem [#allocation3], %s286
        // Predicated region
        $region49: #{tpu_custom_call.1} parent=47 // pred_check
          %p288 = pneg %p46
        $region50: #{tpu_custom_call.1} parent=47 // pred_check_branch
          %290 = sbr.rel (%p288) target = $region52
        $region51: #{tpu_custom_call.1} parent=47 // pred_region
          %291 = dma.done %s284, 2048
        $region52: #{tpu_custom_call.1} parent=47 // pred_fallthru
          _
        // Predicated region
        $region53: #{tpu_custom_call.1} parent=47 // pred_check
          %p292 = pneg %p67
        $region54: #{tpu_custom_call.1} parent=47 // pred_check_branch
          %294 = sbr.rel (%p292) target = $region56
        $region55: #{tpu_custom_call.1} parent=47 // pred_region
          %295 = dma.done [#allocation7], 9216
        $region56: #{tpu_custom_call.1} parent=47 // pred_fallthru
          _
        // Predicated region
        $region57: #{tpu_custom_call.1} parent=47 // pred_check
          %p296 = pneg %p130
        $region58: #{tpu_custom_call.1} parent=47 // pred_check_branch
          %298 = sbr.rel (%p296) target = $region60
        $region59: #{tpu_custom_call.1} parent=47 // pred_region
          %299 = dma.done [#allocation7], 9216
        $region60: #{tpu_custom_call.1} parent=47 // pred_fallthru
          _
        %s300 = sand.u32 %s33, 1
        %s301 = scalar_lea.sflag [#allocation4], %s300
        %s302 = sand.u32 %s33, 1
        %s303 = smul.addr %s302, 128
        %s304 = scalar_lea.vmem [#allocation3], %s303
        %p305 = pneg %p46
        %p306 = pneg %p43
        %p307 = pneg %p67
        %p308 = pneg %p64
        %p309 = pneg %p88
        %p310 = pneg %p85
        %p311 = pneg %p109
        %p312 = pneg %p106
        %p313 = pneg %p130
        %p314 = pneg %p127
        %p315 = pneg %p151
        %p316 = pneg %p148
        %p317 = pneg %p172
        %p318 = pneg %p169
        %p319 = pneg %p198
        %p320 = pneg %p195
        %s321 = sand.u32 %s185, 1
        %s322 = scalar_lea.sflag [#allocation5], %s321
        %s323 = sand.u32 %s185, 1
        %s324 = smul.addr %s323, 64
        %s325 = scalar_lea.vmem [#allocation9], %s324
        %327 = vst [vmem:[#allocation2] sm:$0xf] 0
        %328 = vst [vmem:[#allocation2 + $0x4] sm:$0x1] 0
        %s329 = scalar_lea.vmem [#allocation2], 72
        %330 = vst [vmem:[%s329] sm:$0xf] 0
        %331 = vst [vmem:[%s329 + $0x4] sm:$0x1] 0
        %s332 = scalar_lea.vmem [#allocation2], 8
        %vm333 = vcmask 1040384
        %vm334 = vsmask.f32 256
        %vm335 = vmand %vm333, %vm334
        %v336 = vld [vmem:[%s332] sm:$0x1]
        %v337 = vsel %vm335, 0, %v336
        %338 = vst [vmem:[%s332] sm:$0x1] %v337
        %v339 = vld [vmem:[%s332 + $0x8] sm:$0x1]
        %v340 = vsel %vm335, 0, %v339
        %341 = vst [vmem:[%s332 + $0x8] sm:$0x1] %v340
        %v342 = vld [vmem:[%s332 + $0x10] sm:$0x1]
        %v343 = vsel %vm335, 0, %v342
        %344 = vst [vmem:[%s332 + $0x10] sm:$0x1] %v343
        %v345 = vld [vmem:[%s332 + $0x18] sm:$0x1]
        %v346 = vsel %vm335, 0, %v345
        %347 = vst [vmem:[%s332 + $0x18] sm:$0x1] %v346
        %v348 = vld [vmem:[%s332 + $0x20] sm:$0x1]
        %v349 = vsel %vm335, 0, %v348
        %350 = vst [vmem:[%s332 + $0x20] sm:$0x1] %v349
        %v351 = vld [vmem:[%s332 + $0x28] sm:$0x1]
        %v352 = vsel %vm335, 0, %v351
        %353 = vst [vmem:[%s332 + $0x28] sm:$0x1] %v352
        %v354 = vld [vmem:[%s332 + $0x30] sm:$0x1]
        %v355 = vsel %vm335, 0, %v354
        %356 = vst [vmem:[%s332 + $0x30] sm:$0x1] %v355
        %v357 = vld [vmem:[%s332 + $0x38] sm:$0x1]
        %v358 = vsel %vm335, 0, %v357
        %359 = vst [vmem:[%s332 + $0x38] sm:$0x1] %v358
        %vm360 = vsmask.f32 7938
        %vm361 = vmand %vm333, %vm360
        %v362 = vld [vmem:[%s332 + $0x4] sm:$0x1]
        %v363 = vsel %vm361, 0, %v362
        %364 = vst [vmem:[%s332 + $0x4] sm:$0x1] %v363
        %v365 = vld [vmem:[%s332 + $0xc] sm:$0x1]
        %v366 = vsel %vm361, 0, %v365
        %367 = vst [vmem:[%s332 + $0xc] sm:$0x1] %v366
        %v368 = vld [vmem:[%s332 + $0x14] sm:$0x1]
        %v369 = vsel %vm361, 0, %v368
        %370 = vst [vmem:[%s332 + $0x14] sm:$0x1] %v369
        %v371 = vld [vmem:[%s332 + $0x1c] sm:$0x1]
        %v372 = vsel %vm361, 0, %v371
        %373 = vst [vmem:[%s332 + $0x1c] sm:$0x1] %v372
        %v374 = vld [vmem:[%s332 + $0x24] sm:$0x1]
        %v375 = vsel %vm361, 0, %v374
        %376 = vst [vmem:[%s332 + $0x24] sm:$0x1] %v375
        %v377 = vld [vmem:[%s332 + $0x2c] sm:$0x1]
        %v378 = vsel %vm361, 0, %v377
        %379 = vst [vmem:[%s332 + $0x2c] sm:$0x1] %v378
        %v380 = vld [vmem:[%s332 + $0x34] sm:$0x1]
        %v381 = vsel %vm361, 0, %v380
        %382 = vst [vmem:[%s332 + $0x34] sm:$0x1] %v381
        %v383 = vld [vmem:[%s332 + $0x3c] sm:$0x1]
        %v384 = vsel %vm361, 0, %v383
        %385 = vst [vmem:[%s332 + $0x3c] sm:$0x1] %v384
        %v386 = vld [vmem:[%s287] sm:$0xf]
        %v387 = vld [vmem:[%s287 + $0x4] sm:$0xf]
        %v388 = vld [vmem:[%s287 + $0x8] sm:$0xf]
        %v389 = vld [vmem:[%s287 + $0xc] sm:$0xf]
        %v390 = vld [vmem:[%s287 + $0x10] sm:$0xf]
        %v391 = vld [vmem:[%s287 + $0x14] sm:$0xf]
        %v392 = vld [vmem:[%s287 + $0x18] sm:$0xf]
        %v393 = vld [vmem:[%s287 + $0x1c] sm:$0xf]
        %s394 = scalar_lea.vmem %s287, 32 [#allocation3]
        %v395 = vld [vmem:[%s394] sm:$0xf]
        %v396 = vld [vmem:[%s394 + $0x4] sm:$0xf]
        %v397 = vld [vmem:[%s394 + $0x8] sm:$0xf]
        %v398 = vld [vmem:[%s394 + $0xc] sm:$0xf]
        %v399 = vld [vmem:[%s394 + $0x10] sm:$0xf]
        %v400 = vld [vmem:[%s394 + $0x14] sm:$0xf]
        %v401 = vld [vmem:[%s394 + $0x18] sm:$0xf]
        %v402 = vld [vmem:[%s394 + $0x1c] sm:$0xf]
        %v403 = vmax.bf16 %v386, %v395
        %v404 = vmax.bf16 %v387, %v396
        %v405 = vmax.bf16 %v388, %v397
        %v406 = vmax.bf16 %v389, %v398
        %v407 = vmax.bf16 %v390, %v399
        %v408 = vmax.bf16 %v391, %v400
        %v409 = vmax.bf16 %v392, %v401
        %v410 = vmax.bf16 %v393, %v402
        %s411 = scalar_lea.vmem %s287, 64 [#allocation3]
        %v412 = vld [vmem:[%s411] sm:$0xf]
        %v413 = vld [vmem:[%s411 + $0x4] sm:$0xf]
        %v414 = vld [vmem:[%s411 + $0x8] sm:$0xf]
        %v415 = vld [vmem:[%s411 + $0xc] sm:$0xf]
        %v416 = vld [vmem:[%s411 + $0x10] sm:$0xf]
        %v417 = vld [vmem:[%s411 + $0x14] sm:$0xf]
        %v418 = vld [vmem:[%s411 + $0x18] sm:$0xf]
        %v419 = vld [vmem:[%s411 + $0x1c] sm:$0xf]
        %s420 = scalar_lea.vmem %s287, 96 [#allocation3]
        %v421 = vld [vmem:[%s420] sm:$0xf]
        %v422 = vld [vmem:[%s420 + $0x4] sm:$0xf]
        %v423 = vld [vmem:[%s420 + $0x8] sm:$0xf]
        %v424 = vld [vmem:[%s420 + $0xc] sm:$0xf]
        %v425 = vld [vmem:[%s420 + $0x10] sm:$0xf]
        %v426 = vld [vmem:[%s420 + $0x14] sm:$0xf]
        %v427 = vld [vmem:[%s420 + $0x18] sm:$0xf]
        %v428 = vld [vmem:[%s420 + $0x1c] sm:$0xf]
        %v429 = vmax.bf16 %v412, %v421
        %v430 = vmax.bf16 %v413, %v422
        %v431 = vmax.bf16 %v414, %v423
        %v432 = vmax.bf16 %v415, %v424
        %v433 = vmax.bf16 %v416, %v425
        %v434 = vmax.bf16 %v417, %v426
        %v435 = vmax.bf16 %v418, %v427
        %v436 = vmax.bf16 %v419, %v428
        %v437 = vmax.bf16 %v403, %v429
        %v438 = vmax.bf16 %v404, %v430
        %v439 = vmax.bf16 %v405, %v431
        %v440 = vmax.bf16 %v406, %v432
        %v441 = vmax.bf16 %v407, %v433
        %v442 = vmax.bf16 %v408, %v434
        %v443 = vmax.bf16 %v409, %v435
        %v444 = vmax.bf16 %v410, %v436
        %v446 = vshrl.u32 %v437, 16
        %v448 = vrot.slane %v446, 7
        %v449 = vshll.u32 %v437, 16
        %v451 = vor.u32 %v448, %v449
        %v452 = vrot.slane %v448, 4
        %v454 = vshrl.u32 %v438, 16
        %v456 = vrot.slane %v454, 7
        %v457 = vshll.u32 %v438, 16
        %v459 = vor.u32 %v456, %v457
        %v460 = vrot.slane %v456, 4
        %v462 = vshrl.u32 %v439, 16
        %v464 = vrot.slane %v462, 7
        %v465 = vshll.u32 %v439, 16
        %v467 = vor.u32 %v464, %v465
        %v468 = vrot.slane %v464, 4
        %v470 = vshrl.u32 %v440, 16
        %v472 = vrot.slane %v470, 7
        %v473 = vshll.u32 %v440, 16
        %v475 = vor.u32 %v472, %v473
        %v476 = vrot.slane %v472, 4
        %v478 = vshrl.u32 %v441, 16
        %v480 = vrot.slane %v478, 7
        %v481 = vshll.u32 %v441, 16
        %v483 = vor.u32 %v480, %v481
        %v484 = vrot.slane %v480, 4
        %v486 = vshrl.u32 %v442, 16
        %v488 = vrot.slane %v486, 7
        %v489 = vshll.u32 %v442, 16
        %v491 = vor.u32 %v488, %v489
        %v492 = vrot.slane %v488, 4
        %v494 = vshrl.u32 %v443, 16
        %v496 = vrot.slane %v494, 7
        %v497 = vshll.u32 %v443, 16
        %v499 = vor.u32 %v496, %v497
        %v500 = vrot.slane %v496, 4
        %v502 = vshrl.u32 %v444, 16
        %v504 = vrot.slane %v502, 7
        %v505 = vshll.u32 %v444, 16
        %v507 = vor.u32 %v504, %v505
        %v508 = vrot.slane %v504, 4
        %vm525 = vcmask 1043456
        %vm526 = vmand %vm525, %vm360
        %v527 = vld [vmem:[%s332] sm:$0xf]
        %v528 = vsel %vm526, %v451, %v527
        %529 = vst [vmem:[%s332] sm:$0xf] %v528
        %v530 = vld [vmem:[%s332 + $0x4] sm:$0x1]
        %v531 = vsel %vm335, %v452, %v530
        %532 = vst [vmem:[%s332 + $0x4] sm:$0x1] %v531
        %v533 = vld [vmem:[%s332 + $0x8] sm:$0xf]
        %v534 = vsel %vm526, %v459, %v533
        %535 = vst [vmem:[%s332 + $0x8] sm:$0xf] %v534
        %v536 = vld [vmem:[%s332 + $0xc] sm:$0x1]
        %v537 = vsel %vm335, %v460, %v536
        %538 = vst [vmem:[%s332 + $0xc] sm:$0x1] %v537
        %v539 = vld [vmem:[%s332 + $0x10] sm:$0xf]
        %v540 = vsel %vm526, %v467, %v539
        %541 = vst [vmem:[%s332 + $0x10] sm:$0xf] %v540
        %v542 = vld [vmem:[%s332 + $0x14] sm:$0x1]
        %v543 = vsel %vm335, %v468, %v542
        %544 = vst [vmem:[%s332 + $0x14] sm:$0x1] %v543
        %v545 = vld [vmem:[%s332 + $0x18] sm:$0xf]
        %v546 = vsel %vm526, %v475, %v545
        %547 = vst [vmem:[%s332 + $0x18] sm:$0xf] %v546
        %v548 = vld [vmem:[%s332 + $0x1c] sm:$0x1]
        %v549 = vsel %vm335, %v476, %v548
        %550 = vst [vmem:[%s332 + $0x1c] sm:$0x1] %v549
        %v551 = vld [vmem:[%s332 + $0x20] sm:$0xf]
        %v552 = vsel %vm526, %v483, %v551
        %553 = vst [vmem:[%s332 + $0x20] sm:$0xf] %v552
        %v554 = vld [vmem:[%s332 + $0x24] sm:$0x1]
        %v555 = vsel %vm335, %v484, %v554
        %556 = vst [vmem:[%s332 + $0x24] sm:$0x1] %v555
        %v557 = vld [vmem:[%s332 + $0x28] sm:$0xf]
        %v558 = vsel %vm526, %v491, %v557
        %559 = vst [vmem:[%s332 + $0x28] sm:$0xf] %v558
        %v560 = vld [vmem:[%s332 + $0x2c] sm:$0x1]
        %v561 = vsel %vm335, %v492, %v560
        %562 = vst [vmem:[%s332 + $0x2c] sm:$0x1] %v561
        %v563 = vld [vmem:[%s332 + $0x30] sm:$0xf]
        %v564 = vsel %vm526, %v499, %v563
        %565 = vst [vmem:[%s332 + $0x30] sm:$0xf] %v564
        %v566 = vld [vmem:[%s332 + $0x34] sm:$0x1]
        %v567 = vsel %vm335, %v500, %v566
        %568 = vst [vmem:[%s332 + $0x34] sm:$0x1] %v567
        %v569 = vld [vmem:[%s332 + $0x38] sm:$0xf]
        %v570 = vsel %vm526, %v507, %v569
        %571 = vst [vmem:[%s332 + $0x38] sm:$0xf] %v570
        %v572 = vld [vmem:[%s332 + $0x3c] sm:$0x1]
        %v573 = vsel %vm335, %v508, %v572
        %574 = vst [vmem:[%s332 + $0x3c] sm:$0x1] %v573
        %v575 = vld [vmem:[#allocation2] sm:$0xf]
        %v576 = vld [vmem:[#allocation2 + $0x8] sm:$0xf]
        %v577 = vld [vmem:[#allocation2 + $0x10] sm:$0xf]
        %v578 = vld [vmem:[#allocation2 + $0x18] sm:$0xf]
        %v579 = vld [vmem:[#allocation2 + $0x20] sm:$0xf]
        %v580 = vld [vmem:[#allocation2 + $0x28] sm:$0xf]
        %v581 = vld [vmem:[#allocation2 + $0x30] sm:$0xf]
        %v582 = vld [vmem:[#allocation2 + $0x38] sm:$0xf]
        %v583 = vld [vmem:[#allocation6] sm:$0xf]
        %v584 = vld [vmem:[#allocation6 + $0x4] sm:$0xf]
        %v585 = vld [vmem:[#allocation6 + $0x8] sm:$0xf]
        %v586 = vld [vmem:[#allocation6 + $0xc] sm:$0xf]
        %v587 = vld [vmem:[#allocation6 + $0x10] sm:$0xf]
        %v588 = vld [vmem:[#allocation6 + $0x14] sm:$0xf]
        %v589 = vld [vmem:[#allocation6 + $0x18] sm:$0xf]
        %v590 = vld [vmem:[#allocation6 + $0x1c] sm:$0xf]
        %v591 = vld [vmem:[#allocation6 + $0x20] sm:$0xf]
        %v592 = vld [vmem:[#allocation6 + $0x24] sm:$0xf]
        %v593 = vld [vmem:[#allocation6 + $0x28] sm:$0xf]
        %v594 = vld [vmem:[#allocation6 + $0x2c] sm:$0xf]
        %v595 = vld [vmem:[#allocation6 + $0x30] sm:$0xf]
        %v596 = vld [vmem:[#allocation6 + $0x34] sm:$0xf]
        %v597 = vld [vmem:[#allocation6 + $0x38] sm:$0xf]
        %v598 = vld [vmem:[#allocation6 + $0x3c] sm:$0xf]
        %v599 = vld [vmem:[#allocation2 + $0x4] sm:$0x1]
        %v600 = vld [vmem:[#allocation2 + $0xc] sm:$0x1]
        %v601 = vld [vmem:[#allocation2 + $0x14] sm:$0x1]
        %v602 = vld [vmem:[#allocation2 + $0x1c] sm:$0x1]
        %v603 = vld [vmem:[#allocation2 + $0x24] sm:$0x1]
        %v604 = vld [vmem:[#allocation2 + $0x2c] sm:$0x1]
        %v605 = vld [vmem:[#allocation2 + $0x34] sm:$0x1]
        %v606 = vld [vmem:[#allocation2 + $0x3c] sm:$0x1]
        %vm607 = vsmask.f32 3328
        %vm608 = vsmask.f32 7440
        %vm609 = vmor %vm607, %vm608
        %v611 = vshrl.u32 %v575, 16
        %v613 = vrot.slane %v611, 4
        %v614 = vshll.u32 %v575, 16
        %v616 = vrot.slane %v614, 5
        %v617 = vor.u32 %v613, %v616
        %v618 = vrot.slane %v617, 4
        %v620 = vshll.u32 %v599, 16
        %v622 = vrot.slane %v620, 5
        %v623 = vsel %vm609, %v618, %v622
        %v625 = vshrl.u32 %v576, 16
        %v627 = vrot.slane %v625, 4
        %v628 = vshll.u32 %v576, 16
        %v630 = vrot.slane %v628, 5
        %v631 = vor.u32 %v627, %v630
        %v632 = vrot.slane %v631, 4
        %v634 = vshll.u32 %v600, 16
        %v636 = vrot.slane %v634, 5
        %v637 = vsel %vm609, %v632, %v636
        %v639 = vshrl.u32 %v577, 16
        %v641 = vrot.slane %v639, 4
        %v642 = vshll.u32 %v577, 16
        %v644 = vrot.slane %v642, 5
        %v645 = vor.u32 %v641, %v644
        %v646 = vrot.slane %v645, 4
        %v648 = vshll.u32 %v601, 16
        %v650 = vrot.slane %v648, 5
        %v651 = vsel %vm609, %v646, %v650
        %v653 = vshrl.u32 %v578, 16
        %v655 = vrot.slane %v653, 4
        %v656 = vshll.u32 %v578, 16
        %v658 = vrot.slane %v656, 5
        %v659 = vor.u32 %v655, %v658
        %v660 = vrot.slane %v659, 4
        %v662 = vshll.u32 %v602, 16
        %v664 = vrot.slane %v662, 5
        %v665 = vsel %vm609, %v660, %v664
        %v667 = vshrl.u32 %v579, 16
        %v669 = vrot.slane %v667, 4
        %v670 = vshll.u32 %v579, 16
        %v672 = vrot.slane %v670, 5
        %v673 = vor.u32 %v669, %v672
        %v674 = vrot.slane %v673, 4
        %v676 = vshll.u32 %v603, 16
        %v678 = vrot.slane %v676, 5
        %v679 = vsel %vm609, %v674, %v678
        %v681 = vshrl.u32 %v580, 16
        %v683 = vrot.slane %v681, 4
        %v684 = vshll.u32 %v580, 16
        %v686 = vrot.slane %v684, 5
        %v687 = vor.u32 %v683, %v686
        %v688 = vrot.slane %v687, 4
        %v690 = vshll.u32 %v604, 16
        %v692 = vrot.slane %v690, 5
        %v693 = vsel %vm609, %v688, %v692
        %v695 = vshrl.u32 %v581, 16
        %v697 = vrot.slane %v695, 4
        %v698 = vshll.u32 %v581, 16
        %v700 = vrot.slane %v698, 5
        %v701 = vor.u32 %v697, %v700
        %v702 = vrot.slane %v701, 4
        %v704 = vshll.u32 %v605, 16
        %v706 = vrot.slane %v704, 5
        %v707 = vsel %vm609, %v702, %v706
        %v709 = vshrl.u32 %v582, 16
        %v711 = vrot.slane %v709, 4
        %v712 = vshll.u32 %v582, 16
        %v714 = vrot.slane %v712, 5
        %v715 = vor.u32 %v711, %v714
        %v716 = vrot.slane %v715, 4
        %v718 = vshll.u32 %v606, 16
        %v720 = vrot.slane %v718, 5
        %v721 = vsel %vm609, %v716, %v720
        %s722 = scalar_lea.vmem [#allocation6], 64
        %v723 = vld [vmem:[%s722] sm:$0xf]
        %v724 = vld [vmem:[%s722 + $0x4] sm:$0xf]
        %v725 = vld [vmem:[%s722 + $0x8] sm:$0xf]
        %v726 = vld [vmem:[%s722 + $0xc] sm:$0xf]
        %v727 = vld [vmem:[%s722 + $0x10] sm:$0xf]
        %v728 = vld [vmem:[%s722 + $0x14] sm:$0xf]
        %v729 = vld [vmem:[%s722 + $0x18] sm:$0xf]
        %v730 = vld [vmem:[%s722 + $0x1c] sm:$0xf]
        %v731 = vld [vmem:[%s722 + $0x20] sm:$0xf]
        %v732 = vld [vmem:[%s722 + $0x24] sm:$0xf]
        %v733 = vld [vmem:[%s722 + $0x28] sm:$0xf]
        %v734 = vld [vmem:[%s722 + $0x2c] sm:$0xf]
        %v735 = vld [vmem:[%s722 + $0x30] sm:$0xf]
        %v736 = vld [vmem:[%s722 + $0x34] sm:$0xf]
        %v737 = vld [vmem:[%s722 + $0x38] sm:$0xf]
        %v738 = vld [vmem:[%s722 + $0x3c] sm:$0xf]
        %v739 = vunpack.c.l.b16 %v623
        %v740 = vunpack.c.l.b16 %v637
        %v741 = vunpack.c.l.b16 %v651
        %v742 = vunpack.c.l.b16 %v665
        %v743 = vunpack.c.l.b16 %v679
        %v744 = vunpack.c.l.b16 %v693
        %v745 = vunpack.c.l.b16 %v707
        %v746 = vunpack.c.l.b16 %v721
        %v747 = vpack.c.b16 %v740, %v739
        %v748 = vpack.c.b16 %v742, %v741
        %v749 = vpack.c.b16 %v744, %v743
        %v750 = vpack.c.b16 %v746, %v745
        %v771 = vunpack.c.l.b16 %v723
        %v772 = vunpack.c.l.b16 %v724
        %v773 = vunpack.c.l.b16 %v725
        %v774 = vunpack.c.l.b16 %v726
        %v775 = vunpack.c.l.b16 %v727
        %v776 = vunpack.c.l.b16 %v728
        %v777 = vunpack.c.l.b16 %v729
        %v778 = vunpack.c.l.b16 %v730
        %v779 = vunpack.c.l.b16 %v731
        %v780 = vunpack.c.l.b16 %v732
        %v781 = vunpack.c.l.b16 %v733
        %v782 = vunpack.c.l.b16 %v734
        %v783 = vunpack.c.l.b16 %v735
        %v784 = vunpack.c.l.b16 %v736
        %v785 = vunpack.c.l.b16 %v737
        %v786 = vunpack.c.l.b16 %v738
        %v787 = vpack.c.b16 %v772, %v771
        %v788 = vpack.c.b16 %v774, %v773
        %v789 = vpack.c.b16 %v776, %v775
        %v790 = vpack.c.b16 %v778, %v777
        %v791 = vpack.c.b16 %v780, %v779
        %v792 = vpack.c.b16 %v782, %v781
        %v793 = vpack.c.b16 %v784, %v783
        %v794 = vpack.c.b16 %v786, %v785
        %803 = vmatprep.subr.bf16.mxu0 0
        %804 = vmatpush1.bf16.msra.mxu0 %v787
        %805 = vmatprep.subr.bf16.mxu0 0
        %806 = vmatpush1.bf16.msra.mxu0 %v788
        %807 = vmatprep.subr.bf16.mxu0 0
        %808 = vmatpush1.bf16.msra.mxu0 %v789
        %809 = vmatprep.subr.bf16.mxu0 0
        %810 = vmatpush1.bf16.msra.mxu0 %v790
        %811 = vmatprep.subr.bf16.mxu0 0
        %812 = vmatpush1.bf16.msra.mxu0 %v791
        %813 = vmatprep.subr.bf16.mxu0 0
        %814 = vmatpush1.bf16.msra.mxu0 %v792
        %815 = vmatprep.subr.bf16.mxu0 0
        %816 = vmatpush1.bf16.msra.mxu0 %v793
        %817 = vmatprep.subr.bf16.mxu0 0
        %818 = vmatpush1.bf16.msra.mxu0 %v794
        %819 = vmatprep.subr.bf16.mxu0 0
        %820 = vmatpush1.bf16.msra.mxu0 0
        %821 = vmatprep.subr.bf16.mxu0 0
        %822 = vmatpush1.bf16.msra.mxu0 0
        %823 = vmatprep.subr.bf16.mxu0 0
        %824 = vmatpush1.bf16.msra.mxu0 0
        %825 = vmatprep.subr.bf16.mxu0 0
        %826 = vmatpush1.bf16.msra.mxu0 0
        %827 = vmatprep.subr.bf16.mxu0 0
        %828 = vmatpush1.bf16.msra.mxu0 0
        %829 = vmatprep.subr.bf16.mxu0 0
        %830 = vmatpush1.bf16.msra.mxu0 0
        %831 = vmatprep.subr.bf16.mxu0 0
        %832 = vmatpush1.bf16.msra.mxu0 0
        %833 = vmatprep.subr.bf16.mxu0 0
        %834 = vmatpush1.bf16.msra.mxu0 0
        %835 = vmatprep.mubr.bf16.mxu0 0
        %836 = vmatmul.mubr.bf16.gmra.mrb[0].mxu0 %v747
        %v837 = vpop.f32.mrb[0].mxu0
        %v838 = vadd.f32 0.0, %v837
        %v839 = vpop.f32.mrb[0].mxu0
        %v840 = vpop.f32.mrb[0].mxu0
        %v841 = vadd.f32 0.0, %v840
        %v842 = vpop.f32.mrb[0].mxu0
        %843 = vmatprep.mubr.bf16.mxu0 0
        %844 = vmatmul.mubr.bf16.gmra.mrb[0].mxu0 %v748
        %v845 = vpop.f32.mrb[0].mxu0
        %v846 = vadd.f32 0.0, %v845
        %v847 = vpop.f32.mrb[0].mxu0
        %v848 = vpop.f32.mrb[0].mxu0
        %v849 = vadd.f32 0.0, %v848
        %v850 = vpop.f32.mrb[0].mxu0
        %851 = vmatprep.mubr.bf16.mxu0 0
        %852 = vmatmul.mubr.bf16.gmra.mrb[0].mxu0 %v749
        %v853 = vpop.f32.mrb[0].mxu0
        %v854 = vadd.f32 0.0, %v853
        %v855 = vpop.f32.mrb[0].mxu0
        %v856 = vpop.f32.mrb[0].mxu0
        %v857 = vadd.f32 0.0, %v856
        %v858 = vpop.f32.mrb[0].mxu0
        %859 = vmatprep.mubr.bf16.mxu0 0
        %860 = vmatmul.mubr.bf16.gmra.mrb[0].mxu0 %v750
        %v861 = vpop.f32.mrb[0].mxu0
        %v862 = vadd.f32 0.0, %v861
        %v863 = vpop.f32.mrb[0].mxu0
        %v864 = vpop.f32.mrb[0].mxu0
        %v865 = vadd.f32 0.0, %v864
        %v866 = vpop.f32.mrb[0].mxu0
        %867 = vdwg.mxu0
        %v876 = vunpack.c.l.b16 %v575
        %v877 = vunpack.c.l.b16 %v576
        %v878 = vunpack.c.l.b16 %v577
        %v879 = vunpack.c.l.b16 %v578
        %v880 = vunpack.c.l.b16 %v579
        %v881 = vunpack.c.l.b16 %v580
        %v882 = vunpack.c.l.b16 %v581
        %v883 = vunpack.c.l.b16 %v582
        %v884 = vpack.c.b16 %v877, %v876
        %v885 = vpack.c.b16 %v879, %v878
        %v886 = vpack.c.b16 %v881, %v880
        %v887 = vpack.c.b16 %v883, %v882
        %v908 = vunpack.c.l.b16 %v583
        %v909 = vunpack.c.l.b16 %v584
        %v910 = vunpack.c.l.b16 %v585
        %v911 = vunpack.c.l.b16 %v586
        %v912 = vunpack.c.l.b16 %v587
        %v913 = vunpack.c.l.b16 %v588
        %v914 = vunpack.c.l.b16 %v589
        %v915 = vunpack.c.l.b16 %v590
        %v916 = vunpack.c.l.b16 %v591
        %v917 = vunpack.c.l.b16 %v592
        %v918 = vunpack.c.l.b16 %v593
        %v919 = vunpack.c.l.b16 %v594
        %v920 = vunpack.c.l.b16 %v595
        %v921 = vunpack.c.l.b16 %v596
        %v922 = vunpack.c.l.b16 %v597
        %v923 = vunpack.c.l.b16 %v598
        %v924 = vpack.c.b16 %v909, %v908
        %v925 = vpack.c.b16 %v911, %v910
        %v926 = vpack.c.b16 %v913, %v912
        %v927 = vpack.c.b16 %v915, %v914
        %v928 = vpack.c.b16 %v917, %v916
        %v929 = vpack.c.b16 %v919, %v918
        %v930 = vpack.c.b16 %v921, %v920
        %v931 = vpack.c.b16 %v923, %v922
        %940 = vmatprep.subr.bf16.mxu0 0
        %941 = vmatpush1.bf16.msra.mxu0 %v924
        %942 = vmatprep.subr.bf16.mxu0 0
        %943 = vmatpush1.bf16.msra.mxu0 %v925
        %944 = vmatprep.subr.bf16.mxu0 0
        %945 = vmatpush1.bf16.msra.mxu0 %v926
        %946 = vmatprep.subr.bf16.mxu0 0
        %947 = vmatpush1.bf16.msra.mxu0 %v927
        %948 = vmatprep.subr.bf16.mxu0 0
        %949 = vmatpush1.bf16.msra.mxu0 %v928
        %950 = vmatprep.subr.bf16.mxu0 0
        %951 = vmatpush1.bf16.msra.mxu0 %v929
        %952 = vmatprep.subr.bf16.mxu0 0
        %953 = vmatpush1.bf16.msra.mxu0 %v930
        %954 = vmatprep.subr.bf16.mxu0 0
        %955 = vmatpush1.bf16.msra.mxu0 %v931
        %956 = vmatprep.subr.bf16.mxu0 0
        %957 = vmatpush1.bf16.msra.mxu0 0
        %958 = vmatprep.subr.bf16.mxu0 0
        %959 = vmatpush1.bf16.msra.mxu0 0
        %960 = vmatprep.subr.bf16.mxu0 0
        %961 = vmatpush1.bf16.msra.mxu0 0
        %962 = vmatprep.subr.bf16.mxu0 0
        %963 = vmatpush1.bf16.msra.mxu0 0
        %964 = vmatprep.subr.bf16.mxu0 0
        %965 = vmatpush1.bf16.msra.mxu0 0
        %966 = vmatprep.subr.bf16.mxu0 0
        %967 = vmatpush1.bf16.msra.mxu0 0
        %968 = vmatprep.subr.bf16.mxu0 0
        %969 = vmatpush1.bf16.msra.mxu0 0
        %970 = vmatprep.subr.bf16.mxu0 0
        %971 = vmatpush1.bf16.msra.mxu0 0
        %972 = vmatprep.mubr.bf16.mxu0 0
        %973 = vmatmul.mubr.bf16.gmra.mrb[0].mxu0 %v884
        %v974 = vpop.f32.mrb[0].mxu0
        %v975 = vadd.f32 %v838, %v974
        %v976 = vpop.f32.mrb[0].mxu0
        %v977 = vpop.f32.mrb[0].mxu0
        %v978 = vadd.f32 %v841, %v977
        %v979 = vpop.f32.mrb[0].mxu0
        %980 = vmatprep.mubr.bf16.mxu0 0
        %981 = vmatmul.mubr.bf16.gmra.mrb[0].mxu0 %v885
        %v982 = vpop.f32.mrb[0].mxu0
        %v983 = vadd.f32 %v846, %v982
        %v984 = vpop.f32.mrb[0].mxu0
        %v985 = vpop.f32.mrb[0].mxu0
        %v986 = vadd.f32 %v849, %v985
        %v987 = vpop.f32.mrb[0].mxu0
        %988 = vmatprep.mubr.bf16.mxu0 0
        %989 = vmatmul.mubr.bf16.gmra.mrb[0].mxu0 %v886
        %v990 = vpop.f32.mrb[0].mxu0
        %v991 = vadd.f32 %v854, %v990
        %v992 = vpop.f32.mrb[0].mxu0
        %v993 = vpop.f32.mrb[0].mxu0
        %v994 = vadd.f32 %v857, %v993
        %v995 = vpop.f32.mrb[0].mxu0
        %996 = vmatprep.mubr.bf16.mxu0 0
        %997 = vmatmul.mubr.bf16.gmra.mrb[0].mxu0 %v887
        %v998 = vpop.f32.mrb[0].mxu0
        %v999 = vadd.f32 %v862, %v998
        %v1000 = vpop.f32.mrb[0].mxu0
        %v1001 = vpop.f32.mrb[0].mxu0
        %v1002 = vadd.f32 %v865, %v1001
        %v1003 = vpop.f32.mrb[0].mxu0
        %1004 = vdwg.mxu0
        %v1005 = vld [vmem:[#allocation2] sm:$0xe]
        %v1006 = vld [vmem:[#allocation2 + $0x8] sm:$0xe]
        %v1007 = vld [vmem:[#allocation2 + $0x10] sm:$0xe]
        %v1008 = vld [vmem:[#allocation2 + $0x18] sm:$0xe]
        %v1009 = vld [vmem:[#allocation2 + $0x20] sm:$0xe]
        %v1010 = vld [vmem:[#allocation2 + $0x28] sm:$0xe]
        %v1011 = vld [vmem:[#allocation2 + $0x30] sm:$0xe]
        %v1012 = vld [vmem:[#allocation2 + $0x38] sm:$0xe]
        %vm1029 = vcmask 1042432
        %vm1030 = vcmask 1046532
        %vm1031 = vmor %vm1029, %vm1030
        %v1032 = vrot.slane %v1005, 5
        %v1033 = vrot.slane %v1032, 4
        %v1034 = vrot.slane %v599, 5
        %v1035 = vsel %vm1031, %v1033, %v1034
        %v1036 = vrot.slane %v1006, 5
        %v1037 = vrot.slane %v1036, 4
        %v1038 = vrot.slane %v600, 5
        %v1039 = vsel %vm1031, %v1037, %v1038
        %v1040 = vrot.slane %v1007, 5
        %v1041 = vrot.slane %v1040, 4
        %v1042 = vrot.slane %v601, 5
        %v1043 = vsel %vm1031, %v1041, %v1042
        %v1044 = vrot.slane %v1008, 5
        %v1045 = vrot.slane %v1044, 4
        %v1046 = vrot.slane %v602, 5
        %v1047 = vsel %vm1031, %v1045, %v1046
        %v1048 = vrot.slane %v1009, 5
        %v1049 = vrot.slane %v1048, 4
        %v1050 = vrot.slane %v603, 5
        %v1051 = vsel %vm1031, %v1049, %v1050
        %v1052 = vrot.slane %v1010, 5
        %v1053 = vrot.slane %v1052, 4
        %v1054 = vrot.slane %v604, 5
        %v1055 = vsel %vm1031, %v1053, %v1054
        %v1056 = vrot.slane %v1011, 5
        %v1057 = vrot.slane %v1056, 4
        %v1058 = vrot.slane %v605, 5
        %v1059 = vsel %vm1031, %v1057, %v1058
        %v1060 = vrot.slane %v1012, 5
        %v1061 = vrot.slane %v1060, 4
        %v1062 = vrot.slane %v606, 5
        %v1063 = vsel %vm1031, %v1061, %v1062
        %s1064 = scalar_lea.vmem [#allocation6], 128
        %v1065 = vld [vmem:[%s1064] sm:$0xf]
        %v1066 = vld [vmem:[%s1064 + $0x4] sm:$0xf]
        %v1067 = vld [vmem:[%s1064 + $0x8] sm:$0xf]
        %v1068 = vld [vmem:[%s1064 + $0xc] sm:$0xf]
        %v1069 = vld [vmem:[%s1064 + $0x10] sm:$0xf]
        %v1070 = vld [vmem:[%s1064 + $0x14] sm:$0xf]
        %v1071 = vld [vmem:[%s1064 + $0x18] sm:$0xf]
        %v1072 = vld [vmem:[%s1064 + $0x1c] sm:$0xf]
        %v1073 = vld [vmem:[%s1064 + $0x20] sm:$0xf]
        %v1074 = vld [vmem:[%s1064 + $0x24] sm:$0xf]
        %v1075 = vld [vmem:[%s1064 + $0x28] sm:$0xf]
        %v1076 = vld [vmem:[%s1064 + $0x2c] sm:$0xf]
        %v1077 = vld [vmem:[%s1064 + $0x30] sm:$0xf]
        %v1078 = vld [vmem:[%s1064 + $0x34] sm:$0xf]
        %v1079 = vld [vmem:[%s1064 + $0x38] sm:$0xf]
        %v1080 = vld [vmem:[%s1064 + $0x3c] sm:$0xf]
        %v1081 = vunpack.c.l.b16 %v1035
        %v1082 = vunpack.c.l.b16 %v1039
        %v1083 = vunpack.c.l.b16 %v1043
        %v1084 = vunpack.c.l.b16 %v1047
        %v1085 = vunpack.c.l.b16 %v1051
        %v1086 = vunpack.c.l.b16 %v1055
        %v1087 = vunpack.c.l.b16 %v1059
        %v1088 = vunpack.c.l.b16 %v1063
        %v1089 = vpack.c.b16 %v1082, %v1081
        %v1090 = vpack.c.b16 %v1084, %v1083
        %v1091 = vpack.c.b16 %v1086, %v1085
        %v1092 = vpack.c.b16 %v1088, %v1087
        %v1113 = vunpack.c.l.b16 %v1065
        %v1114 = vunpack.c.l.b16 %v1066
        %v1115 = vunpack.c.l.b16 %v1067
        %v1116 = vunpack.c.l.b16 %v1068
        %v1117 = vunpack.c.l.b16 %v1069
        %v1118 = vunpack.c.l.b16 %v1070
        %v1119 = vunpack.c.l.b16 %v1071
        %v1120 = vunpack.c.l.b16 %v1072
        %v1121 = vunpack.c.l.b16 %v1073
        %v1122 = vunpack.c.l.b16 %v1074
        %v1123 = vunpack.c.l.b16 %v1075
        %v1124 = vunpack.c.l.b16 %v1076
        %v1125 = vunpack.c.l.b16 %v1077
        %v1126 = vunpack.c.l.b16 %v1078
        %v1127 = vunpack.c.l.b16 %v1079
        %v1128 = vunpack.c.l.b16 %v1080
        %v1129 = vpack.c.b16 %v1114, %v1113
        %v1130 = vpack.c.b16 %v1116, %v1115
        %v1131 = vpack.c.b16 %v1118, %v1117
        %v1132 = vpack.c.b16 %v1120, %v1119
        %v1133 = vpack.c.b16 %v1122, %v1121
        %v1134 = vpack.c.b16 %v1124, %v1123
        %v1135 = vpack.c.b16 %v1126, %v1125
        %v1136 = vpack.c.b16 %v1128, %v1127
        %1145 = vmatprep.subr.bf16.mxu0 0
        %1146 = vmatpush1.bf16.msra.mxu0 %v1129
        %1147 = vmatprep.subr.bf16.mxu0 0
        %1148 = vmatpush1.bf16.msra.mxu0 %v1130
        %1149 = vmatprep.subr.bf16.mxu0 0
        %1150 = vmatpush1.bf16.msra.mxu0 %v1131
        %1151 = vmatprep.subr.bf16.mxu0 0
        %1152 = vmatpush1.bf16.msra.mxu0 %v1132
        %1153 = vmatprep.subr.bf16.mxu0 0
        %1154 = vmatpush1.bf16.msra.mxu0 %v1133
        %1155 = vmatprep.subr.bf16.mxu0 0
        %1156 = vmatpush1.bf16.msra.mxu0 %v1134
        %1157 = vmatprep.subr.bf16.mxu0 0
        %1158 = vmatpush1.bf16.msra.mxu0 %v1135
        %1159 = vmatprep.subr.bf16.mxu0 0
        %1160 = vmatpush1.bf16.msra.mxu0 %v1136
        %1161 = vmatprep.subr.bf16.mxu0 0
        %1162 = vmatpush1.bf16.msra.mxu0 0
        %1163 = vmatprep.subr.bf16.mxu0 0
        %1164 = vmatpush1.bf16.msra.mxu0 0
        %1165 = vmatprep.subr.bf16.mxu0 0
        %1166 = vmatpush1.bf16.msra.mxu0 0
        %1167 = vmatprep.subr.bf16.mxu0 0
        %1168 = vmatpush1.bf16.msra.mxu0 0
        %1169 = vmatprep.subr.bf16.mxu0 0
        %1170 = vmatpush1.bf16.msra.mxu0 0
        %1171 = vmatprep.subr.bf16.mxu0 0
        %1172 = vmatpush1.bf16.msra.mxu0 0
        %1173 = vmatprep.subr.bf16.mxu0 0
        %1174 = vmatpush1.bf16.msra.mxu0 0
        %1175 = vmatprep.subr.bf16.mxu0 0
        %1176 = vmatpush1.bf16.msra.mxu0 0
        %1177 = vmatprep.mubr.bf16.mxu0 0
        %1178 = vmatmul.mubr.bf16.gmra.mrb[0].mxu0 %v1089
        %v1179 = vpop.f32.mrb[0].mxu0
        %v1180 = vadd.f32 0.0, %v1179
        %v1181 = vpop.f32.mrb[0].mxu0
        %v1182 = vpop.f32.mrb[0].mxu0
        %v1183 = vadd.f32 0.0, %v1182
        %v1184 = vpop.f32.mrb[0].mxu0
        %1185 = vmatprep.mubr.bf16.mxu0 0
        %1186 = vmatmul.mubr.bf16.gmra.mrb[0].mxu0 %v1090
        %v1187 = vpop.f32.mrb[0].mxu0
        %v1188 = vadd.f32 0.0, %v1187
        %v1189 = vpop.f32.mrb[0].mxu0
        %v1190 = vpop.f32.mrb[0].mxu0
        %v1191 = vadd.f32 0.0, %v1190
        %v1192 = vpop.f32.mrb[0].mxu0
        %1193 = vmatprep.mubr.bf16.mxu0 0
        %1194 = vmatmul.mubr.bf16.gmra.mrb[0].mxu0 %v1091
        %v1195 = vpop.f32.mrb[0].mxu0
        %v1196 = vadd.f32 0.0, %v1195
        %v1197 = vpop.f32.mrb[0].mxu0
        %v1198 = vpop.f32.mrb[0].mxu0
        %v1199 = vadd.f32 0.0, %v1198
        %v1200 = vpop.f32.mrb[0].mxu0
        %1201 = vmatprep.mubr.bf16.mxu0 0
        %1202 = vmatmul.mubr.bf16.gmra.mrb[0].mxu0 %v1092
        %v1203 = vpop.f32.mrb[0].mxu0
        %v1204 = vadd.f32 0.0, %v1203
        %v1205 = vpop.f32.mrb[0].mxu0
        %v1206 = vpop.f32.mrb[0].mxu0
        %v1207 = vadd.f32 0.0, %v1206
        %v1208 = vpop.f32.mrb[0].mxu0
        %1209 = vdwg.mxu0
        %v1210 = vadd.f32 %v975, %v1180
        %v1211 = vadd.f32 %v978, %v1183
        %v1212 = vadd.f32 %v983, %v1188
        %v1213 = vadd.f32 %v986, %v1191
        %v1214 = vadd.f32 %v991, %v1196
        %v1215 = vadd.f32 %v994, %v1199
        %v1216 = vadd.f32 %v999, %v1204
        %v1217 = vadd.f32 %v1002, %v1207
        %v1218 = vld [vmem:[%s332] sm:$0xf]
        %v1219 = vld [vmem:[%s332 + $0x8] sm:$0xf]
        %v1220 = vld [vmem:[%s332 + $0x10] sm:$0xf]
        %v1221 = vld [vmem:[%s332 + $0x18] sm:$0xf]
        %v1222 = vld [vmem:[%s332 + $0x20] sm:$0xf]
        %v1223 = vld [vmem:[%s332 + $0x28] sm:$0xf]
        %v1224 = vld [vmem:[%s332 + $0x30] sm:$0xf]
        %v1225 = vld [vmem:[%s332 + $0x38] sm:$0xf]
        %s1226 = scalar_lea.vmem [#allocation6], 192
        %v1227 = vld [vmem:[%s1226] sm:$0xf]
        %v1228 = vld [vmem:[%s1226 + $0x4] sm:$0xf]
        %v1229 = vld [vmem:[%s1226 + $0x8] sm:$0xf]
        %v1230 = vld [vmem:[%s1226 + $0xc] sm:$0xf]
        %v1231 = vld [vmem:[%s1226 + $0x10] sm:$0xf]
        %v1232 = vld [vmem:[%s1226 + $0x14] sm:$0xf]
        %v1233 = vld [vmem:[%s1226 + $0x18] sm:$0xf]
        %v1234 = vld [vmem:[%s1226 + $0x1c] sm:$0xf]
        %v1235 = vld [vmem:[%s1226 + $0x20] sm:$0xf]
        %v1236 = vld [vmem:[%s1226 + $0x24] sm:$0xf]
        %v1237 = vld [vmem:[%s1226 + $0x28] sm:$0xf]
        %v1238 = vld [vmem:[%s1226 + $0x2c] sm:$0xf]
        %v1239 = vld [vmem:[%s1226 + $0x30] sm:$0xf]
        %v1240 = vld [vmem:[%s1226 + $0x34] sm:$0xf]
        %v1241 = vld [vmem:[%s1226 + $0x38] sm:$0xf]
        %v1242 = vld [vmem:[%s1226 + $0x3c] sm:$0xf]
        %v1251 = vunpack.c.l.b16 %v1218
        %v1252 = vunpack.c.l.b16 %v1219
        %v1253 = vunpack.c.l.b16 %v1220
        %v1254 = vunpack.c.l.b16 %v1221
        %v1255 = vunpack.c.l.b16 %v1222
        %v1256 = vunpack.c.l.b16 %v1223
        %v1257 = vunpack.c.l.b16 %v1224
        %v1258 = vunpack.c.l.b16 %v1225
        %v1259 = vpack.c.b16 %v1252, %v1251
        %v1260 = vpack.c.b16 %v1254, %v1253
        %v1261 = vpack.c.b16 %v1256, %v1255
        %v1262 = vpack.c.b16 %v1258, %v1257
        %v1283 = vunpack.c.l.b16 %v1227
        %v1284 = vunpack.c.l.b16 %v1228
        %v1285 = vunpack.c.l.b16 %v1229
        %v1286 = vunpack.c.l.b16 %v1230
        %v1287 = vunpack.c.l.b16 %v1231
        %v1288 = vunpack.c.l.b16 %v1232
        %v1289 = vunpack.c.l.b16 %v1233
        %v1290 = vunpack.c.l.b16 %v1234
        %v1291 = vunpack.c.l.b16 %v1235
        %v1292 = vunpack.c.l.b16 %v1236
        %v1293 = vunpack.c.l.b16 %v1237
        %v1294 = vunpack.c.l.b16 %v1238
        %v1295 = vunpack.c.l.b16 %v1239
        %v1296 = vunpack.c.l.b16 %v1240
        %v1297 = vunpack.c.l.b16 %v1241
        %v1298 = vunpack.c.l.b16 %v1242
        %v1299 = vpack.c.b16 %v1284, %v1283
        %v1300 = vpack.c.b16 %v1286, %v1285
        %v1301 = vpack.c.b16 %v1288, %v1287
        %v1302 = vpack.c.b16 %v1290, %v1289
        %v1303 = vpack.c.b16 %v1292, %v1291
        %v1304 = vpack.c.b16 %v1294, %v1293
        %v1305 = vpack.c.b16 %v1296, %v1295
        %v1306 = vpack.c.b16 %v1298, %v1297
        %1315 = vmatprep.subr.bf16.mxu0 0
        %1316 = vmatpush1.bf16.msra.mxu0 %v1299
        %1317 = vmatprep.subr.bf16.mxu0 0
        %1318 = vmatpush1.bf16.msra.mxu0 %v1300
        %1319 = vmatprep.subr.bf16.mxu0 0
        %1320 = vmatpush1.bf16.msra.mxu0 %v1301
        %1321 = vmatprep.subr.bf16.mxu0 0
        %1322 = vmatpush1.bf16.msra.mxu0 %v1302
        %1323 = vmatprep.subr.bf16.mxu0 0
        %1324 = vmatpush1.bf16.msra.mxu0 %v1303
        %1325 = vmatprep.subr.bf16.mxu0 0
        %1326 = vmatpush1.bf16.msra.mxu0 %v1304
        %1327 = vmatprep.subr.bf16.mxu0 0
        %1328 = vmatpush1.bf16.msra.mxu0 %v1305
        %1329 = vmatprep.subr.bf16.mxu0 0
        %1330 = vmatpush1.bf16.msra.mxu0 %v1306
        %1331 = vmatprep.subr.bf16.mxu0 0
        %1332 = vmatpush1.bf16.msra.mxu0 0
        %1333 = vmatprep.subr.bf16.mxu0 0
        %1334 = vmatpush1.bf16.msra.mxu0 0
        %1335 = vmatprep.subr.bf16.mxu0 0
        %1336 = vmatpush1.bf16.msra.mxu0 0
        %1337 = vmatprep.subr.bf16.mxu0 0
        %1338 = vmatpush1.bf16.msra.mxu0 0
        %1339 = vmatprep.subr.bf16.mxu0 0
        %1340 = vmatpush1.bf16.msra.mxu0 0
        %1341 = vmatprep.subr.bf16.mxu0 0
        %1342 = vmatpush1.bf16.msra.mxu0 0
        %1343 = vmatprep.subr.bf16.mxu0 0
        %1344 = vmatpush1.bf16.msra.mxu0 0
        %1345 = vmatprep.subr.bf16.mxu0 0
        %1346 = vmatpush1.bf16.msra.mxu0 0
        %1347 = vmatprep.mubr.bf16.mxu0 0
        %1348 = vmatmul.mubr.bf16.gmra.mrb[0].mxu0 %v1259
        %v1349 = vpop.f32.mrb[0].mxu0
        %v1350 = vadd.f32 0.0, %v1349
        %v1351 = vpop.f32.mrb[0].mxu0
        %v1352 = vpop.f32.mrb[0].mxu0
        %v1353 = vadd.f32 0.0, %v1352
        %v1354 = vpop.f32.mrb[0].mxu0
        %1355 = vmatprep.mubr.bf16.mxu0 0
        %1356 = vmatmul.mubr.bf16.gmra.mrb[0].mxu0 %v1260
        %v1357 = vpop.f32.mrb[0].mxu0
        %v1358 = vadd.f32 0.0, %v1357
        %v1359 = vpop.f32.mrb[0].mxu0
        %v1360 = vpop.f32.mrb[0].mxu0
        %v1361 = vadd.f32 0.0, %v1360
        %v1362 = vpop.f32.mrb[0].mxu0
        %1363 = vmatprep.mubr.bf16.mxu0 0
        %1364 = vmatmul.mubr.bf16.gmra.mrb[0].mxu0 %v1261
        %v1365 = vpop.f32.mrb[0].mxu0
        %v1366 = vadd.f32 0.0, %v1365
        %v1367 = vpop.f32.mrb[0].mxu0
        %v1368 = vpop.f32.mrb[0].mxu0
        %v1369 = vadd.f32 0.0, %v1368
        %v1370 = vpop.f32.mrb[0].mxu0
        %1371 = vmatprep.mubr.bf16.mxu0 0
        %1372 = vmatmul.mubr.bf16.gmra.mrb[0].mxu0 %v1262
        %v1373 = vpop.f32.mrb[0].mxu0
        %v1374 = vadd.f32 0.0, %v1373
        %v1375 = vpop.f32.mrb[0].mxu0
        %v1376 = vpop.f32.mrb[0].mxu0
        %v1377 = vadd.f32 0.0, %v1376
        %v1378 = vpop.f32.mrb[0].mxu0
        %1379 = vdwg.mxu0
        %v1380 = vadd.f32 %v1210, %v1350
        %v1381 = vadd.f32 %v1211, %v1353
        %v1382 = vadd.f32 %v1212, %v1358
        %v1383 = vadd.f32 %v1213, %v1361
        %v1384 = vadd.f32 %v1214, %v1366
        %v1385 = vadd.f32 %v1215, %v1369
        %v1386 = vadd.f32 %v1216, %v1374
        %v1387 = vadd.f32 %v1217, %v1377
        %v1388 = vld [vmem:[%s332] sm:$0xf]
        %v1389 = vld [vmem:[%s332 + $0x4] sm:$0x1]
        %v1390 = vld [vmem:[%s332 + $0x8] sm:$0xf]
        %v1391 = vld [vmem:[%s332 + $0xc] sm:$0x1]
        %v1392 = vld [vmem:[%s332 + $0x10] sm:$0xf]
        %v1393 = vld [vmem:[%s332 + $0x14] sm:$0x1]
        %v1394 = vld [vmem:[%s332 + $0x18] sm:$0xf]
        %v1395 = vld [vmem:[%s332 + $0x1c] sm:$0x1]
        %v1396 = vld [vmem:[%s332 + $0x20] sm:$0xf]
        %v1397 = vld [vmem:[%s332 + $0x24] sm:$0x1]
        %v1398 = vld [vmem:[%s332 + $0x28] sm:$0xf]
        %v1399 = vld [vmem:[%s332 + $0x2c] sm:$0x1]
        %v1400 = vld [vmem:[%s332 + $0x30] sm:$0xf]
        %v1401 = vld [vmem:[%s332 + $0x34] sm:$0x1]
        %v1402 = vld [vmem:[%s332 + $0x38] sm:$0xf]
        %v1403 = vld [vmem:[%s332 + $0x3c] sm:$0x1]
        %v1405 = vshrl.u32 %v1388, 16
        %v1407 = vrot.slane %v1405, 4
        %v1408 = vshll.u32 %v1388, 16
        %v1410 = vrot.slane %v1408, 5
        %v1411 = vor.u32 %v1407, %v1410
        %v1412 = vrot.slane %v1411, 4
        %v1414 = vshll.u32 %v1389, 16
        %v1416 = vrot.slane %v1414, 5
        %v1417 = vsel %vm609, %v1412, %v1416
        %v1419 = vshrl.u32 %v1390, 16
        %v1421 = vrot.slane %v1419, 4
        %v1422 = vshll.u32 %v1390, 16
        %v1424 = vrot.slane %v1422, 5
        %v1425 = vor.u32 %v1421, %v1424
        %v1426 = vrot.slane %v1425, 4
        %v1428 = vshll.u32 %v1391, 16
        %v1430 = vrot.slane %v1428, 5
        %v1431 = vsel %vm609, %v1426, %v1430
        %v1433 = vshrl.u32 %v1392, 16
        %v1435 = vrot.slane %v1433, 4
        %v1436 = vshll.u32 %v1392, 16
        %v1438 = vrot.slane %v1436, 5
        %v1439 = vor.u32 %v1435, %v1438
        %v1440 = vrot.slane %v1439, 4
        %v1442 = vshll.u32 %v1393, 16
        %v1444 = vrot.slane %v1442, 5
        %v1445 = vsel %vm609, %v1440, %v1444
        %v1447 = vshrl.u32 %v1394, 16
        %v1449 = vrot.slane %v1447, 4
        %v1450 = vshll.u32 %v1394, 16
        %v1452 = vrot.slane %v1450, 5
        %v1453 = vor.u32 %v1449, %v1452
        %v1454 = vrot.slane %v1453, 4
        %v1456 = vshll.u32 %v1395, 16
        %v1458 = vrot.slane %v1456, 5
        %v1459 = vsel %vm609, %v1454, %v1458
        %v1461 = vshrl.u32 %v1396, 16
        %v1463 = vrot.slane %v1461, 4
        %v1464 = vshll.u32 %v1396, 16
        %v1466 = vrot.slane %v1464, 5
        %v1467 = vor.u32 %v1463, %v1466
        %v1468 = vrot.slane %v1467, 4
        %v1470 = vshll.u32 %v1397, 16
        %v1472 = vrot.slane %v1470, 5
        %v1473 = vsel %vm609, %v1468, %v1472
        %v1475 = vshrl.u32 %v1398, 16
        %v1477 = vrot.slane %v1475, 4
        %v1478 = vshll.u32 %v1398, 16
        %v1480 = vrot.slane %v1478, 5
        %v1481 = vor.u32 %v1477, %v1480
        %v1482 = vrot.slane %v1481, 4
        %v1484 = vshll.u32 %v1399, 16
        %v1486 = vrot.slane %v1484, 5
        %v1487 = vsel %vm609, %v1482, %v1486
        %v1489 = vshrl.u32 %v1400, 16
        %v1491 = vrot.slane %v1489, 4
        %v1492 = vshll.u32 %v1400, 16
        %v1494 = vrot.slane %v1492, 5
        %v1495 = vor.u32 %v1491, %v1494
        %v1496 = vrot.slane %v1495, 4
        %v1498 = vshll.u32 %v1401, 16
        %v1500 = vrot.slane %v1498, 5
        %v1501 = vsel %vm609, %v1496, %v1500
        %v1503 = vshrl.u32 %v1402, 16
        %v1505 = vrot.slane %v1503, 4
        %v1506 = vshll.u32 %v1402, 16
        %v1508 = vrot.slane %v1506, 5
        %v1509 = vor.u32 %v1505, %v1508
        %v1510 = vrot.slane %v1509, 4
        %v1512 = vshll.u32 %v1403, 16
        %v1514 = vrot.slane %v1512, 5
        %v1515 = vsel %vm609, %v1510, %v1514
        %s1516 = scalar_lea.vmem [#allocation6], 256
        %v1517 = vld [vmem:[%s1516] sm:$0xf]
        %v1518 = vld [vmem:[%s1516 + $0x4] sm:$0xf]
        %v1519 = vld [vmem:[%s1516 + $0x8] sm:$0xf]
        %v1520 = vld [vmem:[%s1516 + $0xc] sm:$0xf]
        %v1521 = vld [vmem:[%s1516 + $0x10] sm:$0xf]
        %v1522 = vld [vmem:[%s1516 + $0x14] sm:$0xf]
        %v1523 = vld [vmem:[%s1516 + $0x18] sm:$0xf]
        %v1524 = vld [vmem:[%s1516 + $0x1c] sm:$0xf]
        %v1525 = vld [vmem:[%s1516 + $0x20] sm:$0xf]
        %v1526 = vld [vmem:[%s1516 + $0x24] sm:$0xf]
        %v1527 = vld [vmem:[%s1516 + $0x28] sm:$0xf]
        %v1528 = vld [vmem:[%s1516 + $0x2c] sm:$0xf]
        %v1529 = vld [vmem:[%s1516 + $0x30] sm:$0xf]
        %v1530 = vld [vmem:[%s1516 + $0x34] sm:$0xf]
        %v1531 = vld [vmem:[%s1516 + $0x38] sm:$0xf]
        %v1532 = vld [vmem:[%s1516 + $0x3c] sm:$0xf]
        %v1533 = vunpack.c.l.b16 %v1417
        %v1534 = vunpack.c.l.b16 %v1431
        %v1535 = vunpack.c.l.b16 %v1445
        %v1536 = vunpack.c.l.b16 %v1459
        %v1537 = vunpack.c.l.b16 %v1473
        %v1538 = vunpack.c.l.b16 %v1487
        %v1539 = vunpack.c.l.b16 %v1501
        %v1540 = vunpack.c.l.b16 %v1515
        %v1541 = vpack.c.b16 %v1534, %v1533
        %v1542 = vpack.c.b16 %v1536, %v1535
        %v1543 = vpack.c.b16 %v1538, %v1537
        %v1544 = vpack.c.b16 %v1540, %v1539
        %v1565 = vunpack.c.l.b16 %v1517
        %v1566 = vunpack.c.l.b16 %v1518
        %v1567 = vunpack.c.l.b16 %v1519
        %v1568 = vunpack.c.l.b16 %v1520
        %v1569 = vunpack.c.l.b16 %v1521
        %v1570 = vunpack.c.l.b16 %v1522
        %v1571 = vunpack.c.l.b16 %v1523
        %v1572 = vunpack.c.l.b16 %v1524
        %v1573 = vunpack.c.l.b16 %v1525
        %v1574 = vunpack.c.l.b16 %v1526
        %v1575 = vunpack.c.l.b16 %v1527
        %v1576 = vunpack.c.l.b16 %v1528
        %v1577 = vunpack.c.l.b16 %v1529
        %v1578 = vunpack.c.l.b16 %v1530
        %v1579 = vunpack.c.l.b16 %v1531
        %v1580 = vunpack.c.l.b16 %v1532
        %v1581 = vpack.c.b16 %v1566, %v1565
        %v1582 = vpack.c.b16 %v1568, %v1567
        %v1583 = vpack.c.b16 %v1570, %v1569
        %v1584 = vpack.c.b16 %v1572, %v1571
        %v1585 = vpack.c.b16 %v1574, %v1573
        %v1586 = vpack.c.b16 %v1576, %v1575
        %v1587 = vpack.c.b16 %v1578, %v1577
        %v1588 = vpack.c.b16 %v1580, %v1579
        %1597 = vmatprep.subr.bf16.mxu0 0
        %1598 = vmatpush1.bf16.msra.mxu0 %v1581
        %1599 = vmatprep.subr.bf16.mxu0 0
        %1600 = vmatpush1.bf16.msra.mxu0 %v1582
        %1601 = vmatprep.subr.bf16.mxu0 0
        %1602 = vmatpush1.bf16.msra.mxu0 %v1583
        %1603 = vmatprep.subr.bf16.mxu0 0
        %1604 = vmatpush1.bf16.msra.mxu0 %v1584
        %1605 = vmatprep.subr.bf16.mxu0 0
        %1606 = vmatpush1.bf16.msra.mxu0 %v1585
        %1607 = vmatprep.subr.bf16.mxu0 0
        %1608 = vmatpush1.bf16.msra.mxu0 %v1586
        %1609 = vmatprep.subr.bf16.mxu0 0
        %1610 = vmatpush1.bf16.msra.mxu0 %v1587
        %1611 = vmatprep.subr.bf16.mxu0 0
        %1612 = vmatpush1.bf16.msra.mxu0 %v1588
        %1613 = vmatprep.subr.bf16.mxu0 0
        %1614 = vmatpush1.bf16.msra.mxu0 0
        %1615 = vmatprep.subr.bf16.mxu0 0
        %1616 = vmatpush1.bf16.msra.mxu0 0
        %1617 = vmatprep.subr.bf16.mxu0 0
        %1618 = vmatpush1.bf16.msra.mxu0 0
        %1619 = vmatprep.subr.bf16.mxu0 0
        %1620 = vmatpush1.bf16.msra.mxu0 0
        %1621 = vmatprep.subr.bf16.mxu0 0
        %1622 = vmatpush1.bf16.msra.mxu0 0
        %1623 = vmatprep.subr.bf16.mxu0 0
        %1624 = vmatpush1.bf16.msra.mxu0 0
        %1625 = vmatprep.subr.bf16.mxu0 0
        %1626 = vmatpush1.bf16.msra.mxu0 0
        %1627 = vmatprep.subr.bf16.mxu0 0
        %1628 = vmatpush1.bf16.msra.mxu0 0
        %1629 = vmatprep.mubr.bf16.mxu0 0
        %1630 = vmatmul.mubr.bf16.gmra.mrb[0].mxu0 %v1541
        %v1631 = vpop.f32.mrb[0].mxu0
        %v1632 = vadd.f32 0.0, %v1631
        %v1633 = vpop.f32.mrb[0].mxu0
        %v1634 = vpop.f32.mrb[0].mxu0
        %v1635 = vadd.f32 0.0, %v1634
        %v1636 = vpop.f32.mrb[0].mxu0
        %1637 = vmatprep.mubr.bf16.mxu0 0
        %1638 = vmatmul.mubr.bf16.gmra.mrb[0].mxu0 %v1542
        %v1639 = vpop.f32.mrb[0].mxu0
        %v1640 = vadd.f32 0.0, %v1639
        %v1641 = vpop.f32.mrb[0].mxu0
        %v1642 = vpop.f32.mrb[0].mxu0
        %v1643 = vadd.f32 0.0, %v1642
        %v1644 = vpop.f32.mrb[0].mxu0
        %1645 = vmatprep.mubr.bf16.mxu0 0
        %1646 = vmatmul.mubr.bf16.gmra.mrb[0].mxu0 %v1543
        %v1647 = vpop.f32.mrb[0].mxu0
        %v1648 = vadd.f32 0.0, %v1647
        %v1649 = vpop.f32.mrb[0].mxu0
        %v1650 = vpop.f32.mrb[0].mxu0
        %v1651 = vadd.f32 0.0, %v1650
        %v1652 = vpop.f32.mrb[0].mxu0
        %1653 = vmatprep.mubr.bf16.mxu0 0
        %1654 = vmatmul.mubr.bf16.gmra.mrb[0].mxu0 %v1544
        %v1655 = vpop.f32.mrb[0].mxu0
        %v1656 = vadd.f32 0.0, %v1655
        %v1657 = vpop.f32.mrb[0].mxu0
        %v1658 = vpop.f32.mrb[0].mxu0
        %v1659 = vadd.f32 0.0, %v1658
        %v1660 = vpop.f32.mrb[0].mxu0
        %1661 = vdwg.mxu0
        %v1662 = vadd.f32 %v1380, %v1632
        %v1663 = vadd.f32 %v1381, %v1635
        %v1664 = vadd.f32 %v1382, %v1640
        %v1665 = vadd.f32 %v1383, %v1643
        %v1666 = vadd.f32 %v1384, %v1648
        %v1667 = vadd.f32 %v1385, %v1651
        %v1668 = vadd.f32 %v1386, %v1656
        %v1669 = vadd.f32 %v1387, %v1659
        %v1670 = vld [vmem:[%s332] sm:$0xe]
        %v1671 = vld [vmem:[%s332 + $0x8] sm:$0xe]
        %v1672 = vld [vmem:[%s332 + $0x10] sm:$0xe]
        %v1673 = vld [vmem:[%s332 + $0x18] sm:$0xe]
        %v1674 = vld [vmem:[%s332 + $0x20] sm:$0xe]
        %v1675 = vld [vmem:[%s332 + $0x28] sm:$0xe]
        %v1676 = vld [vmem:[%s332 + $0x30] sm:$0xe]
        %v1677 = vld [vmem:[%s332 + $0x38] sm:$0xe]
        %v1694 = vrot.slane %v1670, 5
        %v1695 = vrot.slane %v1694, 4
        %v1696 = vrot.slane %v1389, 5
        %v1697 = vsel %vm1031, %v1695, %v1696
        %v1698 = vrot.slane %v1671, 5
        %v1699 = vrot.slane %v1698, 4
        %v1700 = vrot.slane %v1391, 5
        %v1701 = vsel %vm1031, %v1699, %v1700
        %v1702 = vrot.slane %v1672, 5
        %v1703 = vrot.slane %v1702, 4
        %v1704 = vrot.slane %v1393, 5
        %v1705 = vsel %vm1031, %v1703, %v1704
        %v1706 = vrot.slane %v1673, 5
        %v1707 = vrot.slane %v1706, 4
        %v1708 = vrot.slane %v1395, 5
        %v1709 = vsel %vm1031, %v1707, %v1708
        %v1710 = vrot.slane %v1674, 5
        %v1711 = vrot.slane %v1710, 4
        %v1712 = vrot.slane %v1397, 5
        %v1713 = vsel %vm1031, %v1711, %v1712
        %v1714 = vrot.slane %v1675, 5
        %v1715 = vrot.slane %v1714, 4
        %v1716 = vrot.slane %v1399, 5
        %v1717 = vsel %vm1031, %v1715, %v1716
        %v1718 = vrot.slane %v1676, 5
        %v1719 = vrot.slane %v1718, 4
        %v1720 = vrot.slane %v1401, 5
        %v1721 = vsel %vm1031, %v1719, %v1720
        %v1722 = vrot.slane %v1677, 5
        %v1723 = vrot.slane %v1722, 4
        %v1724 = vrot.slane %v1403, 5
        %v1725 = vsel %vm1031, %v1723, %v1724
        %s1726 = scalar_lea.vmem [#allocation6], 320
        %v1727 = vld [vmem:[%s1726] sm:$0xf]
        %v1728 = vld [vmem:[%s1726 + $0x4] sm:$0xf]
        %v1729 = vld [vmem:[%s1726 + $0x8] sm:$0xf]
        %v1730 = vld [vmem:[%s1726 + $0xc] sm:$0xf]
        %v1731 = vld [vmem:[%s1726 + $0x10] sm:$0xf]
        %v1732 = vld [vmem:[%s1726 + $0x14] sm:$0xf]
        %v1733 = vld [vmem:[%s1726 + $0x18] sm:$0xf]
        %v1734 = vld [vmem:[%s1726 + $0x1c] sm:$0xf]
        %v1735 = vld [vmem:[%s1726 + $0x20] sm:$0xf]
        %v1736 = vld [vmem:[%s1726 + $0x24] sm:$0xf]
        %v1737 = vld [vmem:[%s1726 + $0x28] sm:$0xf]
        %v1738 = vld [vmem:[%s1726 + $0x2c] sm:$0xf]
        %v1739 = vld [vmem:[%s1726 + $0x30] sm:$0xf]
        %v1740 = vld [vmem:[%s1726 + $0x34] sm:$0xf]
        %v1741 = vld [vmem:[%s1726 + $0x38] sm:$0xf]
        %v1742 = vld [vmem:[%s1726 + $0x3c] sm:$0xf]
        %v1743 = vunpack.c.l.b16 %v1697
        %v1744 = vunpack.c.l.b16 %v1701
        %v1745 = vunpack.c.l.b16 %v1705
        %v1746 = vunpack.c.l.b16 %v1709
        %v1747 = vunpack.c.l.b16 %v1713
        %v1748 = vunpack.c.l.b16 %v1717
        %v1749 = vunpack.c.l.b16 %v1721
        %v1750 = vunpack.c.l.b16 %v1725
        %v1751 = vpack.c.b16 %v1744, %v1743
        %v1752 = vpack.c.b16 %v1746, %v1745
        %v1753 = vpack.c.b16 %v1748, %v1747
        %v1754 = vpack.c.b16 %v1750, %v1749
        %v1775 = vunpack.c.l.b16 %v1727
        %v1776 = vunpack.c.l.b16 %v1728
        %v1777 = vunpack.c.l.b16 %v1729
        %v1778 = vunpack.c.l.b16 %v1730
        %v1779 = vunpack.c.l.b16 %v1731
        %v1780 = vunpack.c.l.b16 %v1732
        %v1781 = vunpack.c.l.b16 %v1733
        %v1782 = vunpack.c.l.b16 %v1734
        %v1783 = vunpack.c.l.b16 %v1735
        %v1784 = vunpack.c.l.b16 %v1736
        %v1785 = vunpack.c.l.b16 %v1737
        %v1786 = vunpack.c.l.b16 %v1738
        %v1787 = vunpack.c.l.b16 %v1739
        %v1788 = vunpack.c.l.b16 %v1740
        %v1789 = vunpack.c.l.b16 %v1741
        %v1790 = vunpack.c.l.b16 %v1742
        %v1791 = vpack.c.b16 %v1776, %v1775
        %v1792 = vpack.c.b16 %v1778, %v1777
        %v1793 = vpack.c.b16 %v1780, %v1779
        %v1794 = vpack.c.b16 %v1782, %v1781
        %v1795 = vpack.c.b16 %v1784, %v1783
        %v1796 = vpack.c.b16 %v1786, %v1785
        %v1797 = vpack.c.b16 %v1788, %v1787
        %v1798 = vpack.c.b16 %v1790, %v1789
        %1807 = vmatprep.subr.bf16.mxu0 0
        %1808 = vmatpush1.bf16.msra.mxu0 %v1791
        %1809 = vmatprep.subr.bf16.mxu0 0
        %1810 = vmatpush1.bf16.msra.mxu0 %v1792
        %1811 = vmatprep.subr.bf16.mxu0 0
        %1812 = vmatpush1.bf16.msra.mxu0 %v1793
        %1813 = vmatprep.subr.bf16.mxu0 0
        %1814 = vmatpush1.bf16.msra.mxu0 %v1794
        %1815 = vmatprep.subr.bf16.mxu0 0
        %1816 = vmatpush1.bf16.msra.mxu0 %v1795
        %1817 = vmatprep.subr.bf16.mxu0 0
        %1818 = vmatpush1.bf16.msra.mxu0 %v1796
        %1819 = vmatprep.subr.bf16.mxu0 0
        %1820 = vmatpush1.bf16.msra.mxu0 %v1797
        %1821 = vmatprep.subr.bf16.mxu0 0
        %1822 = vmatpush1.bf16.msra.mxu0 %v1798
        %1823 = vmatprep.subr.bf16.mxu0 0
        %1824 = vmatpush1.bf16.msra.mxu0 0
        %1825 = vmatprep.subr.bf16.mxu0 0
        %1826 = vmatpush1.bf16.msra.mxu0 0
        %1827 = vmatprep.subr.bf16.mxu0 0
        %1828 = vmatpush1.bf16.msra.mxu0 0
        %1829 = vmatprep.subr.bf16.mxu0 0
        %1830 = vmatpush1.bf16.msra.mxu0 0
        %1831 = vmatprep.subr.bf16.mxu0 0
        %1832 = vmatpush1.bf16.msra.mxu0 0
        %1833 = vmatprep.subr.bf16.mxu0 0
        %1834 = vmatpush1.bf16.msra.mxu0 0
        %1835 = vmatprep.subr.bf16.mxu0 0
        %1836 = vmatpush1.bf16.msra.mxu0 0
        %1837 = vmatprep.subr.bf16.mxu0 0
        %1838 = vmatpush1.bf16.msra.mxu0 0
        %1839 = vmatprep.mubr.bf16.mxu0 0
        %1840 = vmatmul.mubr.bf16.gmra.mrb[0].mxu0 %v1751
        %v1841 = vpop.f32.mrb[0].mxu0
        %v1842 = vadd.f32 0.0, %v1841
        %v1843 = vpop.f32.mrb[0].mxu0
        %v1844 = vpop.f32.mrb[0].mxu0
        %v1845 = vadd.f32 0.0, %v1844
        %v1846 = vpop.f32.mrb[0].mxu0
        %1847 = vmatprep.mubr.bf16.mxu0 0
        %1848 = vmatmul.mubr.bf16.gmra.mrb[0].mxu0 %v1752
        %v1849 = vpop.f32.mrb[0].mxu0
        %v1850 = vadd.f32 0.0, %v1849
        %v1851 = vpop.f32.mrb[0].mxu0
        %v1852 = vpop.f32.mrb[0].mxu0
        %v1853 = vadd.f32 0.0, %v1852
        %v1854 = vpop.f32.mrb[0].mxu0
        %1855 = vmatprep.mubr.bf16.mxu0 0
        %1856 = vmatmul.mubr.bf16.gmra.mrb[0].mxu0 %v1753
        %v1857 = vpop.f32.mrb[0].mxu0
        %v1858 = vadd.f32 0.0, %v1857
        %v1859 = vpop.f32.mrb[0].mxu0
        %v1860 = vpop.f32.mrb[0].mxu0
        %v1861 = vadd.f32 0.0, %v1860
        %v1862 = vpop.f32.mrb[0].mxu0
        %1863 = vmatprep.mubr.bf16.mxu0 0
        %1864 = vmatmul.mubr.bf16.gmra.mrb[0].mxu0 %v1754
        %v1865 = vpop.f32.mrb[0].mxu0
        %v1866 = vadd.f32 0.0, %v1865
        %v1867 = vpop.f32.mrb[0].mxu0
        %v1868 = vpop.f32.mrb[0].mxu0
        %v1869 = vadd.f32 0.0, %v1868
        %v1870 = vpop.f32.mrb[0].mxu0
        %1871 = vdwg.mxu0
        %v1872 = vadd.f32 %v1662, %v1842
        %v1873 = vadd.f32 %v1663, %v1845
        %v1874 = vadd.f32 %v1664, %v1850
        %v1875 = vadd.f32 %v1665, %v1853
        %v1876 = vadd.f32 %v1666, %v1858
        %v1877 = vadd.f32 %v1667, %v1861
        %v1878 = vadd.f32 %v1668, %v1866
        %v1879 = vadd.f32 %v1669, %v1869
        %s1880 = scalar_lea.vmem [#allocation2], 16
        %v1881 = vld [vmem:[%s1880] sm:$0xf]
        %v1882 = vld [vmem:[%s1880 + $0x8] sm:$0xf]
        %v1883 = vld [vmem:[%s1880 + $0x10] sm:$0xf]
        %v1884 = vld [vmem:[%s1880 + $0x18] sm:$0xf]
        %v1885 = vld [vmem:[%s1880 + $0x20] sm:$0xf]
        %v1886 = vld [vmem:[%s1880 + $0x28] sm:$0xf]
        %v1887 = vld [vmem:[%s1880 + $0x30] sm:$0xf]
        %v1888 = vld [vmem:[%s1880 + $0x38] sm:$0xf]
        %s1889 = scalar_lea.vmem [#allocation6], 384
        %v1890 = vld [vmem:[%s1889] sm:$0xf]
        %v1891 = vld [vmem:[%s1889 + $0x4] sm:$0xf]
        %v1892 = vld [vmem:[%s1889 + $0x8] sm:$0xf]
        %v1893 = vld [vmem:[%s1889 + $0xc] sm:$0xf]
        %v1894 = vld [vmem:[%s1889 + $0x10] sm:$0xf]
        %v1895 = vld [vmem:[%s1889 + $0x14] sm:$0xf]
        %v1896 = vld [vmem:[%s1889 + $0x18] sm:$0xf]
        %v1897 = vld [vmem:[%s1889 + $0x1c] sm:$0xf]
        %v1898 = vld [vmem:[%s1889 + $0x20] sm:$0xf]
        %v1899 = vld [vmem:[%s1889 + $0x24] sm:$0xf]
        %v1900 = vld [vmem:[%s1889 + $0x28] sm:$0xf]
        %v1901 = vld [vmem:[%s1889 + $0x2c] sm:$0xf]
        %v1902 = vld [vmem:[%s1889 + $0x30] sm:$0xf]
        %v1903 = vld [vmem:[%s1889 + $0x34] sm:$0xf]
        %v1904 = vld [vmem:[%s1889 + $0x38] sm:$0xf]
        %v1905 = vld [vmem:[%s1889 + $0x3c] sm:$0xf]
        %v1914 = vunpack.c.l.b16 %v1881
        %v1915 = vunpack.c.l.b16 %v1882
        %v1916 = vunpack.c.l.b16 %v1883
        %v1917 = vunpack.c.l.b16 %v1884
        %v1918 = vunpack.c.l.b16 %v1885
        %v1919 = vunpack.c.l.b16 %v1886
        %v1920 = vunpack.c.l.b16 %v1887
        %v1921 = vunpack.c.l.b16 %v1888
        %v1922 = vpack.c.b16 %v1915, %v1914
        %v1923 = vpack.c.b16 %v1917, %v1916
        %v1924 = vpack.c.b16 %v1919, %v1918
        %v1925 = vpack.c.b16 %v1921, %v1920
        %v1946 = vunpack.c.l.b16 %v1890
        %v1947 = vunpack.c.l.b16 %v1891
        %v1948 = vunpack.c.l.b16 %v1892
        %v1949 = vunpack.c.l.b16 %v1893
        %v1950 = vunpack.c.l.b16 %v1894
        %v1951 = vunpack.c.l.b16 %v1895
        %v1952 = vunpack.c.l.b16 %v1896
        %v1953 = vunpack.c.l.b16 %v1897
        %v1954 = vunpack.c.l.b16 %v1898
        %v1955 = vunpack.c.l.b16 %v1899
        %v1956 = vunpack.c.l.b16 %v1900
        %v1957 = vunpack.c.l.b16 %v1901
        %v1958 = vunpack.c.l.b16 %v1902
        %v1959 = vunpack.c.l.b16 %v1903
        %v1960 = vunpack.c.l.b16 %v1904
        %v1961 = vunpack.c.l.b16 %v1905
        %v1962 = vpack.c.b16 %v1947, %v1946
        %v1963 = vpack.c.b16 %v1949, %v1948
        %v1964 = vpack.c.b16 %v1951, %v1950
        %v1965 = vpack.c.b16 %v1953, %v1952
        %v1966 = vpack.c.b16 %v1955, %v1954
        %v1967 = vpack.c.b16 %v1957, %v1956
        %v1968 = vpack.c.b16 %v1959, %v1958
        %v1969 = vpack.c.b16 %v1961, %v1960
        %1978 = vmatprep.subr.bf16.mxu0 0
        %1979 = vmatpush1.bf16.msra.mxu0 %v1962
        %1980 = vmatprep.subr.bf16.mxu0 0
        %1981 = vmatpush1.bf16.msra.mxu0 %v1963
        %1982 = vmatprep.subr.bf16.mxu0 0
        %1983 = vmatpush1.bf16.msra.mxu0 %v1964
        %1984 = vmatprep.subr.bf16.mxu0 0
        %1985 = vmatpush1.bf16.msra.mxu0 %v1965
        %1986 = vmatprep.subr.bf16.mxu0 0
        %1987 = vmatpush1.bf16.msra.mxu0 %v1966
        %1988 = vmatprep.subr.bf16.mxu0 0
        %1989 = vmatpush1.bf16.msra.mxu0 %v1967
        %1990 = vmatprep.subr.bf16.mxu0 0
        %1991 = vmatpush1.bf16.msra.mxu0 %v1968
        %1992 = vmatprep.subr.bf16.mxu0 0
        %1993 = vmatpush1.bf16.msra.mxu0 %v1969
        %1994 = vmatprep.subr.bf16.mxu0 0
        %1995 = vmatpush1.bf16.msra.mxu0 0
        %1996 = vmatprep.subr.bf16.mxu0 0
        %1997 = vmatpush1.bf16.msra.mxu0 0
        %1998 = vmatprep.subr.bf16.mxu0 0
        %1999 = vmatpush1.bf16.msra.mxu0 0
        %2000 = vmatprep.subr.bf16.mxu0 0
        %2001 = vmatpush1.bf16.msra.mxu0 0
        %2002 = vmatprep.subr.bf16.mxu0 0
        %2003 = vmatpush1.bf16.msra.mxu0 0
        %2004 = vmatprep.subr.bf16.mxu0 0
        %2005 = vmatpush1.bf16.msra.mxu0 0
        %2006 = vmatprep.subr.bf16.mxu0 0
        %2007 = vmatpush1.bf16.msra.mxu0 0
        %2008 = vmatprep.subr.bf16.mxu0 0
        %2009 = vmatpush1.bf16.msra.mxu0 0
        %2010 = vmatprep.mubr.bf16.mxu0 0
        %2011 = vmatmul.mubr.bf16.gmra.mrb[0].mxu0 %v1922
        %v2012 = vpop.f32.mrb[0].mxu0
        %v2013 = vadd.f32 0.0, %v2012
        %v2014 = vpop.f32.mrb[0].mxu0
        %v2015 = vpop.f32.mrb[0].mxu0
        %v2016 = vadd.f32 0.0, %v2015
        %v2017 = vpop.f32.mrb[0].mxu0
        %2018 = vmatprep.mubr.bf16.mxu0 0
        %2019 = vmatmul.mubr.bf16.gmra.mrb[0].mxu0 %v1923
        %v2020 = vpop.f32.mrb[0].mxu0
        %v2021 = vadd.f32 0.0, %v2020
        %v2022 = vpop.f32.mrb[0].mxu0
        %v2023 = vpop.f32.mrb[0].mxu0
        %v2024 = vadd.f32 0.0, %v2023
        %v2025 = vpop.f32.mrb[0].mxu0
        %2026 = vmatprep.mubr.bf16.mxu0 0
        %2027 = vmatmul.mubr.bf16.gmra.mrb[0].mxu0 %v1924
        %v2028 = vpop.f32.mrb[0].mxu0
        %v2029 = vadd.f32 0.0, %v2028
        %v2030 = vpop.f32.mrb[0].mxu0
        %v2031 = vpop.f32.mrb[0].mxu0
        %v2032 = vadd.f32 0.0, %v2031
        %v2033 = vpop.f32.mrb[0].mxu0
        %2034 = vmatprep.mubr.bf16.mxu0 0
        %2035 = vmatmul.mubr.bf16.gmra.mrb[0].mxu0 %v1925
        %v2036 = vpop.f32.mrb[0].mxu0
        %v2037 = vadd.f32 0.0, %v2036
        %v2038 = vpop.f32.mrb[0].mxu0
        %v2039 = vpop.f32.mrb[0].mxu0
        %v2040 = vadd.f32 0.0, %v2039
        %v2041 = vpop.f32.mrb[0].mxu0
        %2042 = vdwg.mxu0
        %v2043 = vadd.f32 %v1872, %v2013
        %v2044 = vadd.f32 %v1873, %v2016
        %v2045 = vadd.f32 %v1874, %v2021
        %v2046 = vadd.f32 %v1875, %v2024
        %v2047 = vadd.f32 %v1876, %v2029
        %v2048 = vadd.f32 %v1877, %v2032
        %v2049 = vadd.f32 %v1878, %v2037
        %v2050 = vadd.f32 %v1879, %v2040
        %v2051 = vld [vmem:[%s1880] sm:$0xf]
        %v2052 = vld [vmem:[%s1880 + $0x4] sm:$0x1]
        %v2053 = vld [vmem:[%s1880 + $0x8] sm:$0xf]
        %v2054 = vld [vmem:[%s1880 + $0xc] sm:$0x1]
        %v2055 = vld [vmem:[%s1880 + $0x10] sm:$0xf]
        %v2056 = vld [vmem:[%s1880 + $0x14] sm:$0x1]
        %v2057 = vld [vmem:[%s1880 + $0x18] sm:$0xf]
        %v2058 = vld [vmem:[%s1880 + $0x1c] sm:$0x1]
        %v2059 = vld [vmem:[%s1880 + $0x20] sm:$0xf]
        %v2060 = vld [vmem:[%s1880 + $0x24] sm:$0x1]
        %v2061 = vld [vmem:[%s1880 + $0x28] sm:$0xf]
        %v2062 = vld [vmem:[%s1880 + $0x2c] sm:$0x1]
        %v2063 = vld [vmem:[%s1880 + $0x30] sm:$0xf]
        %v2064 = vld [vmem:[%s1880 + $0x34] sm:$0x1]
        %v2065 = vld [vmem:[%s1880 + $0x38] sm:$0xf]
        %v2066 = vld [vmem:[%s1880 + $0x3c] sm:$0x1]
        %v2068 = vshrl.u32 %v2051, 16
        %v2070 = vrot.slane %v2068, 4
        %v2071 = vshll.u32 %v2051, 16
        %v2073 = vrot.slane %v2071, 5
        %v2074 = vor.u32 %v2070, %v2073
        %v2075 = vrot.slane %v2074, 4
        %v2077 = vshll.u32 %v2052, 16
        %v2079 = vrot.slane %v2077, 5
        %v2080 = vsel %vm609, %v2075, %v2079
        %v2082 = vshrl.u32 %v2053, 16
        %v2084 = vrot.slane %v2082, 4
        %v2085 = vshll.u32 %v2053, 16
        %v2087 = vrot.slane %v2085, 5
        %v2088 = vor.u32 %v2084, %v2087
        %v2089 = vrot.slane %v2088, 4
        %v2091 = vshll.u32 %v2054, 16
        %v2093 = vrot.slane %v2091, 5
        %v2094 = vsel %vm609, %v2089, %v2093
        %v2096 = vshrl.u32 %v2055, 16
        %v2098 = vrot.slane %v2096, 4
        %v2099 = vshll.u32 %v2055, 16
        %v2101 = vrot.slane %v2099, 5
        %v2102 = vor.u32 %v2098, %v2101
        %v2103 = vrot.slane %v2102, 4
        %v2105 = vshll.u32 %v2056, 16
        %v2107 = vrot.slane %v2105, 5
        %v2108 = vsel %vm609, %v2103, %v2107
        %v2110 = vshrl.u32 %v2057, 16
        %v2112 = vrot.slane %v2110, 4
        %v2113 = vshll.u32 %v2057, 16
        %v2115 = vrot.slane %v2113, 5
        %v2116 = vor.u32 %v2112, %v2115
        %v2117 = vrot.slane %v2116, 4
        %v2119 = vshll.u32 %v2058, 16
        %v2121 = vrot.slane %v2119, 5
        %v2122 = vsel %vm609, %v2117, %v2121
        %v2124 = vshrl.u32 %v2059, 16
        %v2126 = vrot.slane %v2124, 4
        %v2127 = vshll.u32 %v2059, 16
        %v2129 = vrot.slane %v2127, 5
        %v2130 = vor.u32 %v2126, %v2129
        %v2131 = vrot.slane %v2130, 4
        %v2133 = vshll.u32 %v2060, 16
        %v2135 = vrot.slane %v2133, 5
        %v2136 = vsel %vm609, %v2131, %v2135
        %v2138 = vshrl.u32 %v2061, 16
        %v2140 = vrot.slane %v2138, 4
        %v2141 = vshll.u32 %v2061, 16
        %v2143 = vrot.slane %v2141, 5
        %v2144 = vor.u32 %v2140, %v2143
        %v2145 = vrot.slane %v2144, 4
        %v2147 = vshll.u32 %v2062, 16
        %v2149 = vrot.slane %v2147, 5
        %v2150 = vsel %vm609, %v2145, %v2149
        %v2152 = vshrl.u32 %v2063, 16
        %v2154 = vrot.slane %v2152, 4
        %v2155 = vshll.u32 %v2063, 16
        %v2157 = vrot.slane %v2155, 5
        %v2158 = vor.u32 %v2154, %v2157
        %v2159 = vrot.slane %v2158, 4
        %v2161 = vshll.u32 %v2064, 16
        %v2163 = vrot.slane %v2161, 5
        %v2164 = vsel %vm609, %v2159, %v2163
        %v2166 = vshrl.u32 %v2065, 16
        %v2168 = vrot.slane %v2166, 4
        %v2169 = vshll.u32 %v2065, 16
        %v2171 = vrot.slane %v2169, 5
        %v2172 = vor.u32 %v2168, %v2171
        %v2173 = vrot.slane %v2172, 4
        %v2175 = vshll.u32 %v2066, 16
        %v2177 = vrot.slane %v2175, 5
        %v2178 = vsel %vm609, %v2173, %v2177
        %s2179 = scalar_lea.vmem [#allocation6], 448
        %v2180 = vld [vmem:[%s2179] sm:$0xf]
        %v2181 = vld [vmem:[%s2179 + $0x4] sm:$0xf]
        %v2182 = vld [vmem:[%s2179 + $0x8] sm:$0xf]
        %v2183 = vld [vmem:[%s2179 + $0xc] sm:$0xf]
        %v2184 = vld [vmem:[%s2179 + $0x10] sm:$0xf]
        %v2185 = vld [vmem:[%s2179 + $0x14] sm:$0xf]
        %v2186 = vld [vmem:[%s2179 + $0x18] sm:$0xf]
        %v2187 = vld [vmem:[%s2179 + $0x1c] sm:$0xf]
        %v2188 = vld [vmem:[%s2179 + $0x20] sm:$0xf]
        %v2189 = vld [vmem:[%s2179 + $0x24] sm:$0xf]
        %v2190 = vld [vmem:[%s2179 + $0x28] sm:$0xf]
        %v2191 = vld [vmem:[%s2179 + $0x2c] sm:$0xf]
        %v2192 = vld [vmem:[%s2179 + $0x30] sm:$0xf]
        %v2193 = vld [vmem:[%s2179 + $0x34] sm:$0xf]
        %v2194 = vld [vmem:[%s2179 + $0x38] sm:$0xf]
        %v2195 = vld [vmem:[%s2179 + $0x3c] sm:$0xf]
        %v2196 = vunpack.c.l.b16 %v2080
        %v2197 = vunpack.c.l.b16 %v2094
        %v2198 = vunpack.c.l.b16 %v2108
        %v2199 = vunpack.c.l.b16 %v2122
        %v2200 = vunpack.c.l.b16 %v2136
        %v2201 = vunpack.c.l.b16 %v2150
        %v2202 = vunpack.c.l.b16 %v2164
        %v2203 = vunpack.c.l.b16 %v2178
        %v2204 = vpack.c.b16 %v2197, %v2196
        %v2205 = vpack.c.b16 %v2199, %v2198
        %v2206 = vpack.c.b16 %v2201, %v2200
        %v2207 = vpack.c.b16 %v2203, %v2202
        %v2228 = vunpack.c.l.b16 %v2180
        %v2229 = vunpack.c.l.b16 %v2181
        %v2230 = vunpack.c.l.b16 %v2182
        %v2231 = vunpack.c.l.b16 %v2183
        %v2232 = vunpack.c.l.b16 %v2184
        %v2233 = vunpack.c.l.b16 %v2185
        %v2234 = vunpack.c.l.b16 %v2186
        %v2235 = vunpack.c.l.b16 %v2187
        %v2236 = vunpack.c.l.b16 %v2188
        %v2237 = vunpack.c.l.b16 %v2189
        %v2238 = vunpack.c.l.b16 %v2190
        %v2239 = vunpack.c.l.b16 %v2191
        %v2240 = vunpack.c.l.b16 %v2192
        %v2241 = vunpack.c.l.b16 %v2193
        %v2242 = vunpack.c.l.b16 %v2194
        %v2243 = vunpack.c.l.b16 %v2195
        %v2244 = vpack.c.b16 %v2229, %v2228
        %v2245 = vpack.c.b16 %v2231, %v2230
        %v2246 = vpack.c.b16 %v2233, %v2232
        %v2247 = vpack.c.b16 %v2235, %v2234
        %v2248 = vpack.c.b16 %v2237, %v2236
        %v2249 = vpack.c.b16 %v2239, %v2238
        %v2250 = vpack.c.b16 %v2241, %v2240
        %v2251 = vpack.c.b16 %v2243, %v2242
        %2260 = vmatprep.subr.bf16.mxu0 0
        %2261 = vmatpush1.bf16.msra.mxu0 %v2244
        %2262 = vmatprep.subr.bf16.mxu0 0
        %2263 = vmatpush1.bf16.msra.mxu0 %v2245
        %2264 = vmatprep.subr.bf16.mxu0 0
        %2265 = vmatpush1.bf16.msra.mxu0 %v2246
        %2266 = vmatprep.subr.bf16.mxu0 0
        %2267 = vmatpush1.bf16.msra.mxu0 %v2247
        %2268 = vmatprep.subr.bf16.mxu0 0
        %2269 = vmatpush1.bf16.msra.mxu0 %v2248
        %2270 = vmatprep.subr.bf16.mxu0 0
        %2271 = vmatpush1.bf16.msra.mxu0 %v2249
        %2272 = vmatprep.subr.bf16.mxu0 0
        %2273 = vmatpush1.bf16.msra.mxu0 %v2250
        %2274 = vmatprep.subr.bf16.mxu0 0
        %2275 = vmatpush1.bf16.msra.mxu0 %v2251
        %2276 = vmatprep.subr.bf16.mxu0 0
        %2277 = vmatpush1.bf16.msra.mxu0 0
        %2278 = vmatprep.subr.bf16.mxu0 0
        %2279 = vmatpush1.bf16.msra.mxu0 0
        %2280 = vmatprep.subr.bf16.mxu0 0
        %2281 = vmatpush1.bf16.msra.mxu0 0
        %2282 = vmatprep.subr.bf16.mxu0 0
        %2283 = vmatpush1.bf16.msra.mxu0 0
        %2284 = vmatprep.subr.bf16.mxu0 0
        %2285 = vmatpush1.bf16.msra.mxu0 0
        %2286 = vmatprep.subr.bf16.mxu0 0
        %2287 = vmatpush1.bf16.msra.mxu0 0
        %2288 = vmatprep.subr.bf16.mxu0 0
        %2289 = vmatpush1.bf16.msra.mxu0 0
        %2290 = vmatprep.subr.bf16.mxu0 0
        %2291 = vmatpush1.bf16.msra.mxu0 0
        %2292 = vmatprep.mubr.bf16.mxu0 0
        %2293 = vmatmul.mubr.bf16.gmra.mrb[0].mxu0 %v2204
        %v2294 = vpop.f32.mrb[0].mxu0
        %v2295 = vadd.f32 0.0, %v2294
        %v2296 = vpop.f32.mrb[0].mxu0
        %v2297 = vpop.f32.mrb[0].mxu0
        %v2298 = vadd.f32 0.0, %v2297
        %v2299 = vpop.f32.mrb[0].mxu0
        %2300 = vmatprep.mubr.bf16.mxu0 0
        %2301 = vmatmul.mubr.bf16.gmra.mrb[0].mxu0 %v2205
        %v2302 = vpop.f32.mrb[0].mxu0
        %v2303 = vadd.f32 0.0, %v2302
        %v2304 = vpop.f32.mrb[0].mxu0
        %v2305 = vpop.f32.mrb[0].mxu0
        %v2306 = vadd.f32 0.0, %v2305
        %v2307 = vpop.f32.mrb[0].mxu0
        %2308 = vmatprep.mubr.bf16.mxu0 0
        %2309 = vmatmul.mubr.bf16.gmra.mrb[0].mxu0 %v2206
        %v2310 = vpop.f32.mrb[0].mxu0
        %v2311 = vadd.f32 0.0, %v2310
        %v2312 = vpop.f32.mrb[0].mxu0
        %v2313 = vpop.f32.mrb[0].mxu0
        %v2314 = vadd.f32 0.0, %v2313
        %v2315 = vpop.f32.mrb[0].mxu0
        %2316 = vmatprep.mubr.bf16.mxu0 0
        %2317 = vmatmul.mubr.bf16.gmra.mrb[0].mxu0 %v2207
        %v2318 = vpop.f32.mrb[0].mxu0
        %v2319 = vadd.f32 0.0, %v2318
        %v2320 = vpop.f32.mrb[0].mxu0
        %v2321 = vpop.f32.mrb[0].mxu0
        %v2322 = vadd.f32 0.0, %v2321
        %v2323 = vpop.f32.mrb[0].mxu0
        %2324 = vdwg.mxu0
        %v2325 = vadd.f32 %v2043, %v2295
        %v2326 = vadd.f32 %v2044, %v2298
        %v2327 = vadd.f32 %v2045, %v2303
        %v2328 = vadd.f32 %v2046, %v2306
        %v2329 = vadd.f32 %v2047, %v2311
        %v2330 = vadd.f32 %v2048, %v2314
        %v2331 = vadd.f32 %v2049, %v2319
        %v2332 = vadd.f32 %v2050, %v2322
        %v2333 = vld [vmem:[%s1880] sm:$0xe]
        %v2334 = vld [vmem:[%s1880 + $0x8] sm:$0xe]
        %v2335 = vld [vmem:[%s1880 + $0x10] sm:$0xe]
        %v2336 = vld [vmem:[%s1880 + $0x18] sm:$0xe]
        %v2337 = vld [vmem:[%s1880 + $0x20] sm:$0xe]
        %v2338 = vld [vmem:[%s1880 + $0x28] sm:$0xe]
        %v2339 = vld [vmem:[%s1880 + $0x30] sm:$0xe]
        %v2340 = vld [vmem:[%s1880 + $0x38] sm:$0xe]
        %v2357 = vrot.slane %v2333, 5
        %v2358 = vrot.slane %v2357, 4
        %v2359 = vrot.slane %v2052, 5
        %v2360 = vsel %vm1031, %v2358, %v2359
        %v2361 = vrot.slane %v2334, 5
        %v2362 = vrot.slane %v2361, 4
        %v2363 = vrot.slane %v2054, 5
        %v2364 = vsel %vm1031, %v2362, %v2363
        %v2365 = vrot.slane %v2335, 5
        %v2366 = vrot.slane %v2365, 4
        %v2367 = vrot.slane %v2056, 5
        %v2368 = vsel %vm1031, %v2366, %v2367
        %v2369 = vrot.slane %v2336, 5
        %v2370 = vrot.slane %v2369, 4
        %v2371 = vrot.slane %v2058, 5
        %v2372 = vsel %vm1031, %v2370, %v2371
        %v2373 = vrot.slane %v2337, 5
        %v2374 = vrot.slane %v2373, 4
        %v2375 = vrot.slane %v2060, 5
        %v2376 = vsel %vm1031, %v2374, %v2375
        %v2377 = vrot.slane %v2338, 5
        %v2378 = vrot.slane %v2377, 4
        %v2379 = vrot.slane %v2062, 5
        %v2380 = vsel %vm1031, %v2378, %v2379
        %v2381 = vrot.slane %v2339, 5
        %v2382 = vrot.slane %v2381, 4
        %v2383 = vrot.slane %v2064, 5
        %v2384 = vsel %vm1031, %v2382, %v2383
        %v2385 = vrot.slane %v2340, 5
        %v2386 = vrot.slane %v2385, 4
        %v2387 = vrot.slane %v2066, 5
        %v2388 = vsel %vm1031, %v2386, %v2387
        %s2389 = scalar_lea.vmem [#allocation6], 512
        %v2390 = vld [vmem:[%s2389] sm:$0xf]
        %v2391 = vld [vmem:[%s2389 + $0x4] sm:$0xf]
        %v2392 = vld [vmem:[%s2389 + $0x8] sm:$0xf]
        %v2393 = vld [vmem:[%s2389 + $0xc] sm:$0xf]
        %v2394 = vld [vmem:[%s2389 + $0x10] sm:$0xf]
        %v2395 = vld [vmem:[%s2389 + $0x14] sm:$0xf]
        %v2396 = vld [vmem:[%s2389 + $0x18] sm:$0xf]
        %v2397 = vld [vmem:[%s2389 + $0x1c] sm:$0xf]
        %v2398 = vld [vmem:[%s2389 + $0x20] sm:$0xf]
        %v2399 = vld [vmem:[%s2389 + $0x24] sm:$0xf]
        %v2400 = vld [vmem:[%s2389 + $0x28] sm:$0xf]
        %v2401 = vld [vmem:[%s2389 + $0x2c] sm:$0xf]
        %v2402 = vld [vmem:[%s2389 + $0x30] sm:$0xf]
        %v2403 = vld [vmem:[%s2389 + $0x34] sm:$0xf]
        %v2404 = vld [vmem:[%s2389 + $0x38] sm:$0xf]
        %v2405 = vld [vmem:[%s2389 + $0x3c] sm:$0xf]
        %v2406 = vunpack.c.l.b16 %v2360
        %v2407 = vunpack.c.l.b16 %v2364
        %v2408 = vunpack.c.l.b16 %v2368
        %v2409 = vunpack.c.l.b16 %v2372
        %v2410 = vunpack.c.l.b16 %v2376
        %v2411 = vunpack.c.l.b16 %v2380
        %v2412 = vunpack.c.l.b16 %v2384
        %v2413 = vunpack.c.l.b16 %v2388
        %v2414 = vpack.c.b16 %v2407, %v2406
        %v2415 = vpack.c.b16 %v2409, %v2408
        %v2416 = vpack.c.b16 %v2411, %v2410
        %v2417 = vpack.c.b16 %v2413, %v2412
        %v2438 = vunpack.c.l.b16 %v2390
        %v2439 = vunpack.c.l.b16 %v2391
        %v2440 = vunpack.c.l.b16 %v2392
        %v2441 = vunpack.c.l.b16 %v2393
        %v2442 = vunpack.c.l.b16 %v2394
        %v2443 = vunpack.c.l.b16 %v2395
        %v2444 = vunpack.c.l.b16 %v2396
        %v2445 = vunpack.c.l.b16 %v2397
        %v2446 = vunpack.c.l.b16 %v2398
        %v2447 = vunpack.c.l.b16 %v2399
        %v2448 = vunpack.c.l.b16 %v2400
        %v2449 = vunpack.c.l.b16 %v2401
        %v2450 = vunpack.c.l.b16 %v2402
        %v2451 = vunpack.c.l.b16 %v2403
        %v2452 = vunpack.c.l.b16 %v2404
        %v2453 = vunpack.c.l.b16 %v2405
        %v2454 = vpack.c.b16 %v2439, %v2438
        %v2455 = vpack.c.b16 %v2441, %v2440
        %v2456 = vpack.c.b16 %v2443, %v2442
        %v2457 = vpack.c.b16 %v2445, %v2444
        %v2458 = vpack.c.b16 %v2447, %v2446
        %v2459 = vpack.c.b16 %v2449, %v2448
        %v2460 = vpack.c.b16 %v2451, %v2450
        %v2461 = vpack.c.b16 %v2453, %v2452
        %2470 = vmatprep.subr.bf16.mxu0 0
        %2471 = vmatpush1.bf16.msra.mxu0 %v2454
        %2472 = vmatprep.subr.bf16.mxu0 0
        %2473 = vmatpush1.bf16.msra.mxu0 %v2455
        %2474 = vmatprep.subr.bf16.mxu0 0
        %2475 = vmatpush1.bf16.msra.mxu0 %v2456
        %2476 = vmatprep.subr.bf16.mxu0 0
        %2477 = vmatpush1.bf16.msra.mxu0 %v2457
        %2478 = vmatprep.subr.bf16.mxu0 0
        %2479 = vmatpush1.bf16.msra.mxu0 %v2458
        %2480 = vmatprep.subr.bf16.mxu0 0
        %2481 = vmatpush1.bf16.msra.mxu0 %v2459
        %2482 = vmatprep.subr.bf16.mxu0 0
        %2483 = vmatpush1.bf16.msra.mxu0 %v2460
        %2484 = vmatprep.subr.bf16.mxu0 0
        %2485 = vmatpush1.bf16.msra.mxu0 %v2461
        %2486 = vmatprep.subr.bf16.mxu0 0
        %2487 = vmatpush1.bf16.msra.mxu0 0
        %2488 = vmatprep.subr.bf16.mxu0 0
        %2489 = vmatpush1.bf16.msra.mxu0 0
        %2490 = vmatprep.subr.bf16.mxu0 0
        %2491 = vmatpush1.bf16.msra.mxu0 0
        %2492 = vmatprep.subr.bf16.mxu0 0
        %2493 = vmatpush1.bf16.msra.mxu0 0
        %2494 = vmatprep.subr.bf16.mxu0 0
        %2495 = vmatpush1.bf16.msra.mxu0 0
        %2496 = vmatprep.subr.bf16.mxu0 0
        %2497 = vmatpush1.bf16.msra.mxu0 0
        %2498 = vmatprep.subr.bf16.mxu0 0
        %2499 = vmatpush1.bf16.msra.mxu0 0
        %2500 = vmatprep.subr.bf16.mxu0 0
        %2501 = vmatpush1.bf16.msra.mxu0 0
        %2502 = vmatprep.mubr.bf16.mxu0 0
        %2503 = vmatmul.mubr.bf16.gmra.mrb[0].mxu0 %v2414
        %v2504 = vpop.f32.mrb[0].mxu0
        %v2505 = vadd.f32 0.0, %v2504
        %v2506 = vpop.f32.mrb[0].mxu0
        %v2507 = vpop.f32.mrb[0].mxu0
        %v2508 = vadd.f32 0.0, %v2507
        %v2509 = vpop.f32.mrb[0].mxu0
        %2510 = vmatprep.mubr.bf16.mxu0 0
        %2511 = vmatmul.mubr.bf16.gmra.mrb[0].mxu0 %v2415
        %v2512 = vpop.f32.mrb[0].mxu0
        %v2513 = vadd.f32 0.0, %v2512
        %v2514 = vpop.f32.mrb[0].mxu0
        %v2515 = vpop.f32.mrb[0].mxu0
        %v2516 = vadd.f32 0.0, %v2515
        %v2517 = vpop.f32.mrb[0].mxu0
        %2518 = vmatprep.mubr.bf16.mxu0 0
        %2519 = vmatmul.mubr.bf16.gmra.mrb[0].mxu0 %v2416
        %v2520 = vpop.f32.mrb[0].mxu0
        %v2521 = vadd.f32 0.0, %v2520
        %v2522 = vpop.f32.mrb[0].mxu0
        %v2523 = vpop.f32.mrb[0].mxu0
        %v2524 = vadd.f32 0.0, %v2523
        %v2525 = vpop.f32.mrb[0].mxu0
        %2526 = vmatprep.mubr.bf16.mxu0 0
        %2527 = vmatmul.mubr.bf16.gmra.mrb[0].mxu0 %v2417
        %v2528 = vpop.f32.mrb[0].mxu0
        %v2529 = vadd.f32 0.0, %v2528
        %v2530 = vpop.f32.mrb[0].mxu0
        %v2531 = vpop.f32.mrb[0].mxu0
        %v2532 = vadd.f32 0.0, %v2531
        %v2533 = vpop.f32.mrb[0].mxu0
        %2534 = vdwg.mxu0
        %v2535 = vadd.f32 %v2325, %v2505
        %v2536 = vadd.f32 %v2326, %v2508
        %v2537 = vadd.f32 %v2327, %v2513
        %v2538 = vadd.f32 %v2328, %v2516
        %v2539 = vadd.f32 %v2329, %v2521
        %v2540 = vadd.f32 %v2330, %v2524
        %v2541 = vadd.f32 %v2331, %v2529
        %v2542 = vadd.f32 %v2332, %v2532
        %v2543 = vld [vmem:[%s2] sm:$0x1]
        %v2545 = vlaneseq
        %v2546 = vshrl.u32 %v2545, 7
        %v2547 = vsub.s32 0, %v2546
        %v2548 = vrot.slane %v2543, %v2547
        %v2550 = vmul.f32 %v2535, %v2548
        %v2551 = vmul.f32 %v2536, %v2548
        %v2552 = vmul.f32 %v2537, %v2548
        %v2553 = vmul.f32 %v2538, %v2548
        %v2554 = vmul.f32 %v2539, %v2548
        %v2555 = vmul.f32 %v2540, %v2548
        %v2556 = vmul.f32 %v2541, %v2548
        %v2557 = vmul.f32 %v2542, %v2548
        %v2558 = vld [vmem:[%s3] sm:$0x1]
        %v2560 = vlaneseq
        %v2561 = vshrl.u32 %v2560, 7
        %v2562 = vsub.s32 0, %v2561
        %v2563 = vrot.slane %v2558, %v2562
        %v2565 = vadd.f32 %v2550, %v2563
        %v2566 = vadd.f32 %v2551, %v2563
        %v2567 = vadd.f32 %v2552, %v2563
        %v2568 = vadd.f32 %v2553, %v2563
        %v2569 = vadd.f32 %v2554, %v2563
        %v2570 = vadd.f32 %v2555, %v2563
        %v2571 = vadd.f32 %v2556, %v2563
        %v2572 = vadd.f32 %v2557, %v2563
        %v2573 = vmax.f32 %v2565, 0.0
        %v2574 = vmax.f32 %v2566, 0.0
        %v2575 = vmax.f32 %v2567, 0.0
        %v2576 = vmax.f32 %v2568, 0.0
        %v2577 = vmax.f32 %v2569, 0.0
        %v2578 = vmax.f32 %v2570, 0.0
        %v2579 = vmax.f32 %v2571, 0.0
        %v2580 = vmax.f32 %v2572, 0.0
        %v2581 = vpack.c.bf16 %v2573, %v2573
        %v2582 = vpack.c.bf16 %v2574, %v2574
        %v2583 = vpack.c.bf16 %v2575, %v2575
        %v2584 = vpack.c.bf16 %v2576, %v2576
        %v2585 = vpack.c.bf16 %v2577, %v2577
        %v2586 = vpack.c.bf16 %v2578, %v2578
        %v2587 = vpack.c.bf16 %v2579, %v2579
        %v2588 = vpack.c.bf16 %v2580, %v2580
        %v2597 = vunpack.c.l.b16 %v2581
        %v2598 = vunpack.c.l.b16 %v2582
        %v2599 = vunpack.c.l.b16 %v2583
        %v2600 = vunpack.c.l.b16 %v2584
        %v2601 = vunpack.c.l.b16 %v2585
        %v2602 = vunpack.c.l.b16 %v2586
        %v2603 = vunpack.c.l.b16 %v2587
        %v2604 = vunpack.c.l.b16 %v2588
        %v2605 = vpack.c.b16 %v2597, %v2597
        %v2606 = vpack.c.b16 %v2598, %v2598
        %v2607 = vpack.c.b16 %v2599, %v2599
        %v2608 = vpack.c.b16 %v2600, %v2600
        %v2609 = vpack.c.b16 %v2601, %v2601
        %v2610 = vpack.c.b16 %v2602, %v2602
        %v2611 = vpack.c.b16 %v2603, %v2603
        %v2612 = vpack.c.b16 %v2604, %v2604
        %v2614 = vshrl.u32 %v2605, 16
        %v2616 = vrot.slane %v2614, 7
        %v2617 = vshll.u32 %v2605, 16
        %v2619 = vor.u32 %v2616, %v2617
        %v2620 = vrot.slane %v2616, 4
        %v2622 = vshrl.u32 %v2606, 16
        %v2624 = vrot.slane %v2622, 7
        %v2625 = vshll.u32 %v2606, 16
        %v2627 = vor.u32 %v2624, %v2625
        %v2628 = vrot.slane %v2624, 4
        %v2630 = vshrl.u32 %v2607, 16
        %v2632 = vrot.slane %v2630, 7
        %v2633 = vshll.u32 %v2607, 16
        %v2635 = vor.u32 %v2632, %v2633
        %v2636 = vrot.slane %v2632, 4
        %v2638 = vshrl.u32 %v2608, 16
        %v2640 = vrot.slane %v2638, 7
        %v2641 = vshll.u32 %v2608, 16
        %v2643 = vor.u32 %v2640, %v2641
        %v2644 = vrot.slane %v2640, 4
        %v2646 = vshrl.u32 %v2609, 16
        %v2648 = vrot.slane %v2646, 7
        %v2649 = vshll.u32 %v2609, 16
        %v2651 = vor.u32 %v2648, %v2649
        %v2652 = vrot.slane %v2648, 4
        %v2654 = vshrl.u32 %v2610, 16
        %v2656 = vrot.slane %v2654, 7
        %v2657 = vshll.u32 %v2610, 16
        %v2659 = vor.u32 %v2656, %v2657
        %v2660 = vrot.slane %v2656, 4
        %v2662 = vshrl.u32 %v2611, 16
        %v2664 = vrot.slane %v2662, 7
        %v2665 = vshll.u32 %v2611, 16
        %v2667 = vor.u32 %v2664, %v2665
        %v2668 = vrot.slane %v2664, 4
        %v2670 = vshrl.u32 %v2612, 16
        %v2672 = vrot.slane %v2670, 7
        %v2673 = vshll.u32 %v2612, 16
        %v2675 = vor.u32 %v2672, %v2673
        %v2676 = vrot.slane %v2672, 4
        %v2693 = vsel %vm526, %v2619, %v1388
        %2694 = vst [vmem:[%s332] sm:$0xf] %v2693
        %v2695 = vld [vmem:[%s332 + $0x4] sm:$0x1]
        %v2696 = vsel %vm335, %v2620, %v2695
        %2697 = vst [vmem:[%s332 + $0x4] sm:$0x1] %v2696
        %v2698 = vld [vmem:[%s332 + $0x8] sm:$0xf]
        %v2699 = vsel %vm526, %v2627, %v2698
        %2700 = vst [vmem:[%s332 + $0x8] sm:$0xf] %v2699
        %v2701 = vld [vmem:[%s332 + $0xc] sm:$0x1]
        %v2702 = vsel %vm335, %v2628, %v2701
        %2703 = vst [vmem:[%s332 + $0xc] sm:$0x1] %v2702
        %v2704 = vld [vmem:[%s332 + $0x10] sm:$0xf]
        %v2705 = vsel %vm526, %v2635, %v2704
        %2706 = vst [vmem:[%s332 + $0x10] sm:$0xf] %v2705
        %v2707 = vld [vmem:[%s332 + $0x14] sm:$0x1]
        %v2708 = vsel %vm335, %v2636, %v2707
        %2709 = vst [vmem:[%s332 + $0x14] sm:$0x1] %v2708
        %v2710 = vld [vmem:[%s332 + $0x18] sm:$0xf]
        %v2711 = vsel %vm526, %v2643, %v2710
        %2712 = vst [vmem:[%s332 + $0x18] sm:$0xf] %v2711
        %v2713 = vld [vmem:[%s332 + $0x1c] sm:$0x1]
        %v2714 = vsel %vm335, %v2644, %v2713
        %2715 = vst [vmem:[%s332 + $0x1c] sm:$0x1] %v2714
        %v2716 = vld [vmem:[%s332 + $0x20] sm:$0xf]
        %v2717 = vsel %vm526, %v2651, %v2716
        %2718 = vst [vmem:[%s332 + $0x20] sm:$0xf] %v2717
        %v2719 = vld [vmem:[%s332 + $0x24] sm:$0x1]
        %v2720 = vsel %vm335, %v2652, %v2719
        %2721 = vst [vmem:[%s332 + $0x24] sm:$0x1] %v2720
        %v2722 = vld [vmem:[%s332 + $0x28] sm:$0xf]
        %v2723 = vsel %vm526, %v2659, %v2722
        %2724 = vst [vmem:[%s332 + $0x28] sm:$0xf] %v2723
        %v2725 = vld [vmem:[%s332 + $0x2c] sm:$0x1]
        %v2726 = vsel %vm335, %v2660, %v2725
        %2727 = vst [vmem:[%s332 + $0x2c] sm:$0x1] %v2726
        %v2728 = vld [vmem:[%s332 + $0x30] sm:$0xf]
        %v2729 = vsel %vm526, %v2667, %v2728
        %2730 = vst [vmem:[%s332 + $0x30] sm:$0xf] %v2729
        %v2731 = vld [vmem:[%s332 + $0x34] sm:$0x1]
        %v2732 = vsel %vm335, %v2668, %v2731
        %2733 = vst [vmem:[%s332 + $0x34] sm:$0x1] %v2732
        %v2734 = vld [vmem:[%s332 + $0x38] sm:$0xf]
        %v2735 = vsel %vm526, %v2675, %v2734
        %2736 = vst [vmem:[%s332 + $0x38] sm:$0xf] %v2735
        %v2737 = vld [vmem:[%s332 + $0x3c] sm:$0x1]
        %v2738 = vsel %vm335, %v2676, %v2737
        %2739 = vst [vmem:[%s332 + $0x3c] sm:$0x1] %v2738
        %v2740 = vld [vmem:[#allocation2] sm:$0xf]
        %v2741 = vld [vmem:[#allocation2 + $0x8] sm:$0xf]
        %v2742 = vld [vmem:[#allocation2 + $0x10] sm:$0xf]
        %v2743 = vld [vmem:[#allocation2 + $0x18] sm:$0xf]
        %v2744 = vld [vmem:[#allocation2 + $0x20] sm:$0xf]
        %v2745 = vld [vmem:[#allocation2 + $0x28] sm:$0xf]
        %v2746 = vld [vmem:[#allocation2 + $0x30] sm:$0xf]
        %v2747 = vld [vmem:[#allocation2 + $0x38] sm:$0xf]
        %v2748 = vld [vmem:[#allocation8] sm:$0xf]
        %v2749 = vld [vmem:[#allocation8 + $0x4] sm:$0xf]
        %v2750 = vld [vmem:[#allocation8 + $0x8] sm:$0xf]
        %v2751 = vld [vmem:[#allocation8 + $0xc] sm:$0xf]
        %v2752 = vld [vmem:[#allocation8 + $0x10] sm:$0xf]
        %v2753 = vld [vmem:[#allocation8 + $0x14] sm:$0xf]
        %v2754 = vld [vmem:[#allocation8 + $0x18] sm:$0xf]
        %v2755 = vld [vmem:[#allocation8 + $0x1c] sm:$0xf]
        %v2756 = vld [vmem:[#allocation8 + $0x20] sm:$0xf]
        %v2757 = vld [vmem:[#allocation8 + $0x24] sm:$0xf]
        %v2758 = vld [vmem:[#allocation8 + $0x28] sm:$0xf]
        %v2759 = vld [vmem:[#allocation8 + $0x2c] sm:$0xf]
        %v2760 = vld [vmem:[#allocation8 + $0x30] sm:$0xf]
        %v2761 = vld [vmem:[#allocation8 + $0x34] sm:$0xf]
        %v2762 = vld [vmem:[#allocation8 + $0x38] sm:$0xf]
        %v2763 = vld [vmem:[#allocation8 + $0x3c] sm:$0xf]
        %v2764 = vld [vmem:[#allocation2 + $0x4] sm:$0x1]
        %v2765 = vld [vmem:[#allocation2 + $0xc] sm:$0x1]
        %v2766 = vld [vmem:[#allocation2 + $0x14] sm:$0x1]
        %v2767 = vld [vmem:[#allocation2 + $0x1c] sm:$0x1]
        %v2768 = vld [vmem:[#allocation2 + $0x24] sm:$0x1]
        %v2769 = vld [vmem:[#allocation2 + $0x2c] sm:$0x1]
        %v2770 = vld [vmem:[#allocation2 + $0x34] sm:$0x1]
        %v2771 = vld [vmem:[#allocation2 + $0x3c] sm:$0x1]
        %v2773 = vshrl.u32 %v2740, 16
        %v2775 = vrot.slane %v2773, 4
        %v2776 = vshll.u32 %v2740, 16
        %v2778 = vrot.slane %v2776, 5
        %v2779 = vor.u32 %v2775, %v2778
        %v2780 = vrot.slane %v2779, 4
        %v2782 = vshll.u32 %v2764, 16
        %v2784 = vrot.slane %v2782, 5
        %v2785 = vsel %vm609, %v2780, %v2784
        %v2787 = vshrl.u32 %v2741, 16
        %v2789 = vrot.slane %v2787, 4
        %v2790 = vshll.u32 %v2741, 16
        %v2792 = vrot.slane %v2790, 5
        %v2793 = vor.u32 %v2789, %v2792
        %v2794 = vrot.slane %v2793, 4
        %v2796 = vshll.u32 %v2765, 16
        %v2798 = vrot.slane %v2796, 5
        %v2799 = vsel %vm609, %v2794, %v2798
        %v2801 = vshrl.u32 %v2742, 16
        %v2803 = vrot.slane %v2801, 4
        %v2804 = vshll.u32 %v2742, 16
        %v2806 = vrot.slane %v2804, 5
        %v2807 = vor.u32 %v2803, %v2806
        %v2808 = vrot.slane %v2807, 4
        %v2810 = vshll.u32 %v2766, 16
        %v2812 = vrot.slane %v2810, 5
        %v2813 = vsel %vm609, %v2808, %v2812
        %v2815 = vshrl.u32 %v2743, 16
        %v2817 = vrot.slane %v2815, 4
        %v2818 = vshll.u32 %v2743, 16
        %v2820 = vrot.slane %v2818, 5
        %v2821 = vor.u32 %v2817, %v2820
        %v2822 = vrot.slane %v2821, 4
        %v2824 = vshll.u32 %v2767, 16
        %v2826 = vrot.slane %v2824, 5
        %v2827 = vsel %vm609, %v2822, %v2826
        %v2829 = vshrl.u32 %v2744, 16
        %v2831 = vrot.slane %v2829, 4
        %v2832 = vshll.u32 %v2744, 16
        %v2834 = vrot.slane %v2832, 5
        %v2835 = vor.u32 %v2831, %v2834
        %v2836 = vrot.slane %v2835, 4
        %v2838 = vshll.u32 %v2768, 16
        %v2840 = vrot.slane %v2838, 5
        %v2841 = vsel %vm609, %v2836, %v2840
        %v2843 = vshrl.u32 %v2745, 16
        %v2845 = vrot.slane %v2843, 4
        %v2846 = vshll.u32 %v2745, 16
        %v2848 = vrot.slane %v2846, 5
        %v2849 = vor.u32 %v2845, %v2848
        %v2850 = vrot.slane %v2849, 4
        %v2852 = vshll.u32 %v2769, 16
        %v2854 = vrot.slane %v2852, 5
        %v2855 = vsel %vm609, %v2850, %v2854
        %v2857 = vshrl.u32 %v2746, 16
        %v2859 = vrot.slane %v2857, 4
        %v2860 = vshll.u32 %v2746, 16
        %v2862 = vrot.slane %v2860, 5
        %v2863 = vor.u32 %v2859, %v2862
        %v2864 = vrot.slane %v2863, 4
        %v2866 = vshll.u32 %v2770, 16
        %v2868 = vrot.slane %v2866, 5
        %v2869 = vsel %vm609, %v2864, %v2868
        %v2871 = vshrl.u32 %v2747, 16
        %v2873 = vrot.slane %v2871, 4
        %v2874 = vshll.u32 %v2747, 16
        %v2876 = vrot.slane %v2874, 5
        %v2877 = vor.u32 %v2873, %v2876
        %v2878 = vrot.slane %v2877, 4
        %v2880 = vshll.u32 %v2771, 16
        %v2882 = vrot.slane %v2880, 5
        %v2883 = vsel %vm609, %v2878, %v2882
        %s2884 = scalar_lea.vmem [#allocation8], 64
        %v2885 = vld [vmem:[%s2884] sm:$0xf]
        %v2886 = vld [vmem:[%s2884 + $0x4] sm:$0xf]
        %v2887 = vld [vmem:[%s2884 + $0x8] sm:$0xf]
        %v2888 = vld [vmem:[%s2884 + $0xc] sm:$0xf]
        %v2889 = vld [vmem:[%s2884 + $0x10] sm:$0xf]
        %v2890 = vld [vmem:[%s2884 + $0x14] sm:$0xf]
        %v2891 = vld [vmem:[%s2884 + $0x18] sm:$0xf]
        %v2892 = vld [vmem:[%s2884 + $0x1c] sm:$0xf]
        %v2893 = vld [vmem:[%s2884 + $0x20] sm:$0xf]
        %v2894 = vld [vmem:[%s2884 + $0x24] sm:$0xf]
        %v2895 = vld [vmem:[%s2884 + $0x28] sm:$0xf]
        %v2896 = vld [vmem:[%s2884 + $0x2c] sm:$0xf]
        %v2897 = vld [vmem:[%s2884 + $0x30] sm:$0xf]
        %v2898 = vld [vmem:[%s2884 + $0x34] sm:$0xf]
        %v2899 = vld [vmem:[%s2884 + $0x38] sm:$0xf]
        %v2900 = vld [vmem:[%s2884 + $0x3c] sm:$0xf]
        %v2901 = vunpack.c.l.b16 %v2785
        %v2902 = vunpack.c.l.b16 %v2799
        %v2903 = vunpack.c.l.b16 %v2813
        %v2904 = vunpack.c.l.b16 %v2827
        %v2905 = vunpack.c.l.b16 %v2841
        %v2906 = vunpack.c.l.b16 %v2855
        %v2907 = vunpack.c.l.b16 %v2869
        %v2908 = vunpack.c.l.b16 %v2883
        %v2909 = vpack.c.b16 %v2902, %v2901
        %v2910 = vpack.c.b16 %v2904, %v2903
        %v2911 = vpack.c.b16 %v2906, %v2905
        %v2912 = vpack.c.b16 %v2908, %v2907
        %v2933 = vunpack.c.l.b16 %v2885
        %v2934 = vunpack.c.l.b16 %v2886
        %v2935 = vunpack.c.l.b16 %v2887
        %v2936 = vunpack.c.l.b16 %v2888
        %v2937 = vunpack.c.l.b16 %v2889
        %v2938 = vunpack.c.l.b16 %v2890
        %v2939 = vunpack.c.l.b16 %v2891
        %v2940 = vunpack.c.l.b16 %v2892
        %v2941 = vunpack.c.l.b16 %v2893
        %v2942 = vunpack.c.l.b16 %v2894
        %v2943 = vunpack.c.l.b16 %v2895
        %v2944 = vunpack.c.l.b16 %v2896
        %v2945 = vunpack.c.l.b16 %v2897
        %v2946 = vunpack.c.l.b16 %v2898
        %v2947 = vunpack.c.l.b16 %v2899
        %v2948 = vunpack.c.l.b16 %v2900
        %v2949 = vpack.c.b16 %v2934, %v2933
        %v2950 = vpack.c.b16 %v2936, %v2935
        %v2951 = vpack.c.b16 %v2938, %v2937
        %v2952 = vpack.c.b16 %v2940, %v2939
        %v2953 = vpack.c.b16 %v2942, %v2941
        %v2954 = vpack.c.b16 %v2944, %v2943
        %v2955 = vpack.c.b16 %v2946, %v2945
        %v2956 = vpack.c.b16 %v2948, %v2947
        %2965 = vmatprep.subr.bf16.mxu0 0
        %2966 = vmatpush1.bf16.msra.mxu0 %v2949
        %2967 = vmatprep.subr.bf16.mxu0 0
        %2968 = vmatpush1.bf16.msra.mxu0 %v2950
        %2969 = vmatprep.subr.bf16.mxu0 0
        %2970 = vmatpush1.bf16.msra.mxu0 %v2951
        %2971 = vmatprep.subr.bf16.mxu0 0
        %2972 = vmatpush1.bf16.msra.mxu0 %v2952
        %2973 = vmatprep.subr.bf16.mxu0 0
        %2974 = vmatpush1.bf16.msra.mxu0 %v2953
        %2975 = vmatprep.subr.bf16.mxu0 0
        %2976 = vmatpush1.bf16.msra.mxu0 %v2954
        %2977 = vmatprep.subr.bf16.mxu0 0
        %2978 = vmatpush1.bf16.msra.mxu0 %v2955
        %2979 = vmatprep.subr.bf16.mxu0 0
        %2980 = vmatpush1.bf16.msra.mxu0 %v2956
        %2981 = vmatprep.subr.bf16.mxu0 0
        %2982 = vmatpush1.bf16.msra.mxu0 0
        %2983 = vmatprep.subr.bf16.mxu0 0
        %2984 = vmatpush1.bf16.msra.mxu0 0
        %2985 = vmatprep.subr.bf16.mxu0 0
        %2986 = vmatpush1.bf16.msra.mxu0 0
        %2987 = vmatprep.subr.bf16.mxu0 0
        %2988 = vmatpush1.bf16.msra.mxu0 0
        %2989 = vmatprep.subr.bf16.mxu0 0
        %2990 = vmatpush1.bf16.msra.mxu0 0
        %2991 = vmatprep.subr.bf16.mxu0 0
        %2992 = vmatpush1.bf16.msra.mxu0 0
        %2993 = vmatprep.subr.bf16.mxu0 0
        %2994 = vmatpush1.bf16.msra.mxu0 0
        %2995 = vmatprep.subr.bf16.mxu0 0
        %2996 = vmatpush1.bf16.msra.mxu0 0
        %2997 = vmatprep.mubr.bf16.mxu0 0
        %2998 = vmatmul.mubr.bf16.gmra.mrb[0].mxu0 %v2909
        %v2999 = vpop.f32.mrb[0].mxu0
        %v3000 = vadd.f32 0.0, %v2999
        %v3001 = vpop.f32.mrb[0].mxu0
        %v3002 = vpop.f32.mrb[0].mxu0
        %v3003 = vadd.f32 0.0, %v3002
        %v3004 = vpop.f32.mrb[0].mxu0
        %3005 = vmatprep.mubr.bf16.mxu0 0
        %3006 = vmatmul.mubr.bf16.gmra.mrb[0].mxu0 %v2910
        %v3007 = vpop.f32.mrb[0].mxu0
        %v3008 = vadd.f32 0.0, %v3007
        %v3009 = vpop.f32.mrb[0].mxu0
        %v3010 = vpop.f32.mrb[0].mxu0
        %v3011 = vadd.f32 0.0, %v3010
        %v3012 = vpop.f32.mrb[0].mxu0
        %3013 = vmatprep.mubr.bf16.mxu0 0
        %3014 = vmatmul.mubr.bf16.gmra.mrb[0].mxu0 %v2911
        %v3015 = vpop.f32.mrb[0].mxu0
        %v3016 = vadd.f32 0.0, %v3015
        %v3017 = vpop.f32.mrb[0].mxu0
        %v3018 = vpop.f32.mrb[0].mxu0
        %v3019 = vadd.f32 0.0, %v3018
        %v3020 = vpop.f32.mrb[0].mxu0
        %3021 = vmatprep.mubr.bf16.mxu0 0
        %3022 = vmatmul.mubr.bf16.gmra.mrb[0].mxu0 %v2912
        %v3023 = vpop.f32.mrb[0].mxu0
        %v3024 = vadd.f32 0.0, %v3023
        %v3025 = vpop.f32.mrb[0].mxu0
        %v3026 = vpop.f32.mrb[0].mxu0
        %v3027 = vadd.f32 0.0, %v3026
        %v3028 = vpop.f32.mrb[0].mxu0
        %3029 = vdwg.mxu0
        %v3038 = vunpack.c.l.b16 %v2740
        %v3039 = vunpack.c.l.b16 %v2741
        %v3040 = vunpack.c.l.b16 %v2742
        %v3041 = vunpack.c.l.b16 %v2743
        %v3042 = vunpack.c.l.b16 %v2744
        %v3043 = vunpack.c.l.b16 %v2745
        %v3044 = vunpack.c.l.b16 %v2746
        %v3045 = vunpack.c.l.b16 %v2747
        %v3046 = vpack.c.b16 %v3039, %v3038
        %v3047 = vpack.c.b16 %v3041, %v3040
        %v3048 = vpack.c.b16 %v3043, %v3042
        %v3049 = vpack.c.b16 %v3045, %v3044
        %v3070 = vunpack.c.l.b16 %v2748
        %v3071 = vunpack.c.l.b16 %v2749
        %v3072 = vunpack.c.l.b16 %v2750
        %v3073 = vunpack.c.l.b16 %v2751
        %v3074 = vunpack.c.l.b16 %v2752
        %v3075 = vunpack.c.l.b16 %v2753
        %v3076 = vunpack.c.l.b16 %v2754
        %v3077 = vunpack.c.l.b16 %v2755
        %v3078 = vunpack.c.l.b16 %v2756
        %v3079 = vunpack.c.l.b16 %v2757
        %v3080 = vunpack.c.l.b16 %v2758
        %v3081 = vunpack.c.l.b16 %v2759
        %v3082 = vunpack.c.l.b16 %v2760
        %v3083 = vunpack.c.l.b16 %v2761
        %v3084 = vunpack.c.l.b16 %v2762
        %v3085 = vunpack.c.l.b16 %v2763
        %v3086 = vpack.c.b16 %v3071, %v3070
        %v3087 = vpack.c.b16 %v3073, %v3072
        %v3088 = vpack.c.b16 %v3075, %v3074
        %v3089 = vpack.c.b16 %v3077, %v3076
        %v3090 = vpack.c.b16 %v3079, %v3078
        %v3091 = vpack.c.b16 %v3081, %v3080
        %v3092 = vpack.c.b16 %v3083, %v3082
        %v3093 = vpack.c.b16 %v3085, %v3084
        %3102 = vmatprep.subr.bf16.mxu0 0
        %3103 = vmatpush1.bf16.msra.mxu0 %v3086
        %3104 = vmatprep.subr.bf16.mxu0 0
        %3105 = vmatpush1.bf16.msra.mxu0 %v3087
        %3106 = vmatprep.subr.bf16.mxu0 0
        %3107 = vmatpush1.bf16.msra.mxu0 %v3088
        %3108 = vmatprep.subr.bf16.mxu0 0
        %3109 = vmatpush1.bf16.msra.mxu0 %v3089
        %3110 = vmatprep.subr.bf16.mxu0 0
        %3111 = vmatpush1.bf16.msra.mxu0 %v3090
        %3112 = vmatprep.subr.bf16.mxu0 0
        %3113 = vmatpush1.bf16.msra.mxu0 %v3091
        %3114 = vmatprep.subr.bf16.mxu0 0
        %3115 = vmatpush1.bf16.msra.mxu0 %v3092
        %3116 = vmatprep.subr.bf16.mxu0 0
        %3117 = vmatpush1.bf16.msra.mxu0 %v3093
        %3118 = vmatprep.subr.bf16.mxu0 0
        %3119 = vmatpush1.bf16.msra.mxu0 0
        %3120 = vmatprep.subr.bf16.mxu0 0
        %3121 = vmatpush1.bf16.msra.mxu0 0
        %3122 = vmatprep.subr.bf16.mxu0 0
        %3123 = vmatpush1.bf16.msra.mxu0 0
        %3124 = vmatprep.subr.bf16.mxu0 0
        %3125 = vmatpush1.bf16.msra.mxu0 0
        %3126 = vmatprep.subr.bf16.mxu0 0
        %3127 = vmatpush1.bf16.msra.mxu0 0
        %3128 = vmatprep.subr.bf16.mxu0 0
        %3129 = vmatpush1.bf16.msra.mxu0 0
        %3130 = vmatprep.subr.bf16.mxu0 0
        %3131 = vmatpush1.bf16.msra.mxu0 0
        %3132 = vmatprep.subr.bf16.mxu0 0
        %3133 = vmatpush1.bf16.msra.mxu0 0
        %3134 = vmatprep.mubr.bf16.mxu0 0
        %3135 = vmatmul.mubr.bf16.gmra.mrb[0].mxu0 %v3046
        %v3136 = vpop.f32.mrb[0].mxu0
        %v3137 = vadd.f32 %v3000, %v3136
        %v3138 = vpop.f32.mrb[0].mxu0
        %v3139 = vpop.f32.mrb[0].mxu0
        %v3140 = vadd.f32 %v3003, %v3139
        %v3141 = vpop.f32.mrb[0].mxu0
        %3142 = vmatprep.mubr.bf16.mxu0 0
        %3143 = vmatmul.mubr.bf16.gmra.mrb[0].mxu0 %v3047
        %v3144 = vpop.f32.mrb[0].mxu0
        %v3145 = vadd.f32 %v3008, %v3144
        %v3146 = vpop.f32.mrb[0].mxu0
        %v3147 = vpop.f32.mrb[0].mxu0
        %v3148 = vadd.f32 %v3011, %v3147
        %v3149 = vpop.f32.mrb[0].mxu0
        %3150 = vmatprep.mubr.bf16.mxu0 0
        %3151 = vmatmul.mubr.bf16.gmra.mrb[0].mxu0 %v3048
        %v3152 = vpop.f32.mrb[0].mxu0
        %v3153 = vadd.f32 %v3016, %v3152
        %v3154 = vpop.f32.mrb[0].mxu0
        %v3155 = vpop.f32.mrb[0].mxu0
        %v3156 = vadd.f32 %v3019, %v3155
        %v3157 = vpop.f32.mrb[0].mxu0
        %3158 = vmatprep.mubr.bf16.mxu0 0
        %3159 = vmatmul.mubr.bf16.gmra.mrb[0].mxu0 %v3049
        %v3160 = vpop.f32.mrb[0].mxu0
        %v3161 = vadd.f32 %v3024, %v3160
        %v3162 = vpop.f32.mrb[0].mxu0
        %v3163 = vpop.f32.mrb[0].mxu0
        %v3164 = vadd.f32 %v3027, %v3163
        %v3165 = vpop.f32.mrb[0].mxu0
        %3166 = vdwg.mxu0
        %v3167 = vld [vmem:[#allocation2] sm:$0xe]
        %v3168 = vld [vmem:[#allocation2 + $0x8] sm:$0xe]
        %v3169 = vld [vmem:[#allocation2 + $0x10] sm:$0xe]
        %v3170 = vld [vmem:[#allocation2 + $0x18] sm:$0xe]
        %v3171 = vld [vmem:[#allocation2 + $0x20] sm:$0xe]
        %v3172 = vld [vmem:[#allocation2 + $0x28] sm:$0xe]
        %v3173 = vld [vmem:[#allocation2 + $0x30] sm:$0xe]
        %v3174 = vld [vmem:[#allocation2 + $0x38] sm:$0xe]
        %v3191 = vrot.slane %v3167, 5
        %v3192 = vrot.slane %v3191, 4
        %v3193 = vrot.slane %v2764, 5
        %v3194 = vsel %vm1031, %v3192, %v3193
        %v3195 = vrot.slane %v3168, 5
        %v3196 = vrot.slane %v3195, 4
        %v3197 = vrot.slane %v2765, 5
        %v3198 = vsel %vm1031, %v3196, %v3197
        %v3199 = vrot.slane %v3169, 5
        %v3200 = vrot.slane %v3199, 4
        %v3201 = vrot.slane %v2766, 5
        %v3202 = vsel %vm1031, %v3200, %v3201
        %v3203 = vrot.slane %v3170, 5
        %v3204 = vrot.slane %v3203, 4
        %v3205 = vrot.slane %v2767, 5
        %v3206 = vsel %vm1031, %v3204, %v3205
        %v3207 = vrot.slane %v3171, 5
        %v3208 = vrot.slane %v3207, 4
        %v3209 = vrot.slane %v2768, 5
        %v3210 = vsel %vm1031, %v3208, %v3209
        %v3211 = vrot.slane %v3172, 5
        %v3212 = vrot.slane %v3211, 4
        %v3213 = vrot.slane %v2769, 5
        %v3214 = vsel %vm1031, %v3212, %v3213
        %v3215 = vrot.slane %v3173, 5
        %v3216 = vrot.slane %v3215, 4
        %v3217 = vrot.slane %v2770, 5
        %v3218 = vsel %vm1031, %v3216, %v3217
        %v3219 = vrot.slane %v3174, 5
        %v3220 = vrot.slane %v3219, 4
        %v3221 = vrot.slane %v2771, 5
        %v3222 = vsel %vm1031, %v3220, %v3221
        %s3223 = scalar_lea.vmem [#allocation8], 128
        %v3224 = vld [vmem:[%s3223] sm:$0xf]
        %v3225 = vld [vmem:[%s3223 + $0x4] sm:$0xf]
        %v3226 = vld [vmem:[%s3223 + $0x8] sm:$0xf]
        %v3227 = vld [vmem:[%s3223 + $0xc] sm:$0xf]
        %v3228 = vld [vmem:[%s3223 + $0x10] sm:$0xf]
        %v3229 = vld [vmem:[%s3223 + $0x14] sm:$0xf]
        %v3230 = vld [vmem:[%s3223 + $0x18] sm:$0xf]
        %v3231 = vld [vmem:[%s3223 + $0x1c] sm:$0xf]
        %v3232 = vld [vmem:[%s3223 + $0x20] sm:$0xf]
        %v3233 = vld [vmem:[%s3223 + $0x24] sm:$0xf]
        %v3234 = vld [vmem:[%s3223 + $0x28] sm:$0xf]
        %v3235 = vld [vmem:[%s3223 + $0x2c] sm:$0xf]
        %v3236 = vld [vmem:[%s3223 + $0x30] sm:$0xf]
        %v3237 = vld [vmem:[%s3223 + $0x34] sm:$0xf]
        %v3238 = vld [vmem:[%s3223 + $0x38] sm:$0xf]
        %v3239 = vld [vmem:[%s3223 + $0x3c] sm:$0xf]
        %v3240 = vunpack.c.l.b16 %v3194
        %v3241 = vunpack.c.l.b16 %v3198
        %v3242 = vunpack.c.l.b16 %v3202
        %v3243 = vunpack.c.l.b16 %v3206
        %v3244 = vunpack.c.l.b16 %v3210
        %v3245 = vunpack.c.l.b16 %v3214
        %v3246 = vunpack.c.l.b16 %v3218
        %v3247 = vunpack.c.l.b16 %v3222
        %v3248 = vpack.c.b16 %v3241, %v3240
        %v3249 = vpack.c.b16 %v3243, %v3242
        %v3250 = vpack.c.b16 %v3245, %v3244
        %v3251 = vpack.c.b16 %v3247, %v3246
        %v3272 = vunpack.c.l.b16 %v3224
        %v3273 = vunpack.c.l.b16 %v3225
        %v3274 = vunpack.c.l.b16 %v3226
        %v3275 = vunpack.c.l.b16 %v3227
        %v3276 = vunpack.c.l.b16 %v3228
        %v3277 = vunpack.c.l.b16 %v3229
        %v3278 = vunpack.c.l.b16 %v3230
        %v3279 = vunpack.c.l.b16 %v3231
        %v3280 = vunpack.c.l.b16 %v3232
        %v3281 = vunpack.c.l.b16 %v3233
        %v3282 = vunpack.c.l.b16 %v3234
        %v3283 = vunpack.c.l.b16 %v3235
        %v3284 = vunpack.c.l.b16 %v3236
        %v3285 = vunpack.c.l.b16 %v3237
        %v3286 = vunpack.c.l.b16 %v3238
        %v3287 = vunpack.c.l.b16 %v3239
        %v3288 = vpack.c.b16 %v3273, %v3272
        %v3289 = vpack.c.b16 %v3275, %v3274
        %v3290 = vpack.c.b16 %v3277, %v3276
        %v3291 = vpack.c.b16 %v3279, %v3278
        %v3292 = vpack.c.b16 %v3281, %v3280
        %v3293 = vpack.c.b16 %v3283, %v3282
        %v3294 = vpack.c.b16 %v3285, %v3284
        %v3295 = vpack.c.b16 %v3287, %v3286
        %3304 = vmatprep.subr.bf16.mxu0 0
        %3305 = vmatpush1.bf16.msra.mxu0 %v3288
        %3306 = vmatprep.subr.bf16.mxu0 0
        %3307 = vmatpush1.bf16.msra.mxu0 %v3289
        %3308 = vmatprep.subr.bf16.mxu0 0
        %3309 = vmatpush1.bf16.msra.mxu0 %v3290
        %3310 = vmatprep.subr.bf16.mxu0 0
        %3311 = vmatpush1.bf16.msra.mxu0 %v3291
        %3312 = vmatprep.subr.bf16.mxu0 0
        %3313 = vmatpush1.bf16.msra.mxu0 %v3292
        %3314 = vmatprep.subr.bf16.mxu0 0
        %3315 = vmatpush1.bf16.msra.mxu0 %v3293
        %3316 = vmatprep.subr.bf16.mxu0 0
        %3317 = vmatpush1.bf16.msra.mxu0 %v3294
        %3318 = vmatprep.subr.bf16.mxu0 0
        %3319 = vmatpush1.bf16.msra.mxu0 %v3295
        %3320 = vmatprep.subr.bf16.mxu0 0
        %3321 = vmatpush1.bf16.msra.mxu0 0
        %3322 = vmatprep.subr.bf16.mxu0 0
        %3323 = vmatpush1.bf16.msra.mxu0 0
        %3324 = vmatprep.subr.bf16.mxu0 0
        %3325 = vmatpush1.bf16.msra.mxu0 0
        %3326 = vmatprep.subr.bf16.mxu0 0
        %3327 = vmatpush1.bf16.msra.mxu0 0
        %3328 = vmatprep.subr.bf16.mxu0 0
        %3329 = vmatpush1.bf16.msra.mxu0 0
        %3330 = vmatprep.subr.bf16.mxu0 0
        %3331 = vmatpush1.bf16.msra.mxu0 0
        %3332 = vmatprep.subr.bf16.mxu0 0
        %3333 = vmatpush1.bf16.msra.mxu0 0
        %3334 = vmatprep.subr.bf16.mxu0 0
        %3335 = vmatpush1.bf16.msra.mxu0 0
        %3336 = vmatprep.mubr.bf16.mxu0 0
        %3337 = vmatmul.mubr.bf16.gmra.mrb[0].mxu0 %v3248
        %v3338 = vpop.f32.mrb[0].mxu0
        %v3339 = vadd.f32 0.0, %v3338
        %v3340 = vpop.f32.mrb[0].mxu0
        %v3341 = vpop.f32.mrb[0].mxu0
        %v3342 = vadd.f32 0.0, %v3341
        %v3343 = vpop.f32.mrb[0].mxu0
        %3344 = vmatprep.mubr.bf16.mxu0 0
        %3345 = vmatmul.mubr.bf16.gmra.mrb[0].mxu0 %v3249
        %v3346 = vpop.f32.mrb[0].mxu0
        %v3347 = vadd.f32 0.0, %v3346
        %v3348 = vpop.f32.mrb[0].mxu0
        %v3349 = vpop.f32.mrb[0].mxu0
        %v3350 = vadd.f32 0.0, %v3349
        %v3351 = vpop.f32.mrb[0].mxu0
        %3352 = vmatprep.mubr.bf16.mxu0 0
        %3353 = vmatmul.mubr.bf16.gmra.mrb[0].mxu0 %v3250
        %v3354 = vpop.f32.mrb[0].mxu0
        %v3355 = vadd.f32 0.0, %v3354
        %v3356 = vpop.f32.mrb[0].mxu0
        %v3357 = vpop.f32.mrb[0].mxu0
        %v3358 = vadd.f32 0.0, %v3357
        %v3359 = vpop.f32.mrb[0].mxu0
        %3360 = vmatprep.mubr.bf16.mxu0 0
        %3361 = vmatmul.mubr.bf16.gmra.mrb[0].mxu0 %v3251
        %v3362 = vpop.f32.mrb[0].mxu0
        %v3363 = vadd.f32 0.0, %v3362
        %v3364 = vpop.f32.mrb[0].mxu0
        %v3365 = vpop.f32.mrb[0].mxu0
        %v3366 = vadd.f32 0.0, %v3365
        %v3367 = vpop.f32.mrb[0].mxu0
        %3368 = vdwg.mxu0
        %v3369 = vadd.f32 %v3137, %v3339
        %v3370 = vadd.f32 %v3140, %v3342
        %v3371 = vadd.f32 %v3145, %v3347
        %v3372 = vadd.f32 %v3148, %v3350
        %v3373 = vadd.f32 %v3153, %v3355
        %v3374 = vadd.f32 %v3156, %v3358
        %v3375 = vadd.f32 %v3161, %v3363
        %v3376 = vadd.f32 %v3164, %v3366
        %v3377 = vld [vmem:[%s332] sm:$0xf]
        %v3378 = vld [vmem:[%s332 + $0x8] sm:$0xf]
        %v3379 = vld [vmem:[%s332 + $0x10] sm:$0xf]
        %v3380 = vld [vmem:[%s332 + $0x18] sm:$0xf]
        %v3381 = vld [vmem:[%s332 + $0x20] sm:$0xf]
        %v3382 = vld [vmem:[%s332 + $0x28] sm:$0xf]
        %v3383 = vld [vmem:[%s332 + $0x30] sm:$0xf]
        %v3384 = vld [vmem:[%s332 + $0x38] sm:$0xf]
        %s3385 = scalar_lea.vmem [#allocation8], 192
        %v3386 = vld [vmem:[%s3385] sm:$0xf]
        %v3387 = vld [vmem:[%s3385 + $0x4] sm:$0xf]
        %v3388 = vld [vmem:[%s3385 + $0x8] sm:$0xf]
        %v3389 = vld [vmem:[%s3385 + $0xc] sm:$0xf]
        %v3390 = vld [vmem:[%s3385 + $0x10] sm:$0xf]
        %v3391 = vld [vmem:[%s3385 + $0x14] sm:$0xf]
        %v3392 = vld [vmem:[%s3385 + $0x18] sm:$0xf]
        %v3393 = vld [vmem:[%s3385 + $0x1c] sm:$0xf]
        %v3394 = vld [vmem:[%s3385 + $0x20] sm:$0xf]
        %v3395 = vld [vmem:[%s3385 + $0x24] sm:$0xf]
        %v3396 = vld [vmem:[%s3385 + $0x28] sm:$0xf]
        %v3397 = vld [vmem:[%s3385 + $0x2c] sm:$0xf]
        %v3398 = vld [vmem:[%s3385 + $0x30] sm:$0xf]
        %v3399 = vld [vmem:[%s3385 + $0x34] sm:$0xf]
        %v3400 = vld [vmem:[%s3385 + $0x38] sm:$0xf]
        %v3401 = vld [vmem:[%s3385 + $0x3c] sm:$0xf]
        %v3410 = vunpack.c.l.b16 %v3377
        %v3411 = vunpack.c.l.b16 %v3378
        %v3412 = vunpack.c.l.b16 %v3379
        %v3413 = vunpack.c.l.b16 %v3380
        %v3414 = vunpack.c.l.b16 %v3381
        %v3415 = vunpack.c.l.b16 %v3382
        %v3416 = vunpack.c.l.b16 %v3383
        %v3417 = vunpack.c.l.b16 %v3384
        %v3418 = vpack.c.b16 %v3411, %v3410
        %v3419 = vpack.c.b16 %v3413, %v3412
        %v3420 = vpack.c.b16 %v3415, %v3414
        %v3421 = vpack.c.b16 %v3417, %v3416
        %v3442 = vunpack.c.l.b16 %v3386
        %v3443 = vunpack.c.l.b16 %v3387
        %v3444 = vunpack.c.l.b16 %v3388
        %v3445 = vunpack.c.l.b16 %v3389
        %v3446 = vunpack.c.l.b16 %v3390
        %v3447 = vunpack.c.l.b16 %v3391
        %v3448 = vunpack.c.l.b16 %v3392
        %v3449 = vunpack.c.l.b16 %v3393
        %v3450 = vunpack.c.l.b16 %v3394
        %v3451 = vunpack.c.l.b16 %v3395
        %v3452 = vunpack.c.l.b16 %v3396
        %v3453 = vunpack.c.l.b16 %v3397
        %v3454 = vunpack.c.l.b16 %v3398
        %v3455 = vunpack.c.l.b16 %v3399
        %v3456 = vunpack.c.l.b16 %v3400
        %v3457 = vunpack.c.l.b16 %v3401
        %v3458 = vpack.c.b16 %v3443, %v3442
        %v3459 = vpack.c.b16 %v3445, %v3444
        %v3460 = vpack.c.b16 %v3447, %v3446
        %v3461 = vpack.c.b16 %v3449, %v3448
        %v3462 = vpack.c.b16 %v3451, %v3450
        %v3463 = vpack.c.b16 %v3453, %v3452
        %v3464 = vpack.c.b16 %v3455, %v3454
        %v3465 = vpack.c.b16 %v3457, %v3456
        %3474 = vmatprep.subr.bf16.mxu0 0
        %3475 = vmatpush1.bf16.msra.mxu0 %v3458
        %3476 = vmatprep.subr.bf16.mxu0 0
        %3477 = vmatpush1.bf16.msra.mxu0 %v3459
        %3478 = vmatprep.subr.bf16.mxu0 0
        %3479 = vmatpush1.bf16.msra.mxu0 %v3460
        %3480 = vmatprep.subr.bf16.mxu0 0
        %3481 = vmatpush1.bf16.msra.mxu0 %v3461
        %3482 = vmatprep.subr.bf16.mxu0 0
        %3483 = vmatpush1.bf16.msra.mxu0 %v3462
        %3484 = vmatprep.subr.bf16.mxu0 0
        %3485 = vmatpush1.bf16.msra.mxu0 %v3463
        %3486 = vmatprep.subr.bf16.mxu0 0
        %3487 = vmatpush1.bf16.msra.mxu0 %v3464
        %3488 = vmatprep.subr.bf16.mxu0 0
        %3489 = vmatpush1.bf16.msra.mxu0 %v3465
        %3490 = vmatprep.subr.bf16.mxu0 0
        %3491 = vmatpush1.bf16.msra.mxu0 0
        %3492 = vmatprep.subr.bf16.mxu0 0
        %3493 = vmatpush1.bf16.msra.mxu0 0
        %3494 = vmatprep.subr.bf16.mxu0 0
        %3495 = vmatpush1.bf16.msra.mxu0 0
        %3496 = vmatprep.subr.bf16.mxu0 0
        %3497 = vmatpush1.bf16.msra.mxu0 0
        %3498 = vmatprep.subr.bf16.mxu0 0
        %3499 = vmatpush1.bf16.msra.mxu0 0
        %3500 = vmatprep.subr.bf16.mxu0 0
        %3501 = vmatpush1.bf16.msra.mxu0 0
        %3502 = vmatprep.subr.bf16.mxu0 0
        %3503 = vmatpush1.bf16.msra.mxu0 0
        %3504 = vmatprep.subr.bf16.mxu0 0
        %3505 = vmatpush1.bf16.msra.mxu0 0
        %3506 = vmatprep.mubr.bf16.mxu0 0
        %3507 = vmatmul.mubr.bf16.gmra.mrb[0].mxu0 %v3418
        %v3508 = vpop.f32.mrb[0].mxu0
        %v3509 = vadd.f32 0.0, %v3508
        %v3510 = vpop.f32.mrb[0].mxu0
        %v3511 = vpop.f32.mrb[0].mxu0
        %v3512 = vadd.f32 0.0, %v3511
        %v3513 = vpop.f32.mrb[0].mxu0
        %3514 = vmatprep.mubr.bf16.mxu0 0
        %3515 = vmatmul.mubr.bf16.gmra.mrb[0].mxu0 %v3419
        %v3516 = vpop.f32.mrb[0].mxu0
        %v3517 = vadd.f32 0.0, %v3516
        %v3518 = vpop.f32.mrb[0].mxu0
        %v3519 = vpop.f32.mrb[0].mxu0
        %v3520 = vadd.f32 0.0, %v3519
        %v3521 = vpop.f32.mrb[0].mxu0
        %3522 = vmatprep.mubr.bf16.mxu0 0
        %3523 = vmatmul.mubr.bf16.gmra.mrb[0].mxu0 %v3420
        %v3524 = vpop.f32.mrb[0].mxu0
        %v3525 = vadd.f32 0.0, %v3524
        %v3526 = vpop.f32.mrb[0].mxu0
        %v3527 = vpop.f32.mrb[0].mxu0
        %v3528 = vadd.f32 0.0, %v3527
        %v3529 = vpop.f32.mrb[0].mxu0
        %3530 = vmatprep.mubr.bf16.mxu0 0
        %3531 = vmatmul.mubr.bf16.gmra.mrb[0].mxu0 %v3421
        %v3532 = vpop.f32.mrb[0].mxu0
        %v3533 = vadd.f32 0.0, %v3532
        %v3534 = vpop.f32.mrb[0].mxu0
        %v3535 = vpop.f32.mrb[0].mxu0
        %v3536 = vadd.f32 0.0, %v3535
        %v3537 = vpop.f32.mrb[0].mxu0
        %3538 = vdwg.mxu0
        %v3539 = vadd.f32 %v3369, %v3509
        %v3540 = vadd.f32 %v3370, %v3512
        %v3541 = vadd.f32 %v3371, %v3517
        %v3542 = vadd.f32 %v3372, %v3520
        %v3543 = vadd.f32 %v3373, %v3525
        %v3544 = vadd.f32 %v3374, %v3528
        %v3545 = vadd.f32 %v3375, %v3533
        %v3546 = vadd.f32 %v3376, %v3536
        %v3547 = vld [vmem:[%s332] sm:$0xf]
        %v3548 = vld [vmem:[%s332 + $0x4] sm:$0x1]
        %v3549 = vld [vmem:[%s332 + $0x8] sm:$0xf]
        %v3550 = vld [vmem:[%s332 + $0xc] sm:$0x1]
        %v3551 = vld [vmem:[%s332 + $0x10] sm:$0xf]
        %v3552 = vld [vmem:[%s332 + $0x14] sm:$0x1]
        %v3553 = vld [vmem:[%s332 + $0x18] sm:$0xf]
        %v3554 = vld [vmem:[%s332 + $0x1c] sm:$0x1]
        %v3555 = vld [vmem:[%s332 + $0x20] sm:$0xf]
        %v3556 = vld [vmem:[%s332 + $0x24] sm:$0x1]
        %v3557 = vld [vmem:[%s332 + $0x28] sm:$0xf]
        %v3558 = vld [vmem:[%s332 + $0x2c] sm:$0x1]
        %v3559 = vld [vmem:[%s332 + $0x30] sm:$0xf]
        %v3560 = vld [vmem:[%s332 + $0x34] sm:$0x1]
        %v3561 = vld [vmem:[%s332 + $0x38] sm:$0xf]
        %v3562 = vld [vmem:[%s332 + $0x3c] sm:$0x1]
        %v3564 = vshrl.u32 %v3547, 16
        %v3566 = vrot.slane %v3564, 4
        %v3567 = vshll.u32 %v3547, 16
        %v3569 = vrot.slane %v3567, 5
        %v3570 = vor.u32 %v3566, %v3569
        %v3571 = vrot.slane %v3570, 4
        %v3573 = vshll.u32 %v3548, 16
        %v3575 = vrot.slane %v3573, 5
        %v3576 = vsel %vm609, %v3571, %v3575
        %v3578 = vshrl.u32 %v3549, 16
        %v3580 = vrot.slane %v3578, 4
        %v3581 = vshll.u32 %v3549, 16
        %v3583 = vrot.slane %v3581, 5
        %v3584 = vor.u32 %v3580, %v3583
        %v3585 = vrot.slane %v3584, 4
        %v3587 = vshll.u32 %v3550, 16
        %v3589 = vrot.slane %v3587, 5
        %v3590 = vsel %vm609, %v3585, %v3589
        %v3592 = vshrl.u32 %v3551, 16
        %v3594 = vrot.slane %v3592, 4
        %v3595 = vshll.u32 %v3551, 16
        %v3597 = vrot.slane %v3595, 5
        %v3598 = vor.u32 %v3594, %v3597
        %v3599 = vrot.slane %v3598, 4
        %v3601 = vshll.u32 %v3552, 16
        %v3603 = vrot.slane %v3601, 5
        %v3604 = vsel %vm609, %v3599, %v3603
        %v3606 = vshrl.u32 %v3553, 16
        %v3608 = vrot.slane %v3606, 4
        %v3609 = vshll.u32 %v3553, 16
        %v3611 = vrot.slane %v3609, 5
        %v3612 = vor.u32 %v3608, %v3611
        %v3613 = vrot.slane %v3612, 4
        %v3615 = vshll.u32 %v3554, 16
        %v3617 = vrot.slane %v3615, 5
        %v3618 = vsel %vm609, %v3613, %v3617
        %v3620 = vshrl.u32 %v3555, 16
        %v3622 = vrot.slane %v3620, 4
        %v3623 = vshll.u32 %v3555, 16
        %v3625 = vrot.slane %v3623, 5
        %v3626 = vor.u32 %v3622, %v3625
        %v3627 = vrot.slane %v3626, 4
        %v3629 = vshll.u32 %v3556, 16
        %v3631 = vrot.slane %v3629, 5
        %v3632 = vsel %vm609, %v3627, %v3631
        %v3634 = vshrl.u32 %v3557, 16
        %v3636 = vrot.slane %v3634, 4
        %v3637 = vshll.u32 %v3557, 16
        %v3639 = vrot.slane %v3637, 5
        %v3640 = vor.u32 %v3636, %v3639
        %v3641 = vrot.slane %v3640, 4
        %v3643 = vshll.u32 %v3558, 16
        %v3645 = vrot.slane %v3643, 5
        %v3646 = vsel %vm609, %v3641, %v3645
        %v3648 = vshrl.u32 %v3559, 16
        %v3650 = vrot.slane %v3648, 4
        %v3651 = vshll.u32 %v3559, 16
        %v3653 = vrot.slane %v3651, 5
        %v3654 = vor.u32 %v3650, %v3653
        %v3655 = vrot.slane %v3654, 4
        %v3657 = vshll.u32 %v3560, 16
        %v3659 = vrot.slane %v3657, 5
        %v3660 = vsel %vm609, %v3655, %v3659
        %v3662 = vshrl.u32 %v3561, 16
        %v3664 = vrot.slane %v3662, 4
        %v3665 = vshll.u32 %v3561, 16
        %v3667 = vrot.slane %v3665, 5
        %v3668 = vor.u32 %v3664, %v3667
        %v3669 = vrot.slane %v3668, 4
        %v3671 = vshll.u32 %v3562, 16
        %v3673 = vrot.slane %v3671, 5
        %v3674 = vsel %vm609, %v3669, %v3673
        %s3675 = scalar_lea.vmem [#allocation8], 256
        %v3676 = vld [vmem:[%s3675] sm:$0xf]
        %v3677 = vld [vmem:[%s3675 + $0x4] sm:$0xf]
        %v3678 = vld [vmem:[%s3675 + $0x8] sm:$0xf]
        %v3679 = vld [vmem:[%s3675 + $0xc] sm:$0xf]
        %v3680 = vld [vmem:[%s3675 + $0x10] sm:$0xf]
        %v3681 = vld [vmem:[%s3675 + $0x14] sm:$0xf]
        %v3682 = vld [vmem:[%s3675 + $0x18] sm:$0xf]
        %v3683 = vld [vmem:[%s3675 + $0x1c] sm:$0xf]
        %v3684 = vld [vmem:[%s3675 + $0x20] sm:$0xf]
        %v3685 = vld [vmem:[%s3675 + $0x24] sm:$0xf]
        %v3686 = vld [vmem:[%s3675 + $0x28] sm:$0xf]
        %v3687 = vld [vmem:[%s3675 + $0x2c] sm:$0xf]
        %v3688 = vld [vmem:[%s3675 + $0x30] sm:$0xf]
        %v3689 = vld [vmem:[%s3675 + $0x34] sm:$0xf]
        %v3690 = vld [vmem:[%s3675 + $0x38] sm:$0xf]
        %v3691 = vld [vmem:[%s3675 + $0x3c] sm:$0xf]
        %v3692 = vunpack.c.l.b16 %v3576
        %v3693 = vunpack.c.l.b16 %v3590
        %v3694 = vunpack.c.l.b16 %v3604
        %v3695 = vunpack.c.l.b16 %v3618
        %v3696 = vunpack.c.l.b16 %v3632
        %v3697 = vunpack.c.l.b16 %v3646
        %v3698 = vunpack.c.l.b16 %v3660
        %v3699 = vunpack.c.l.b16 %v3674
        %v3700 = vpack.c.b16 %v3693, %v3692
        %v3701 = vpack.c.b16 %v3695, %v3694
        %v3702 = vpack.c.b16 %v3697, %v3696
        %v3703 = vpack.c.b16 %v3699, %v3698
        %v3724 = vunpack.c.l.b16 %v3676
        %v3725 = vunpack.c.l.b16 %v3677
        %v3726 = vunpack.c.l.b16 %v3678
        %v3727 = vunpack.c.l.b16 %v3679
        %v3728 = vunpack.c.l.b16 %v3680
        %v3729 = vunpack.c.l.b16 %v3681
        %v3730 = vunpack.c.l.b16 %v3682
        %v3731 = vunpack.c.l.b16 %v3683
        %v3732 = vunpack.c.l.b16 %v3684
        %v3733 = vunpack.c.l.b16 %v3685
        %v3734 = vunpack.c.l.b16 %v3686
        %v3735 = vunpack.c.l.b16 %v3687
        %v3736 = vunpack.c.l.b16 %v3688
        %v3737 = vunpack.c.l.b16 %v3689
        %v3738 = vunpack.c.l.b16 %v3690
        %v3739 = vunpack.c.l.b16 %v3691
        %v3740 = vpack.c.b16 %v3725, %v3724
        %v3741 = vpack.c.b16 %v3727, %v3726
        %v3742 = vpack.c.b16 %v3729, %v3728
        %v3743 = vpack.c.b16 %v3731, %v3730
        %v3744 = vpack.c.b16 %v3733, %v3732
        %v3745 = vpack.c.b16 %v3735, %v3734
        %v3746 = vpack.c.b16 %v3737, %v3736
        %v3747 = vpack.c.b16 %v3739, %v3738
        %3756 = vmatprep.subr.bf16.mxu0 0
        %3757 = vmatpush1.bf16.msra.mxu0 %v3740
        %3758 = vmatprep.subr.bf16.mxu0 0
        %3759 = vmatpush1.bf16.msra.mxu0 %v3741
        %3760 = vmatprep.subr.bf16.mxu0 0
        %3761 = vmatpush1.bf16.msra.mxu0 %v3742
        %3762 = vmatprep.subr.bf16.mxu0 0
        %3763 = vmatpush1.bf16.msra.mxu0 %v3743
        %3764 = vmatprep.subr.bf16.mxu0 0
        %3765 = vmatpush1.bf16.msra.mxu0 %v3744
        %3766 = vmatprep.subr.bf16.mxu0 0
        %3767 = vmatpush1.bf16.msra.mxu0 %v3745
        %3768 = vmatprep.subr.bf16.mxu0 0
        %3769 = vmatpush1.bf16.msra.mxu0 %v3746
        %3770 = vmatprep.subr.bf16.mxu0 0
        %3771 = vmatpush1.bf16.msra.mxu0 %v3747
        %3772 = vmatprep.subr.bf16.mxu0 0
        %3773 = vmatpush1.bf16.msra.mxu0 0
        %3774 = vmatprep.subr.bf16.mxu0 0
        %3775 = vmatpush1.bf16.msra.mxu0 0
        %3776 = vmatprep.subr.bf16.mxu0 0
        %3777 = vmatpush1.bf16.msra.mxu0 0
        %3778 = vmatprep.subr.bf16.mxu0 0
        %3779 = vmatpush1.bf16.msra.mxu0 0
        %3780 = vmatprep.subr.bf16.mxu0 0
        %3781 = vmatpush1.bf16.msra.mxu0 0
        %3782 = vmatprep.subr.bf16.mxu0 0
        %3783 = vmatpush1.bf16.msra.mxu0 0
        %3784 = vmatprep.subr.bf16.mxu0 0
        %3785 = vmatpush1.bf16.msra.mxu0 0
        %3786 = vmatprep.subr.bf16.mxu0 0
        %3787 = vmatpush1.bf16.msra.mxu0 0
        %3788 = vmatprep.mubr.bf16.mxu0 0
        %3789 = vmatmul.mubr.bf16.gmra.mrb[0].mxu0 %v3700
        %v3790 = vpop.f32.mrb[0].mxu0
        %v3791 = vadd.f32 0.0, %v3790
        %v3792 = vpop.f32.mrb[0].mxu0
        %v3793 = vpop.f32.mrb[0].mxu0
        %v3794 = vadd.f32 0.0, %v3793
        %v3795 = vpop.f32.mrb[0].mxu0
        %3796 = vmatprep.mubr.bf16.mxu0 0
        %3797 = vmatmul.mubr.bf16.gmra.mrb[0].mxu0 %v3701
        %v3798 = vpop.f32.mrb[0].mxu0
        %v3799 = vadd.f32 0.0, %v3798
        %v3800 = vpop.f32.mrb[0].mxu0
        %v3801 = vpop.f32.mrb[0].mxu0
        %v3802 = vadd.f32 0.0, %v3801
        %v3803 = vpop.f32.mrb[0].mxu0
        %3804 = vmatprep.mubr.bf16.mxu0 0
        %3805 = vmatmul.mubr.bf16.gmra.mrb[0].mxu0 %v3702
        %v3806 = vpop.f32.mrb[0].mxu0
        %v3807 = vadd.f32 0.0, %v3806
        %v3808 = vpop.f32.mrb[0].mxu0
        %v3809 = vpop.f32.mrb[0].mxu0
        %v3810 = vadd.f32 0.0, %v3809
        %v3811 = vpop.f32.mrb[0].mxu0
        %3812 = vmatprep.mubr.bf16.mxu0 0
        %3813 = vmatmul.mubr.bf16.gmra.mrb[0].mxu0 %v3703
        %v3814 = vpop.f32.mrb[0].mxu0
        %v3815 = vadd.f32 0.0, %v3814
        %v3816 = vpop.f32.mrb[0].mxu0
        %v3817 = vpop.f32.mrb[0].mxu0
        %v3818 = vadd.f32 0.0, %v3817
        %v3819 = vpop.f32.mrb[0].mxu0
        %3820 = vdwg.mxu0
        %v3821 = vadd.f32 %v3539, %v3791
        %v3822 = vadd.f32 %v3540, %v3794
        %v3823 = vadd.f32 %v3541, %v3799
        %v3824 = vadd.f32 %v3542, %v3802
        %v3825 = vadd.f32 %v3543, %v3807
        %v3826 = vadd.f32 %v3544, %v3810
        %v3827 = vadd.f32 %v3545, %v3815
        %v3828 = vadd.f32 %v3546, %v3818
        %v3829 = vld [vmem:[%s332] sm:$0xe]
        %v3830 = vld [vmem:[%s332 + $0x8] sm:$0xe]
        %v3831 = vld [vmem:[%s332 + $0x10] sm:$0xe]
        %v3832 = vld [vmem:[%s332 + $0x18] sm:$0xe]
        %v3833 = vld [vmem:[%s332 + $0x20] sm:$0xe]
        %v3834 = vld [vmem:[%s332 + $0x28] sm:$0xe]
        %v3835 = vld [vmem:[%s332 + $0x30] sm:$0xe]
        %v3836 = vld [vmem:[%s332 + $0x38] sm:$0xe]
        %v3853 = vrot.slane %v3829, 5
        %v3854 = vrot.slane %v3853, 4
        %v3855 = vrot.slane %v3548, 5
        %v3856 = vsel %vm1031, %v3854, %v3855
        %v3857 = vrot.slane %v3830, 5
        %v3858 = vrot.slane %v3857, 4
        %v3859 = vrot.slane %v3550, 5
        %v3860 = vsel %vm1031, %v3858, %v3859
        %v3861 = vrot.slane %v3831, 5
        %v3862 = vrot.slane %v3861, 4
        %v3863 = vrot.slane %v3552, 5
        %v3864 = vsel %vm1031, %v3862, %v3863
        %v3865 = vrot.slane %v3832, 5
        %v3866 = vrot.slane %v3865, 4
        %v3867 = vrot.slane %v3554, 5
        %v3868 = vsel %vm1031, %v3866, %v3867
        %v3869 = vrot.slane %v3833, 5
        %v3870 = vrot.slane %v3869, 4
        %v3871 = vrot.slane %v3556, 5
        %v3872 = vsel %vm1031, %v3870, %v3871
        %v3873 = vrot.slane %v3834, 5
        %v3874 = vrot.slane %v3873, 4
        %v3875 = vrot.slane %v3558, 5
        %v3876 = vsel %vm1031, %v3874, %v3875
        %v3877 = vrot.slane %v3835, 5
        %v3878 = vrot.slane %v3877, 4
        %v3879 = vrot.slane %v3560, 5
        %v3880 = vsel %vm1031, %v3878, %v3879
        %v3881 = vrot.slane %v3836, 5
        %v3882 = vrot.slane %v3881, 4
        %v3883 = vrot.slane %v3562, 5
        %v3884 = vsel %vm1031, %v3882, %v3883
        %s3885 = scalar_lea.vmem [#allocation8], 320
        %v3886 = vld [vmem:[%s3885] sm:$0xf]
        %v3887 = vld [vmem:[%s3885 + $0x4] sm:$0xf]
        %v3888 = vld [vmem:[%s3885 + $0x8] sm:$0xf]
        %v3889 = vld [vmem:[%s3885 + $0xc] sm:$0xf]
        %v3890 = vld [vmem:[%s3885 + $0x10] sm:$0xf]
        %v3891 = vld [vmem:[%s3885 + $0x14] sm:$0xf]
        %v3892 = vld [vmem:[%s3885 + $0x18] sm:$0xf]
        %v3893 = vld [vmem:[%s3885 + $0x1c] sm:$0xf]
        %v3894 = vld [vmem:[%s3885 + $0x20] sm:$0xf]
        %v3895 = vld [vmem:[%s3885 + $0x24] sm:$0xf]
        %v3896 = vld [vmem:[%s3885 + $0x28] sm:$0xf]
        %v3897 = vld [vmem:[%s3885 + $0x2c] sm:$0xf]
        %v3898 = vld [vmem:[%s3885 + $0x30] sm:$0xf]
        %v3899 = vld [vmem:[%s3885 + $0x34] sm:$0xf]
        %v3900 = vld [vmem:[%s3885 + $0x38] sm:$0xf]
        %v3901 = vld [vmem:[%s3885 + $0x3c] sm:$0xf]
        %v3902 = vunpack.c.l.b16 %v3856
        %v3903 = vunpack.c.l.b16 %v3860
        %v3904 = vunpack.c.l.b16 %v3864
        %v3905 = vunpack.c.l.b16 %v3868
        %v3906 = vunpack.c.l.b16 %v3872
        %v3907 = vunpack.c.l.b16 %v3876
        %v3908 = vunpack.c.l.b16 %v3880
        %v3909 = vunpack.c.l.b16 %v3884
        %v3910 = vpack.c.b16 %v3903, %v3902
        %v3911 = vpack.c.b16 %v3905, %v3904
        %v3912 = vpack.c.b16 %v3907, %v3906
        %v3913 = vpack.c.b16 %v3909, %v3908
        %v3934 = vunpack.c.l.b16 %v3886
        %v3935 = vunpack.c.l.b16 %v3887
        %v3936 = vunpack.c.l.b16 %v3888
        %v3937 = vunpack.c.l.b16 %v3889
        %v3938 = vunpack.c.l.b16 %v3890
        %v3939 = vunpack.c.l.b16 %v3891
        %v3940 = vunpack.c.l.b16 %v3892
        %v3941 = vunpack.c.l.b16 %v3893
        %v3942 = vunpack.c.l.b16 %v3894
        %v3943 = vunpack.c.l.b16 %v3895
        %v3944 = vunpack.c.l.b16 %v3896
        %v3945 = vunpack.c.l.b16 %v3897
        %v3946 = vunpack.c.l.b16 %v3898
        %v3947 = vunpack.c.l.b16 %v3899
        %v3948 = vunpack.c.l.b16 %v3900
        %v3949 = vunpack.c.l.b16 %v3901
        %v3950 = vpack.c.b16 %v3935, %v3934
        %v3951 = vpack.c.b16 %v3937, %v3936
        %v3952 = vpack.c.b16 %v3939, %v3938
        %v3953 = vpack.c.b16 %v3941, %v3940
        %v3954 = vpack.c.b16 %v3943, %v3942
        %v3955 = vpack.c.b16 %v3945, %v3944
        %v3956 = vpack.c.b16 %v3947, %v3946
        %v3957 = vpack.c.b16 %v3949, %v3948
        %3966 = vmatprep.subr.bf16.mxu0 0
        %3967 = vmatpush1.bf16.msra.mxu0 %v3950
        %3968 = vmatprep.subr.bf16.mxu0 0
        %3969 = vmatpush1.bf16.msra.mxu0 %v3951
        %3970 = vmatprep.subr.bf16.mxu0 0
        %3971 = vmatpush1.bf16.msra.mxu0 %v3952
        %3972 = vmatprep.subr.bf16.mxu0 0
        %3973 = vmatpush1.bf16.msra.mxu0 %v3953
        %3974 = vmatprep.subr.bf16.mxu0 0
        %3975 = vmatpush1.bf16.msra.mxu0 %v3954
        %3976 = vmatprep.subr.bf16.mxu0 0
        %3977 = vmatpush1.bf16.msra.mxu0 %v3955
        %3978 = vmatprep.subr.bf16.mxu0 0
        %3979 = vmatpush1.bf16.msra.mxu0 %v3956
        %3980 = vmatprep.subr.bf16.mxu0 0
        %3981 = vmatpush1.bf16.msra.mxu0 %v3957
        %3982 = vmatprep.subr.bf16.mxu0 0
        %3983 = vmatpush1.bf16.msra.mxu0 0
        %3984 = vmatprep.subr.bf16.mxu0 0
        %3985 = vmatpush1.bf16.msra.mxu0 0
        %3986 = vmatprep.subr.bf16.mxu0 0
        %3987 = vmatpush1.bf16.msra.mxu0 0
        %3988 = vmatprep.subr.bf16.mxu0 0
        %3989 = vmatpush1.bf16.msra.mxu0 0
        %3990 = vmatprep.subr.bf16.mxu0 0
        %3991 = vmatpush1.bf16.msra.mxu0 0
        %3992 = vmatprep.subr.bf16.mxu0 0
        %3993 = vmatpush1.bf16.msra.mxu0 0
        %3994 = vmatprep.subr.bf16.mxu0 0
        %3995 = vmatpush1.bf16.msra.mxu0 0
        %3996 = vmatprep.subr.bf16.mxu0 0
        %3997 = vmatpush1.bf16.msra.mxu0 0
        %3998 = vmatprep.mubr.bf16.mxu0 0
        %3999 = vmatmul.mubr.bf16.gmra.mrb[0].mxu0 %v3910
        %v4000 = vpop.f32.mrb[0].mxu0
        %v4001 = vadd.f32 0.0, %v4000
        %v4002 = vpop.f32.mrb[0].mxu0
        %v4003 = vpop.f32.mrb[0].mxu0
        %v4004 = vadd.f32 0.0, %v4003
        %v4005 = vpop.f32.mrb[0].mxu0
        %4006 = vmatprep.mubr.bf16.mxu0 0
        %4007 = vmatmul.mubr.bf16.gmra.mrb[0].mxu0 %v3911
        %v4008 = vpop.f32.mrb[0].mxu0
        %v4009 = vadd.f32 0.0, %v4008
        %v4010 = vpop.f32.mrb[0].mxu0
        %v4011 = vpop.f32.mrb[0].mxu0
        %v4012 = vadd.f32 0.0, %v4011
        %v4013 = vpop.f32.mrb[0].mxu0
        %4014 = vmatprep.mubr.bf16.mxu0 0
        %4015 = vmatmul.mubr.bf16.gmra.mrb[0].mxu0 %v3912
        %v4016 = vpop.f32.mrb[0].mxu0
        %v4017 = vadd.f32 0.0, %v4016
        %v4018 = vpop.f32.mrb[0].mxu0
        %v4019 = vpop.f32.mrb[0].mxu0
        %v4020 = vadd.f32 0.0, %v4019
        %v4021 = vpop.f32.mrb[0].mxu0
        %4022 = vmatprep.mubr.bf16.mxu0 0
        %4023 = vmatmul.mubr.bf16.gmra.mrb[0].mxu0 %v3913
        %v4024 = vpop.f32.mrb[0].mxu0
        %v4025 = vadd.f32 0.0, %v4024
        %v4026 = vpop.f32.mrb[0].mxu0
        %v4027 = vpop.f32.mrb[0].mxu0
        %v4028 = vadd.f32 0.0, %v4027
        %v4029 = vpop.f32.mrb[0].mxu0
        %4030 = vdwg.mxu0
        %v4031 = vadd.f32 %v3821, %v4001
        %v4032 = vadd.f32 %v3822, %v4004
        %v4033 = vadd.f32 %v3823, %v4009
        %v4034 = vadd.f32 %v3824, %v4012
        %v4035 = vadd.f32 %v3825, %v4017
        %v4036 = vadd.f32 %v3826, %v4020
        %v4037 = vadd.f32 %v3827, %v4025
        %v4038 = vadd.f32 %v3828, %v4028
        %v4039 = vld [vmem:[%s1880] sm:$0xf]
        %v4040 = vld [vmem:[%s1880 + $0x8] sm:$0xf]
        %v4041 = vld [vmem:[%s1880 + $0x10] sm:$0xf]
        %v4042 = vld [vmem:[%s1880 + $0x18] sm:$0xf]
        %v4043 = vld [vmem:[%s1880 + $0x20] sm:$0xf]
        %v4044 = vld [vmem:[%s1880 + $0x28] sm:$0xf]
        %v4045 = vld [vmem:[%s1880 + $0x30] sm:$0xf]
        %v4046 = vld [vmem:[%s1880 + $0x38] sm:$0xf]
        %s4047 = scalar_lea.vmem [#allocation8], 384
        %v4048 = vld [vmem:[%s4047] sm:$0xf]
        %v4049 = vld [vmem:[%s4047 + $0x4] sm:$0xf]
        %v4050 = vld [vmem:[%s4047 + $0x8] sm:$0xf]
        %v4051 = vld [vmem:[%s4047 + $0xc] sm:$0xf]
        %v4052 = vld [vmem:[%s4047 + $0x10] sm:$0xf]
        %v4053 = vld [vmem:[%s4047 + $0x14] sm:$0xf]
        %v4054 = vld [vmem:[%s4047 + $0x18] sm:$0xf]
        %v4055 = vld [vmem:[%s4047 + $0x1c] sm:$0xf]
        %v4056 = vld [vmem:[%s4047 + $0x20] sm:$0xf]
        %v4057 = vld [vmem:[%s4047 + $0x24] sm:$0xf]
        %v4058 = vld [vmem:[%s4047 + $0x28] sm:$0xf]
        %v4059 = vld [vmem:[%s4047 + $0x2c] sm:$0xf]
        %v4060 = vld [vmem:[%s4047 + $0x30] sm:$0xf]
        %v4061 = vld [vmem:[%s4047 + $0x34] sm:$0xf]
        %v4062 = vld [vmem:[%s4047 + $0x38] sm:$0xf]
        %v4063 = vld [vmem:[%s4047 + $0x3c] sm:$0xf]
        %v4072 = vunpack.c.l.b16 %v4039
        %v4073 = vunpack.c.l.b16 %v4040
        %v4074 = vunpack.c.l.b16 %v4041
        %v4075 = vunpack.c.l.b16 %v4042
        %v4076 = vunpack.c.l.b16 %v4043
        %v4077 = vunpack.c.l.b16 %v4044
        %v4078 = vunpack.c.l.b16 %v4045
        %v4079 = vunpack.c.l.b16 %v4046
        %v4080 = vpack.c.b16 %v4073, %v4072
        %v4081 = vpack.c.b16 %v4075, %v4074
        %v4082 = vpack.c.b16 %v4077, %v4076
        %v4083 = vpack.c.b16 %v4079, %v4078
        %v4104 = vunpack.c.l.b16 %v4048
        %v4105 = vunpack.c.l.b16 %v4049
        %v4106 = vunpack.c.l.b16 %v4050
        %v4107 = vunpack.c.l.b16 %v4051
        %v4108 = vunpack.c.l.b16 %v4052
        %v4109 = vunpack.c.l.b16 %v4053
        %v4110 = vunpack.c.l.b16 %v4054
        %v4111 = vunpack.c.l.b16 %v4055
        %v4112 = vunpack.c.l.b16 %v4056
        %v4113 = vunpack.c.l.b16 %v4057
        %v4114 = vunpack.c.l.b16 %v4058
        %v4115 = vunpack.c.l.b16 %v4059
        %v4116 = vunpack.c.l.b16 %v4060
        %v4117 = vunpack.c.l.b16 %v4061
        %v4118 = vunpack.c.l.b16 %v4062
        %v4119 = vunpack.c.l.b16 %v4063
        %v4120 = vpack.c.b16 %v4105, %v4104
        %v4121 = vpack.c.b16 %v4107, %v4106
        %v4122 = vpack.c.b16 %v4109, %v4108
        %v4123 = vpack.c.b16 %v4111, %v4110
        %v4124 = vpack.c.b16 %v4113, %v4112
        %v4125 = vpack.c.b16 %v4115, %v4114
        %v4126 = vpack.c.b16 %v4117, %v4116
        %v4127 = vpack.c.b16 %v4119, %v4118
        %4136 = vmatprep.subr.bf16.mxu0 0
        %4137 = vmatpush1.bf16.msra.mxu0 %v4120
        %4138 = vmatprep.subr.bf16.mxu0 0
        %4139 = vmatpush1.bf16.msra.mxu0 %v4121
        %4140 = vmatprep.subr.bf16.mxu0 0
        %4141 = vmatpush1.bf16.msra.mxu0 %v4122
        %4142 = vmatprep.subr.bf16.mxu0 0
        %4143 = vmatpush1.bf16.msra.mxu0 %v4123
        %4144 = vmatprep.subr.bf16.mxu0 0
        %4145 = vmatpush1.bf16.msra.mxu0 %v4124
        %4146 = vmatprep.subr.bf16.mxu0 0
        %4147 = vmatpush1.bf16.msra.mxu0 %v4125
        %4148 = vmatprep.subr.bf16.mxu0 0
        %4149 = vmatpush1.bf16.msra.mxu0 %v4126
        %4150 = vmatprep.subr.bf16.mxu0 0
        %4151 = vmatpush1.bf16.msra.mxu0 %v4127
        %4152 = vmatprep.subr.bf16.mxu0 0
        %4153 = vmatpush1.bf16.msra.mxu0 0
        %4154 = vmatprep.subr.bf16.mxu0 0
        %4155 = vmatpush1.bf16.msra.mxu0 0
        %4156 = vmatprep.subr.bf16.mxu0 0
        %4157 = vmatpush1.bf16.msra.mxu0 0
        %4158 = vmatprep.subr.bf16.mxu0 0
        %4159 = vmatpush1.bf16.msra.mxu0 0
        %4160 = vmatprep.subr.bf16.mxu0 0
        %4161 = vmatpush1.bf16.msra.mxu0 0
        %4162 = vmatprep.subr.bf16.mxu0 0
        %4163 = vmatpush1.bf16.msra.mxu0 0
        %4164 = vmatprep.subr.bf16.mxu0 0
        %4165 = vmatpush1.bf16.msra.mxu0 0
        %4166 = vmatprep.subr.bf16.mxu0 0
        %4167 = vmatpush1.bf16.msra.mxu0 0
        %4168 = vmatprep.mubr.bf16.mxu0 0
        %4169 = vmatmul.mubr.bf16.gmra.mrb[0].mxu0 %v4080
        %v4170 = vpop.f32.mrb[0].mxu0
        %v4171 = vadd.f32 0.0, %v4170
        %v4172 = vpop.f32.mrb[0].mxu0
        %v4173 = vpop.f32.mrb[0].mxu0
        %v4174 = vadd.f32 0.0, %v4173
        %v4175 = vpop.f32.mrb[0].mxu0
        %4176 = vmatprep.mubr.bf16.mxu0 0
        %4177 = vmatmul.mubr.bf16.gmra.mrb[0].mxu0 %v4081
        %v4178 = vpop.f32.mrb[0].mxu0
        %v4179 = vadd.f32 0.0, %v4178
        %v4180 = vpop.f32.mrb[0].mxu0
        %v4181 = vpop.f32.mrb[0].mxu0
        %v4182 = vadd.f32 0.0, %v4181
        %v4183 = vpop.f32.mrb[0].mxu0
        %4184 = vmatprep.mubr.bf16.mxu0 0
        %4185 = vmatmul.mubr.bf16.gmra.mrb[0].mxu0 %v4082
        %v4186 = vpop.f32.mrb[0].mxu0
        %v4187 = vadd.f32 0.0, %v4186
        %v4188 = vpop.f32.mrb[0].mxu0
        %v4189 = vpop.f32.mrb[0].mxu0
        %v4190 = vadd.f32 0.0, %v4189
        %v4191 = vpop.f32.mrb[0].mxu0
        %4192 = vmatprep.mubr.bf16.mxu0 0
        %4193 = vmatmul.mubr.bf16.gmra.mrb[0].mxu0 %v4083
        %v4194 = vpop.f32.mrb[0].mxu0
        %v4195 = vadd.f32 0.0, %v4194
        %v4196 = vpop.f32.mrb[0].mxu0
        %v4197 = vpop.f32.mrb[0].mxu0
        %v4198 = vadd.f32 0.0, %v4197
        %v4199 = vpop.f32.mrb[0].mxu0
        %4200 = vdwg.mxu0
        %v4201 = vadd.f32 %v4031, %v4171
        %v4202 = vadd.f32 %v4032, %v4174
        %v4203 = vadd.f32 %v4033, %v4179
        %v4204 = vadd.f32 %v4034, %v4182
        %v4205 = vadd.f32 %v4035, %v4187
        %v4206 = vadd.f32 %v4036, %v4190
        %v4207 = vadd.f32 %v4037, %v4195
        %v4208 = vadd.f32 %v4038, %v4198
        %v4209 = vld [vmem:[%s1880] sm:$0xf]
        %v4210 = vld [vmem:[%s1880 + $0x4] sm:$0x1]
        %v4211 = vld [vmem:[%s1880 + $0x8] sm:$0xf]
        %v4212 = vld [vmem:[%s1880 + $0xc] sm:$0x1]
        %v4213 = vld [vmem:[%s1880 + $0x10] sm:$0xf]
        %v4214 = vld [vmem:[%s1880 + $0x14] sm:$0x1]
        %v4215 = vld [vmem:[%s1880 + $0x18] sm:$0xf]
        %v4216 = vld [vmem:[%s1880 + $0x1c] sm:$0x1]
        %v4217 = vld [vmem:[%s1880 + $0x20] sm:$0xf]
        %v4218 = vld [vmem:[%s1880 + $0x24] sm:$0x1]
        %v4219 = vld [vmem:[%s1880 + $0x28] sm:$0xf]
        %v4220 = vld [vmem:[%s1880 + $0x2c] sm:$0x1]
        %v4221 = vld [vmem:[%s1880 + $0x30] sm:$0xf]
        %v4222 = vld [vmem:[%s1880 + $0x34] sm:$0x1]
        %v4223 = vld [vmem:[%s1880 + $0x38] sm:$0xf]
        %v4224 = vld [vmem:[%s1880 + $0x3c] sm:$0x1]
        %v4226 = vshrl.u32 %v4209, 16
        %v4228 = vrot.slane %v4226, 4
        %v4229 = vshll.u32 %v4209, 16
        %v4231 = vrot.slane %v4229, 5
        %v4232 = vor.u32 %v4228, %v4231
        %v4233 = vrot.slane %v4232, 4
        %v4235 = vshll.u32 %v4210, 16
        %v4237 = vrot.slane %v4235, 5
        %v4238 = vsel %vm609, %v4233, %v4237
        %v4240 = vshrl.u32 %v4211, 16
        %v4242 = vrot.slane %v4240, 4
        %v4243 = vshll.u32 %v4211, 16
        %v4245 = vrot.slane %v4243, 5
        %v4246 = vor.u32 %v4242, %v4245
        %v4247 = vrot.slane %v4246, 4
        %v4249 = vshll.u32 %v4212, 16
        %v4251 = vrot.slane %v4249, 5
        %v4252 = vsel %vm609, %v4247, %v4251
        %v4254 = vshrl.u32 %v4213, 16
        %v4256 = vrot.slane %v4254, 4
        %v4257 = vshll.u32 %v4213, 16
        %v4259 = vrot.slane %v4257, 5
        %v4260 = vor.u32 %v4256, %v4259
        %v4261 = vrot.slane %v4260, 4
        %v4263 = vshll.u32 %v4214, 16
        %v4265 = vrot.slane %v4263, 5
        %v4266 = vsel %vm609, %v4261, %v4265
        %v4268 = vshrl.u32 %v4215, 16
        %v4270 = vrot.slane %v4268, 4
        %v4271 = vshll.u32 %v4215, 16
        %v4273 = vrot.slane %v4271, 5
        %v4274 = vor.u32 %v4270, %v4273
        %v4275 = vrot.slane %v4274, 4
        %v4277 = vshll.u32 %v4216, 16
        %v4279 = vrot.slane %v4277, 5
        %v4280 = vsel %vm609, %v4275, %v4279
        %v4282 = vshrl.u32 %v4217, 16
        %v4284 = vrot.slane %v4282, 4
        %v4285 = vshll.u32 %v4217, 16
        %v4287 = vrot.slane %v4285, 5
        %v4288 = vor.u32 %v4284, %v4287
        %v4289 = vrot.slane %v4288, 4
        %v4291 = vshll.u32 %v4218, 16
        %v4293 = vrot.slane %v4291, 5
        %v4294 = vsel %vm609, %v4289, %v4293
        %v4296 = vshrl.u32 %v4219, 16
        %v4298 = vrot.slane %v4296, 4
        %v4299 = vshll.u32 %v4219, 16
        %v4301 = vrot.slane %v4299, 5
        %v4302 = vor.u32 %v4298, %v4301
        %v4303 = vrot.slane %v4302, 4
        %v4305 = vshll.u32 %v4220, 16
        %v4307 = vrot.slane %v4305, 5
        %v4308 = vsel %vm609, %v4303, %v4307
        %v4310 = vshrl.u32 %v4221, 16
        %v4312 = vrot.slane %v4310, 4
        %v4313 = vshll.u32 %v4221, 16
        %v4315 = vrot.slane %v4313, 5
        %v4316 = vor.u32 %v4312, %v4315
        %v4317 = vrot.slane %v4316, 4
        %v4319 = vshll.u32 %v4222, 16
        %v4321 = vrot.slane %v4319, 5
        %v4322 = vsel %vm609, %v4317, %v4321
        %v4324 = vshrl.u32 %v4223, 16
        %v4326 = vrot.slane %v4324, 4
        %v4327 = vshll.u32 %v4223, 16
        %v4329 = vrot.slane %v4327, 5
        %v4330 = vor.u32 %v4326, %v4329
        %v4331 = vrot.slane %v4330, 4
        %v4333 = vshll.u32 %v4224, 16
        %v4335 = vrot.slane %v4333, 5
        %v4336 = vsel %vm609, %v4331, %v4335
        %s4337 = scalar_lea.vmem [#allocation8], 448
        %v4338 = vld [vmem:[%s4337] sm:$0xf]
        %v4339 = vld [vmem:[%s4337 + $0x4] sm:$0xf]
        %v4340 = vld [vmem:[%s4337 + $0x8] sm:$0xf]
        %v4341 = vld [vmem:[%s4337 + $0xc] sm:$0xf]
        %v4342 = vld [vmem:[%s4337 + $0x10] sm:$0xf]
        %v4343 = vld [vmem:[%s4337 + $0x14] sm:$0xf]
        %v4344 = vld [vmem:[%s4337 + $0x18] sm:$0xf]
        %v4345 = vld [vmem:[%s4337 + $0x1c] sm:$0xf]
        %v4346 = vld [vmem:[%s4337 + $0x20] sm:$0xf]
        %v4347 = vld [vmem:[%s4337 + $0x24] sm:$0xf]
        %v4348 = vld [vmem:[%s4337 + $0x28] sm:$0xf]
        %v4349 = vld [vmem:[%s4337 + $0x2c] sm:$0xf]
        %v4350 = vld [vmem:[%s4337 + $0x30] sm:$0xf]
        %v4351 = vld [vmem:[%s4337 + $0x34] sm:$0xf]
        %v4352 = vld [vmem:[%s4337 + $0x38] sm:$0xf]
        %v4353 = vld [vmem:[%s4337 + $0x3c] sm:$0xf]
        %v4354 = vunpack.c.l.b16 %v4238
        %v4355 = vunpack.c.l.b16 %v4252
        %v4356 = vunpack.c.l.b16 %v4266
        %v4357 = vunpack.c.l.b16 %v4280
        %v4358 = vunpack.c.l.b16 %v4294
        %v4359 = vunpack.c.l.b16 %v4308
        %v4360 = vunpack.c.l.b16 %v4322
        %v4361 = vunpack.c.l.b16 %v4336
        %v4362 = vpack.c.b16 %v4355, %v4354
        %v4363 = vpack.c.b16 %v4357, %v4356
        %v4364 = vpack.c.b16 %v4359, %v4358
        %v4365 = vpack.c.b16 %v4361, %v4360
        %v4386 = vunpack.c.l.b16 %v4338
        %v4387 = vunpack.c.l.b16 %v4339
        %v4388 = vunpack.c.l.b16 %v4340
        %v4389 = vunpack.c.l.b16 %v4341
        %v4390 = vunpack.c.l.b16 %v4342
        %v4391 = vunpack.c.l.b16 %v4343
        %v4392 = vunpack.c.l.b16 %v4344
        %v4393 = vunpack.c.l.b16 %v4345
        %v4394 = vunpack.c.l.b16 %v4346
        %v4395 = vunpack.c.l.b16 %v4347
        %v4396 = vunpack.c.l.b16 %v4348
        %v4397 = vunpack.c.l.b16 %v4349
        %v4398 = vunpack.c.l.b16 %v4350
        %v4399 = vunpack.c.l.b16 %v4351
        %v4400 = vunpack.c.l.b16 %v4352
        %v4401 = vunpack.c.l.b16 %v4353
        %v4402 = vpack.c.b16 %v4387, %v4386
        %v4403 = vpack.c.b16 %v4389, %v4388
        %v4404 = vpack.c.b16 %v4391, %v4390
        %v4405 = vpack.c.b16 %v4393, %v4392
        %v4406 = vpack.c.b16 %v4395, %v4394
        %v4407 = vpack.c.b16 %v4397, %v4396
        %v4408 = vpack.c.b16 %v4399, %v4398
        %v4409 = vpack.c.b16 %v4401, %v4400
        %4418 = vmatprep.subr.bf16.mxu0 0
        %4419 = vmatpush1.bf16.msra.mxu0 %v4402
        %4420 = vmatprep.subr.bf16.mxu0 0
        %4421 = vmatpush1.bf16.msra.mxu0 %v4403
        %4422 = vmatprep.subr.bf16.mxu0 0
        %4423 = vmatpush1.bf16.msra.mxu0 %v4404
        %4424 = vmatprep.subr.bf16.mxu0 0
        %4425 = vmatpush1.bf16.msra.mxu0 %v4405
        %4426 = vmatprep.subr.bf16.mxu0 0
        %4427 = vmatpush1.bf16.msra.mxu0 %v4406
        %4428 = vmatprep.subr.bf16.mxu0 0
        %4429 = vmatpush1.bf16.msra.mxu0 %v4407
        %4430 = vmatprep.subr.bf16.mxu0 0
        %4431 = vmatpush1.bf16.msra.mxu0 %v4408
        %4432 = vmatprep.subr.bf16.mxu0 0
        %4433 = vmatpush1.bf16.msra.mxu0 %v4409
        %4434 = vmatprep.subr.bf16.mxu0 0
        %4435 = vmatpush1.bf16.msra.mxu0 0
        %4436 = vmatprep.subr.bf16.mxu0 0
        %4437 = vmatpush1.bf16.msra.mxu0 0
        %4438 = vmatprep.subr.bf16.mxu0 0
        %4439 = vmatpush1.bf16.msra.mxu0 0
        %4440 = vmatprep.subr.bf16.mxu0 0
        %4441 = vmatpush1.bf16.msra.mxu0 0
        %4442 = vmatprep.subr.bf16.mxu0 0
        %4443 = vmatpush1.bf16.msra.mxu0 0
        %4444 = vmatprep.subr.bf16.mxu0 0
        %4445 = vmatpush1.bf16.msra.mxu0 0
        %4446 = vmatprep.subr.bf16.mxu0 0
        %4447 = vmatpush1.bf16.msra.mxu0 0
        %4448 = vmatprep.subr.bf16.mxu0 0
        %4449 = vmatpush1.bf16.msra.mxu0 0
        %4450 = vmatprep.mubr.bf16.mxu0 0
        %4451 = vmatmul.mubr.bf16.gmra.mrb[0].mxu0 %v4362
        %v4452 = vpop.f32.mrb[0].mxu0
        %v4453 = vadd.f32 0.0, %v4452
        %v4454 = vpop.f32.mrb[0].mxu0
        %v4455 = vpop.f32.mrb[0].mxu0
        %v4456 = vadd.f32 0.0, %v4455
        %v4457 = vpop.f32.mrb[0].mxu0
        %4458 = vmatprep.mubr.bf16.mxu0 0
        %4459 = vmatmul.mubr.bf16.gmra.mrb[0].mxu0 %v4363
        %v4460 = vpop.f32.mrb[0].mxu0
        %v4461 = vadd.f32 0.0, %v4460
        %v4462 = vpop.f32.mrb[0].mxu0
        %v4463 = vpop.f32.mrb[0].mxu0
        %v4464 = vadd.f32 0.0, %v4463
        %v4465 = vpop.f32.mrb[0].mxu0
        %4466 = vmatprep.mubr.bf16.mxu0 0
        %4467 = vmatmul.mubr.bf16.gmra.mrb[0].mxu0 %v4364
        %v4468 = vpop.f32.mrb[0].mxu0
        %v4469 = vadd.f32 0.0, %v4468
        %v4470 = vpop.f32.mrb[0].mxu0
        %v4471 = vpop.f32.mrb[0].mxu0
        %v4472 = vadd.f32 0.0, %v4471
        %v4473 = vpop.f32.mrb[0].mxu0
        %4474 = vmatprep.mubr.bf16.mxu0 0
        %4475 = vmatmul.mubr.bf16.gmra.mrb[0].mxu0 %v4365
        %v4476 = vpop.f32.mrb[0].mxu0
        %v4477 = vadd.f32 0.0, %v4476
        %v4478 = vpop.f32.mrb[0].mxu0
        %v4479 = vpop.f32.mrb[0].mxu0
        %v4480 = vadd.f32 0.0, %v4479
        %v4481 = vpop.f32.mrb[0].mxu0
        %4482 = vdwg.mxu0
        %v4483 = vadd.f32 %v4201, %v4453
        %v4484 = vadd.f32 %v4202, %v4456
        %v4485 = vadd.f32 %v4203, %v4461
        %v4486 = vadd.f32 %v4204, %v4464
        %v4487 = vadd.f32 %v4205, %v4469
        %v4488 = vadd.f32 %v4206, %v4472
        %v4489 = vadd.f32 %v4207, %v4477
        %v4490 = vadd.f32 %v4208, %v4480
        %v4491 = vld [vmem:[%s1880] sm:$0xe]
        %v4492 = vld [vmem:[%s1880 + $0x8] sm:$0xe]
        %v4493 = vld [vmem:[%s1880 + $0x10] sm:$0xe]
        %v4494 = vld [vmem:[%s1880 + $0x18] sm:$0xe]
        %v4495 = vld [vmem:[%s1880 + $0x20] sm:$0xe]
        %v4496 = vld [vmem:[%s1880 + $0x28] sm:$0xe]
        %v4497 = vld [vmem:[%s1880 + $0x30] sm:$0xe]
        %v4498 = vld [vmem:[%s1880 + $0x38] sm:$0xe]
        %v4515 = vrot.slane %v4491, 5
        %v4516 = vrot.slane %v4515, 4
        %v4517 = vrot.slane %v4210, 5
        %v4518 = vsel %vm1031, %v4516, %v4517
        %v4519 = vrot.slane %v4492, 5
        %v4520 = vrot.slane %v4519, 4
        %v4521 = vrot.slane %v4212, 5
        %v4522 = vsel %vm1031, %v4520, %v4521
        %v4523 = vrot.slane %v4493, 5
        %v4524 = vrot.slane %v4523, 4
        %v4525 = vrot.slane %v4214, 5
        %v4526 = vsel %vm1031, %v4524, %v4525
        %v4527 = vrot.slane %v4494, 5
        %v4528 = vrot.slane %v4527, 4
        %v4529 = vrot.slane %v4216, 5
        %v4530 = vsel %vm1031, %v4528, %v4529
        %v4531 = vrot.slane %v4495, 5
        %v4532 = vrot.slane %v4531, 4
        %v4533 = vrot.slane %v4218, 5
        %v4534 = vsel %vm1031, %v4532, %v4533
        %v4535 = vrot.slane %v4496, 5
        %v4536 = vrot.slane %v4535, 4
        %v4537 = vrot.slane %v4220, 5
        %v4538 = vsel %vm1031, %v4536, %v4537
        %v4539 = vrot.slane %v4497, 5
        %v4540 = vrot.slane %v4539, 4
        %v4541 = vrot.slane %v4222, 5
        %v4542 = vsel %vm1031, %v4540, %v4541
        %v4543 = vrot.slane %v4498, 5
        %v4544 = vrot.slane %v4543, 4
        %v4545 = vrot.slane %v4224, 5
        %v4546 = vsel %vm1031, %v4544, %v4545
        %s4547 = scalar_lea.vmem [#allocation8], 512
        %v4548 = vld [vmem:[%s4547] sm:$0xf]
        %v4549 = vld [vmem:[%s4547 + $0x4] sm:$0xf]
        %v4550 = vld [vmem:[%s4547 + $0x8] sm:$0xf]
        %v4551 = vld [vmem:[%s4547 + $0xc] sm:$0xf]
        %v4552 = vld [vmem:[%s4547 + $0x10] sm:$0xf]
        %v4553 = vld [vmem:[%s4547 + $0x14] sm:$0xf]
        %v4554 = vld [vmem:[%s4547 + $0x18] sm:$0xf]
        %v4555 = vld [vmem:[%s4547 + $0x1c] sm:$0xf]
        %v4556 = vld [vmem:[%s4547 + $0x20] sm:$0xf]
        %v4557 = vld [vmem:[%s4547 + $0x24] sm:$0xf]
        %v4558 = vld [vmem:[%s4547 + $0x28] sm:$0xf]
        %v4559 = vld [vmem:[%s4547 + $0x2c] sm:$0xf]
        %v4560 = vld [vmem:[%s4547 + $0x30] sm:$0xf]
        %v4561 = vld [vmem:[%s4547 + $0x34] sm:$0xf]
        %v4562 = vld [vmem:[%s4547 + $0x38] sm:$0xf]
        %v4563 = vld [vmem:[%s4547 + $0x3c] sm:$0xf]
        %v4564 = vunpack.c.l.b16 %v4518
        %v4565 = vunpack.c.l.b16 %v4522
        %v4566 = vunpack.c.l.b16 %v4526
        %v4567 = vunpack.c.l.b16 %v4530
        %v4568 = vunpack.c.l.b16 %v4534
        %v4569 = vunpack.c.l.b16 %v4538
        %v4570 = vunpack.c.l.b16 %v4542
        %v4571 = vunpack.c.l.b16 %v4546
        %v4572 = vpack.c.b16 %v4565, %v4564
        %v4573 = vpack.c.b16 %v4567, %v4566
        %v4574 = vpack.c.b16 %v4569, %v4568
        %v4575 = vpack.c.b16 %v4571, %v4570
        %v4596 = vunpack.c.l.b16 %v4548
        %v4597 = vunpack.c.l.b16 %v4549
        %v4598 = vunpack.c.l.b16 %v4550
        %v4599 = vunpack.c.l.b16 %v4551
        %v4600 = vunpack.c.l.b16 %v4552
        %v4601 = vunpack.c.l.b16 %v4553
        %v4602 = vunpack.c.l.b16 %v4554
        %v4603 = vunpack.c.l.b16 %v4555
        %v4604 = vunpack.c.l.b16 %v4556
        %v4605 = vunpack.c.l.b16 %v4557
        %v4606 = vunpack.c.l.b16 %v4558
        %v4607 = vunpack.c.l.b16 %v4559
        %v4608 = vunpack.c.l.b16 %v4560
        %v4609 = vunpack.c.l.b16 %v4561
        %v4610 = vunpack.c.l.b16 %v4562
        %v4611 = vunpack.c.l.b16 %v4563
        %v4612 = vpack.c.b16 %v4597, %v4596
        %v4613 = vpack.c.b16 %v4599, %v4598
        %v4614 = vpack.c.b16 %v4601, %v4600
        %v4615 = vpack.c.b16 %v4603, %v4602
        %v4616 = vpack.c.b16 %v4605, %v4604
        %v4617 = vpack.c.b16 %v4607, %v4606
        %v4618 = vpack.c.b16 %v4609, %v4608
        %v4619 = vpack.c.b16 %v4611, %v4610
        %4628 = vmatprep.subr.bf16.mxu0 0
        %4629 = vmatpush1.bf16.msra.mxu0 %v4612
        %4630 = vmatprep.subr.bf16.mxu0 0
        %4631 = vmatpush1.bf16.msra.mxu0 %v4613
        %4632 = vmatprep.subr.bf16.mxu0 0
        %4633 = vmatpush1.bf16.msra.mxu0 %v4614
        %4634 = vmatprep.subr.bf16.mxu0 0
        %4635 = vmatpush1.bf16.msra.mxu0 %v4615
        %4636 = vmatprep.subr.bf16.mxu0 0
        %4637 = vmatpush1.bf16.msra.mxu0 %v4616
        %4638 = vmatprep.subr.bf16.mxu0 0
        %4639 = vmatpush1.bf16.msra.mxu0 %v4617
        %4640 = vmatprep.subr.bf16.mxu0 0
        %4641 = vmatpush1.bf16.msra.mxu0 %v4618
        %4642 = vmatprep.subr.bf16.mxu0 0
        %4643 = vmatpush1.bf16.msra.mxu0 %v4619
        %4644 = vmatprep.subr.bf16.mxu0 0
        %4645 = vmatpush1.bf16.msra.mxu0 0
        %4646 = vmatprep.subr.bf16.mxu0 0
        %4647 = vmatpush1.bf16.msra.mxu0 0
        %4648 = vmatprep.subr.bf16.mxu0 0
        %4649 = vmatpush1.bf16.msra.mxu0 0
        %4650 = vmatprep.subr.bf16.mxu0 0
        %4651 = vmatpush1.bf16.msra.mxu0 0
        %4652 = vmatprep.subr.bf16.mxu0 0
        %4653 = vmatpush1.bf16.msra.mxu0 0
        %4654 = vmatprep.subr.bf16.mxu0 0
        %4655 = vmatpush1.bf16.msra.mxu0 0
        %4656 = vmatprep.subr.bf16.mxu0 0
        %4657 = vmatpush1.bf16.msra.mxu0 0
        %4658 = vmatprep.subr.bf16.mxu0 0
        %4659 = vmatpush1.bf16.msra.mxu0 0
        %4660 = vmatprep.mubr.bf16.mxu0 0
        %4661 = vmatmul.mubr.bf16.gmra.mrb[0].mxu0 %v4572
        %v4662 = vpop.f32.mrb[0].mxu0
        %v4663 = vadd.f32 0.0, %v4662
        %v4664 = vpop.f32.mrb[0].mxu0
        %v4665 = vpop.f32.mrb[0].mxu0
        %v4666 = vadd.f32 0.0, %v4665
        %v4667 = vpop.f32.mrb[0].mxu0
        %4668 = vmatprep.mubr.bf16.mxu0 0
        %4669 = vmatmul.mubr.bf16.gmra.mrb[0].mxu0 %v4573
        %v4670 = vpop.f32.mrb[0].mxu0
        %v4671 = vadd.f32 0.0, %v4670
        %v4672 = vpop.f32.mrb[0].mxu0
        %v4673 = vpop.f32.mrb[0].mxu0
        %v4674 = vadd.f32 0.0, %v4673
        %v4675 = vpop.f32.mrb[0].mxu0
        %4676 = vmatprep.mubr.bf16.mxu0 0
        %4677 = vmatmul.mubr.bf16.gmra.mrb[0].mxu0 %v4574
        %v4678 = vpop.f32.mrb[0].mxu0
        %v4679 = vadd.f32 0.0, %v4678
        %v4680 = vpop.f32.mrb[0].mxu0
        %v4681 = vpop.f32.mrb[0].mxu0
        %v4682 = vadd.f32 0.0, %v4681
        %v4683 = vpop.f32.mrb[0].mxu0
        %4684 = vmatprep.mubr.bf16.mxu0 0
        %4685 = vmatmul.mubr.bf16.gmra.mrb[0].mxu0 %v4575
        %v4686 = vpop.f32.mrb[0].mxu0
        %v4687 = vadd.f32 0.0, %v4686
        %v4688 = vpop.f32.mrb[0].mxu0
        %v4689 = vpop.f32.mrb[0].mxu0
        %v4690 = vadd.f32 0.0, %v4689
        %v4691 = vpop.f32.mrb[0].mxu0
        %4692 = vdwg.mxu0
        %v4693 = vadd.f32 %v4483, %v4663
        %v4694 = vadd.f32 %v4484, %v4666
        %v4695 = vadd.f32 %v4485, %v4671
        %v4696 = vadd.f32 %v4486, %v4674
        %v4697 = vadd.f32 %v4487, %v4679
        %v4698 = vadd.f32 %v4488, %v4682
        %v4699 = vadd.f32 %v4489, %v4687
        %v4700 = vadd.f32 %v4490, %v4690
        %v4701 = vld [vmem:[%s5] sm:$0x1]
        %v4703 = vlaneseq
        %v4704 = vshrl.u32 %v4703, 7
        %v4705 = vsub.s32 0, %v4704
        %v4706 = vrot.slane %v4701, %v4705
        %v4708 = vmul.f32 %v4693, %v4706
        %v4709 = vmul.f32 %v4694, %v4706
        %v4710 = vmul.f32 %v4695, %v4706
        %v4711 = vmul.f32 %v4696, %v4706
        %v4712 = vmul.f32 %v4697, %v4706
        %v4713 = vmul.f32 %v4698, %v4706
        %v4714 = vmul.f32 %v4699, %v4706
        %v4715 = vmul.f32 %v4700, %v4706
        %v4716 = vld [vmem:[%s6] sm:$0x1]
        %v4718 = vlaneseq
        %v4719 = vshrl.u32 %v4718, 7
        %v4720 = vsub.s32 0, %v4719
        %v4721 = vrot.slane %v4716, %v4720
        %v4723 = vadd.f32 %v4708, %v4721
        %v4724 = vadd.f32 %v4709, %v4721
        %v4725 = vadd.f32 %v4710, %v4721
        %v4726 = vadd.f32 %v4711, %v4721
        %v4727 = vadd.f32 %v4712, %v4721
        %v4728 = vadd.f32 %v4713, %v4721
        %v4729 = vadd.f32 %v4714, %v4721
        %v4730 = vadd.f32 %v4715, %v4721
        %v4731 = vmax.f32 %v4723, 0.0
        %v4732 = vmax.f32 %v4724, 0.0
        %v4733 = vmax.f32 %v4725, 0.0
        %v4734 = vmax.f32 %v4726, 0.0
        %v4735 = vmax.f32 %v4727, 0.0
        %v4736 = vmax.f32 %v4728, 0.0
        %v4737 = vmax.f32 %v4729, 0.0
        %v4738 = vmax.f32 %v4730, 0.0
        %4739 = vst [vmem:[%s325] sm:$0xff] %v4731
        %4740 = vst [vmem:[%s325 + $0x8] sm:$0xff] %v4732
        %4741 = vst [vmem:[%s325 + $0x10] sm:$0xff] %v4733
        %4742 = vst [vmem:[%s325 + $0x18] sm:$0xff] %v4734
        %4743 = vst [vmem:[%s325 + $0x20] sm:$0xff] %v4735
        %4744 = vst [vmem:[%s325 + $0x28] sm:$0xff] %v4736
        %4745 = vst [vmem:[%s325 + $0x30] sm:$0xff] %v4737
        %4746 = vst [vmem:[%s325 + $0x38] sm:$0xff] %v4738
        %s4747 = sand.u32 %s185, 1
        %s4748 = scalar_lea.sflag [#allocation5], %s4747
        %s4749 = sand.u32 %s185, 1
        %s4750 = smul.addr %s4749, 64
        %s4751 = scalar_lea.vmem [#allocation9], %s4750
        // Predicated region
        $region61: #{tpu_custom_call.1} parent=47 // pred_check
          %p4752 = pneg %p195
        $region62: #{tpu_custom_call.1} parent=47 // pred_check_branch
          %4754 = sbr.rel (%p4752) target = $region64
        $region63: #{tpu_custom_call.1} parent=47 // pred_region
          %s4756 = ssub.s32 1024, 1024
          %4757 = vsyncadd %s4748, %s4756
          %s4758 = smul.addr %s25, 8
          %s4759 = smul.addr %s4758, 128
          %s4760 = scalar_lea.hbm %s7, %s4759
          %s4761 = sshll.u32 %s4751, 4
          %s4762 = int_to_ptr.vmem [resolvable:$true] %s4761
          %4767 = dma.vmem_to_hbm [thread:$0]  %s4762, 1024, %s4760, %s4748, 128, 128, 8
        $region64: #{tpu_custom_call.1} parent=47 // pred_fallthru
          _
      $region48: #{tpu_custom_call.1} parent=5 // pred_fallthru
        _
      %p4768 = scmp.le.s32.totalorder 2, %s20
      // Predicated region
      $region65: #{tpu_custom_call.1} parent=5 // pred_check
        %p4769 = pneg %p4768
      $region66: #{tpu_custom_call.1} parent=5 // pred_check_branch
        %4771 = sbr.rel (%p4769) target = $region68
      $region67: #{tpu_custom_call.1} parent=5 // pred_region
        %s4772 = ssub.s32 %s20, 2
        // Predicated region
        $region69: #{tpu_custom_call.1} parent=67 // pred_check
          %p4773 = pneg %p201
        $region70: #{tpu_custom_call.1} parent=67 // pred_check_branch
          %4775 = sbr.rel (%p4773) target = $region72
        $region71: #{tpu_custom_call.1} parent=67 // pred_region
          %s4776 = sand.u32 %s186, 1
          %s4777 = scalar_lea.sflag [#allocation5], %s4776
          %s4778 = sand.u32 %s186, 1
          %s4779 = smul.addr %s4778, 64
          %s4780 = scalar_lea.vmem [#allocation9], %s4779
          %4781 = dma.done %s4777, 1024
        $region72: #{tpu_custom_call.1} parent=67 // pred_fallthru
          _
      $region68: #{tpu_custom_call.1} parent=5 // pred_fallthru
        _
    $region6: #{tpu_custom_call.1} parent=1 // loop_footer
      %s24 = sadd.s32 1, %s20
    $region7: #{tpu_custom_call.1} parent=1 // loop_footer_branch
      %19 = sbr.rel target = $region3
    $region8: #{tpu_custom_call.1} parent=1 // loop_exit
      _
    %4782 = vsyncpa [#allocation4], 1
    %s4783 = scalar_lea.sflag [#allocation4], 1
    %4784 = vsyncpa %s4783, 1
    %4785 = vsyncpa [#allocation7], 1
    %4786 = vsyncpa [#allocation5], 1
    %s4787 = scalar_lea.sflag [#allocation5], 1
    %4788 = vsyncpa %s4787, 1

</llo_original>
